<compile_context>
chip_gen: v5e
topology: v5e:2x2
jax: 0.10.0
libtpu: 0.0.40
codegen_flags: <defaults>
</compile_context>

<pallas_src>
import functools

import jax
import jax.numpy as jnp
import numpy as np
from jax.experimental import pallas as pl
from jax.experimental.pallas import tpu as pltpu

LANE = 128
SUBLANE = 8


def _round_up(n, m):
    return ((n + m - 1) // m) * m


# ---------------------------------------------------------------------------
# Fused kernel: LSTM stack + self-attention, fully VMEM-resident.
# ---------------------------------------------------------------------------
def _fused_lstm_attention_kernel(
        x_ref, wih_ref, whh_ref, b_ref, h0_ref, c0_ref,
        wq_ref, bq_ref, wk_ref, bk_ref, wv_ref, bv_ref,
        out_ref, hn_ref, cn_ref,
        seq_sc, xg_sc):
    L, Bp, P = h0_ref.shape
    B, T, _ = out_ref.shape
    # MXU input dtype: bf16 by default (f32 accumulation), f32 for parity mode.
    cdt = wih_ref.dtype

    # ------------------------------ LSTM stack ------------------------------
    # TODO(synk): for v7x megacore, add a leading batch-chunk grid axis with
    # dimension_semantics=("parallel",) so both TensorCores are used.
    # TODO(synk): overlap attention / layer>0 weight DMAs with layer-0 compute
    # via memory_space=pl.ANY + pltpu.make_async_copy when H, L grow.
    for layer in range(L):
        # (1) Input projection hoisted out of the recurrence: one big
        #     [T*Bp, P] x [P, 4P] MXU matmul (bf16 in, f32 acc).
        #     TODO(synk): chunk this over time (double-buffered) for very
        #     long T so the gate scratch fits v7x's 64 MiB VMEM.
        xin = x_ref[...] if layer == 0 else seq_sc[...]
        xg_sc[...] = (jnp.dot(xin.astype(cdt), wih_ref[layer],
                              preferred_element_type=jnp.float32)
                      + b_ref[layer])

        whh = whh_ref[layer]                                   # [P, 4P] (cdt)

        # (2) Recurrent part: only h @ W_hh remains inside the time loop.
        #     lax.fori_loop bounds live ranges; bounded unroll keeps LLO
        #     scheduler visibility.  All slices are sublane-aligned (pl.ds +
        #     pl.multiple_of) and per-gate blocks start on 128-lane tiles.
        #     TODO(synk): hold W_hh resident in the MXU across the loop via
        #     pltpu.matmul_push_rhs / matmul_acc_lhs, and evaluate the
        #     packed-gate layout when 4H <= 128.
        def step(t, carry):
            h, c = carry
            off = pl.multiple_of(t * Bp, Bp)
            gates = xg_sc[pl.ds(off, Bp), :] + jnp.dot(
                h.astype(cdt), whh, preferred_element_type=jnp.float32)
            i_g = jax.nn.sigmoid(gates[:, 0 * P:1 * P])
            f_g = jax.nn.sigmoid(gates[:, 1 * P:2 * P])
            g_g = jnp.tanh(gates[:, 2 * P:3 * P])
            o_g = jax.nn.sigmoid(gates[:, 3 * P:4 * P])
            c_new = f_g * c + i_g * g_g
            h_new = o_g * jnp.tanh(c_new)
            # Full unmasked (8,128)-tile store of this step's hidden state.
            seq_sc[pl.ds(off, Bp), :] = h_new
            return h_new, c_new

        h_fin, c_fin = jax.lax.fori_loop(
            0, T, step, (h0_ref[layer], c0_ref[layer]), unroll=min(T, 8))
        hn_ref[layer] = h_fin
        cn_ref[layer] = c_fin

    # ----------------------- fused self-attention ---------------------------
    # TODO(synk): dropout on lstm_output and on the attention weights (p=0.5)
    # is identity here (eval-mode semantics only).
    # Per-batch attention: each real batch element's time series is gathered
    # with ONE sublane-strided load from the time-major sequence scratch, then
    # runs a tiny [T, T] attention.  No block-diagonal mask, no [TB, TB] score
    # matrix, and padded batch rows are never touched.
    # Torch code scales by 1/64**0.5 == 1/8 (hard-coded, NOT sqrt(attn_dim)).
    scale = 1.0 / (64.0 ** 0.5)
    wq = wq_ref[...]
    wk = wk_ref[...]
    wv = wv_ref[...]
    bq = bq_ref[...]
    bk = bk_ref[...]
    bv = bv_ref[...]
    for b in range(B):                      # B is static (real batch only)
        seq_b = seq_sc[pl.ds(b, T, stride=Bp), :]          # [T, P], f32
        sb = seq_b.astype(cdt)
        q = jnp.dot(sb, wq, preferred_element_type=jnp.float32) + bq
        k = jnp.dot(sb, wk, preferred_element_type=jnp.float32) + bk
        v = jnp.dot(sb, wv, preferred_element_type=jnp.float32) + bv
        s = jax.lax.dot_general(q.astype(cdt), k.astype(cdt),
                                (((1,), (1,)), ((), ())),
                                preferred_element_type=jnp.float32) * scale
        m = jnp.max(s, axis=-1, keepdims=True)
        p = jnp.exp(s - m)
        aw = p * pl.reciprocal(jnp.sum(p, axis=-1, keepdims=True), approx=True)
        ctx = jnp.dot(aw.astype(cdt), v.astype(cdt),
                      preferred_element_type=jnp.float32)   # [T, P]
        # Residual add in f32; batch-major, lane-dense full-width store.
        out_ref[b] = (ctx + seq_b).astype(out_ref.dtype)


# ---------------------------------------------------------------------------
# One-time parameter packing (done at init, NOT per forward call).
# ---------------------------------------------------------------------------
def prepare_params(raw, input_dim, hidden_dim, num_layers, attention_dim,
                   compute_dtype=jnp.bfloat16):
    # The residual add in the torch module requires attention_dim == hidden_dim.
    assert attention_dim == hidden_dim
    H = hidden_dim
    P = _round_up(max(input_dim, hidden_dim), LANE)

    wih_list, whh_list, b_list = [], [], []
    for layer in range(num_layers):
        lp = raw['lstm'][layer]
        din = input_dim if layer == 0 else hidden_dim
        w_ih_t = jnp.transpose(lp['w_ih'])            # [din, 4H], gates i,f,g,o
        w_hh_t = jnp.transpose(lp['w_hh'])            # [H,   4H]
        bias = lp['b_ih'] + lp['b_hh']                # [4H]
        # Zero-padded per-gate layout: gate g lives in lanes [g*P, g*P + H).
        # Padded lanes/rows are exactly zero so sigmoid(0)/tanh(0) keep the
        # padded parts of c/h at zero through the whole recurrence.
        wih_p = jnp.zeros((P, 4 * P), jnp.float32)
        whh_p = jnp.zeros((P, 4 * P), jnp.float32)
        b_p = jnp.zeros((1, 4 * P), jnp.float32)
        for g in range(4):
            wih_p = wih_p.at[:din, g * P:g * P + H].set(
                w_ih_t[:, g * H:(g + 1) * H])
            whh_p = whh_p.at[:H, g * P:g * P + H].set(
                w_hh_t[:, g * H:(g + 1) * H])
            b_p = b_p.at[:, g * P:g * P + H].set(
                bias[g * H:(g + 1) * H][None, :])
        wih_list.append(wih_p)
        whh_list.append(whh_p)
        b_list.append(b_p)

    ap = raw['attn']

    def pad_w(w):   # [H, A] -> [P, P]
        return jnp.zeros((P, P), jnp.float32).at[:w.shape[0], :w.shape[1]].set(w)

    def pad_b(b):   # [1, A] -> [1, P]
        return jnp.zeros((1, P), jnp.float32).at[:, :b.shape[1]].set(b)

    weights = {
        # Matmul operands in the compute dtype (bf16 default); biases in f32
        # (they only feed the f32 accumulators).
        'wih': jnp.stack(wih_list).astype(compute_dtype),   # [L, P, 4P]
        'whh': jnp.stack(whh_list).astype(compute_dtype),   # [L, P, 4P]
        'bias': jnp.stack(b_list),                           # [L, 1, 4P] f32
        'wq': pad_w(ap['wq']).astype(compute_dtype), 'bq': pad_b(ap['bq']),
        'wk': pad_w(ap['wk']).astype(compute_dtype), 'bk': pad_b(ap['bk']),
        'wv': pad_w(ap['wv']).astype(compute_dtype), 'bv': pad_b(ap['bv']),
    }
    meta = (input_dim, hidden_dim, attention_dim, P)
    return {'weights': weights, 'meta': meta}


# ---------------------------------------------------------------------------
# Forward wrapper.
# ---------------------------------------------------------------------------
@functools.partial(jax.jit, static_argnames=("meta",))
def _forward_impl(x, h0, c0, w, meta):
    _, hidden_dim, attention_dim, P = meta
    L, B, H = h0.shape
    _, T, Din = x.shape
    Bp = _round_up(B, SUBLANE)
    TB = T * Bp

    # Time-major, zero-padded input: [B, T, Din] -> [T*Bp, P] via jnp.pad
    # (fusable relayout, no zeros+scatter).
    xt = jnp.transpose(x.astype(jnp.float32), (1, 0, 2))         # [T, B, Din]
    xp = jnp.pad(xt, ((0, 0), (0, Bp - B), (0, P - Din))).reshape(TB, P)

    h0p = jnp.pad(h0.astype(jnp.float32), ((0, 0), (0, Bp - B), (0, P - H)))
    c0p = jnp.pad(c0.astype(jnp.float32), ((0, 0), (0, Bp - B), (0, P - H)))

    # Scoped-VMEM budget derived from the actual buffers (2x headroom for
    # compiler temps), so mid-size shapes don't trip the 16/32 MiB defaults.
    def nbytes(shape, dtype):
        return int(np.prod(shape)) * jnp.dtype(dtype).itemsize

    need = (sum(nbytes(a.shape, a.dtype) for a in w.values())
            + nbytes((TB, P), jnp.float32)               # x
            + 2 * nbytes((L, Bp, P), jnp.float32)        # h0, c0
            + nbytes((B, T, P), jnp.float32)             # attention out
            + 2 * nbytes((L, Bp, P), jnp.float32)        # h_n, c_n
            + nbytes((TB, P), jnp.float32)               # seq scratch
            + nbytes((TB, 4 * P), jnp.float32))          # gate scratch
    vmem_limit = int(min(128 * 1024 * 1024, max(32 * 1024 * 1024, 2 * need)))

    vmem = pl.BlockSpec(memory_space=pltpu.MemorySpace.VMEM)
    out, hn_p, cn_p = pl.pallas_call(
        _fused_lstm_attention_kernel,
        out_shape=(
            jax.ShapeDtypeStruct((B, T, P), jnp.float32),     # attention out
            jax.ShapeDtypeStruct((L, Bp, P), jnp.float32),    # h_n
            jax.ShapeDtypeStruct((L, Bp, P), jnp.float32),    # c_n
        ),
        in_specs=[vmem] * 12,
        out_specs=(vmem, vmem, vmem),
        scratch_shapes=[
            pltpu.VMEM((TB, P), jnp.float32),        # layer-output sequence
            pltpu.VMEM((TB, 4 * P), jnp.float32),    # hoisted gate pre-acts
        ],
        compiler_params=pltpu.CompilerParams(vmem_limit_bytes=vmem_limit),
    )(xp, w['wih'], w['whh'], w['bias'], h0p, c0p,
      w['wq'], w['bq'], w['wk'], w['bk'], w['wv'], w['bv'])

    # Kernel output is already batch-major [B, T, P]: just drop padded lanes.
    return out[:, :, :attention_dim], (hn_p[:, :B, :H], cn_p[:, :B, :H])


def self_attention_lstm_forward(x, hidden, packed):
    """x: [B, T, Din]; hidden = (h0, c0), each [num_layers, B, H]."""
    h0, c0 = hidden
    return _forward_impl(x, h0, c0, packed['weights'], meta=packed['meta'])


# ---------------------------------------------------------------------------
# Pure-JAX reference (mirrors torch semantics) for correctness checking.
# ---------------------------------------------------------------------------
def reference_forward(x, hidden, params):
    h0, c0 = hidden
    num_layers = h0.shape[0]
    B, T, _ = x.shape
    H = h0.shape[-1]

    inp = x
    h_ns, c_ns = [], []
    for layer in range(num_layers):
        lp = params['lstm'][layer]
        h, c = h0[layer], c0[layer]
        ys = []
        for t in range(T):
            g = (inp[:, t, :] @ lp['w_ih'].T + h @ lp['w_hh'].T
                 + lp['b_ih'] + lp['b_hh'])
            i_g = jax.nn.sigmoid(g[:, 0 * H:1 * H])
            f_g = jax.nn.sigmoid(g[:, 1 * H:2 * H])
            g_g = jnp.tanh(g[:, 2 * H:3 * H])
            o_g = jax.nn.sigmoid(g[:, 3 * H:4 * H])
            c = f_g * c + i_g * g_g
            h = o_g * jnp.tanh(c)
            ys.append(h)
        inp = jnp.stack(ys, axis=1)
        h_ns.append(h)
        c_ns.append(c)

    lstm_out = inp
    ap = params['attn']
    q = lstm_out @ ap['wq'] + ap['bq'][0]
    k = lstm_out @ ap['wk'] + ap['bk'][0]
    v = lstm_out @ ap['wv'] + ap['bv'][0]
    s = jnp.einsum('bqa,bka->bqk', q, k) / (64.0 ** 0.5)
    w = jax.nn.softmax(s, axis=-1)
    out = jnp.einsum('bqk,bka->bqa', w, v) + lstm_out
    return out, (jnp.stack(h_ns, axis=0), jnp.stack(c_ns, axis=0))


# ---------------------------------------------------------------------------
# Deterministic parameter construction (torch-layout raw parameters).
# ---------------------------------------------------------------------------
def make_params(key, input_dim, hidden_dim, num_layers, attention_dim):
    params = {'lstm': [], 'attn': {}}
    scale = 1.0 / np.sqrt(hidden_dim)
    for layer in range(num_layers):
        din = input_dim if layer == 0 else hidden_dim
        key, k1, k2, k3, k4 = jax.random.split(key, 5)
        params['lstm'].append({
            'w_ih': jax.random.uniform(k1, (4 * hidden_dim, din),
                                       jnp.float32, -scale, scale),
            'w_hh': jax.random.uniform(k2, (4 * hidden_dim, hidden_dim),
                                       jnp.float32, -scale, scale),
            'b_ih': jax.random.uniform(k3, (4 * hidden_dim,),
                                       jnp.float32, -scale, scale),
            'b_hh': jax.random.uniform(k4, (4 * hidden_dim,),
                                       jnp.float32, -scale, scale),
        })
    ascale = 1.0 / np.sqrt(hidden_dim)
    key, kq, kbq, kk, kbk, kv, kbv = jax.random.split(key, 7)
    params['attn'] = {
        # stored as [H, A] (i.e. torch Linear weight transposed)
        'wq': jax.random.uniform(kq, (hidden_dim, attention_dim),
                                 jnp.float32, -ascale, ascale),
        'bq': jax.random.uniform(kbq, (1, attention_dim),
                                 jnp.float32, -ascale, ascale),
        'wk': jax.random.uniform(kk, (hidden_dim, attention_dim),
                                 jnp.float32, -ascale, ascale),
        'bk': jax.random.uniform(kbk, (1, attention_dim),
                                 jnp.float32, -ascale, ascale),
        'wv': jax.random.uniform(kv, (hidden_dim, attention_dim),
                                 jnp.float32, -ascale, ascale),
        'bv': jax.random.uniform(kbv, (1, attention_dim),
                                 jnp.float32, -ascale, ascale),
    }
    return params


if __name__ == "__main__":
    B, T = 2, 8
    input_dim, hidden_dim, num_layers, attention_dim = 16, 32, 2, 32

    key = jax.random.PRNGKey(0)
    key, kx, kh, kc = jax.random.split(key, 4)
    x = jax.random.normal(kx, (B, T, input_dim), jnp.float32)
    h0 = 0.1 * jax.random.normal(kh, (num_layers, B, hidden_dim), jnp.float32)
    c0 = 0.1 * jax.random.normal(kc, (num_layers, B, hidden_dim), jnp.float32)
    raw_params = make_params(key, input_dim, hidden_dim, num_layers,
                             attention_dim)

    ref_out, (ref_h, ref_c) = reference_forward(x, (h0, c0), raw_params)

    # ---- f32-weight mode: tight parity with the f32 reference. ----
    packed_f32 = prepare_params(raw_params, input_dim, hidden_dim, num_layers,
                                attention_dim, compute_dtype=jnp.float32)
    out32, (h32, c32) = self_attention_lstm_forward(x, (h0, c0), packed_f32)
    jax.block_until_ready(out32)
    jax.block_until_ready(h32)
    jax.block_until_ready(c32)
    np.testing.assert_allclose(np.asarray(out32), np.asarray(ref_out),
                               rtol=1e-3, atol=1e-3)
    np.testing.assert_allclose(np.asarray(h32), np.asarray(ref_h),
                               rtol=1e-3, atol=1e-3)
    np.testing.assert_allclose(np.asarray(c32), np.asarray(ref_c),
                               rtol=1e-3, atol=1e-3)

    # ---- bf16-weight mode (default performance configuration). ----
    # Tolerance reflects bf16 weight/activation quantization noise through a
    # two-layer recurrence; exact-math parity is already verified above.
    packed_bf16 = prepare_params(raw_params, input_dim, hidden_dim, num_layers,
                                 attention_dim)
    out16, (h16, c16) = self_attention_lstm_forward(x, (h0, c0), packed_bf16)
    jax.block_until_ready(out16)
    jax.block_until_ready(h16)
    jax.block_until_ready(c16)
    np.testing.assert_allclose(np.asarray(out16), np.asarray(ref_out),
                               rtol=5e-2, atol=5e-2)
    np.testing.assert_allclose(np.asarray(h16), np.asarray(ref_h),
                               rtol=5e-2, atol=5e-2)
    np.testing.assert_allclose(np.asarray(c16), np.asarray(ref_c),
                               rtol=5e-2, atol=5e-2)

    print("KERNEL_OK")
</pallas_src>

<mosaic_0001>
module attributes {stable_mosaic.version = 11 : i64} {
  func.func @_fused_lstm_attention_kernel(%arg0: memref<64x128xf32, #tpu.memory_space<vmem>>, %arg1: memref<2x128x512xf32, #tpu.memory_space<vmem>>, %arg2: memref<2x128x512xf32, #tpu.memory_space<vmem>>, %arg3: memref<2x1x512xf32, #tpu.memory_space<vmem>>, %arg4: memref<2x8x128xf32, #tpu.memory_space<vmem>>, %arg5: memref<2x8x128xf32, #tpu.memory_space<vmem>>, %arg6: memref<128x128xf32, #tpu.memory_space<vmem>>, %arg7: memref<1x128xf32, #tpu.memory_space<vmem>>, %arg8: memref<128x128xf32, #tpu.memory_space<vmem>>, %arg9: memref<1x128xf32, #tpu.memory_space<vmem>>, %arg10: memref<128x128xf32, #tpu.memory_space<vmem>>, %arg11: memref<1x128xf32, #tpu.memory_space<vmem>>, %arg12: memref<2x8x128xf32, #tpu.memory_space<vmem>>, %arg13: memref<2x8x128xf32, #tpu.memory_space<vmem>>, %arg14: memref<2x8x128xf32, #tpu.memory_space<vmem>>, %arg15: memref<64x128xf32, #tpu.memory_space<vmem>>, %arg16: memref<64x512xf32, #tpu.memory_space<vmem>>) attributes {dimension_semantics = [], scalar_prefetch = 0 : i64, scratch_operands = 2 : i64, tpu.core_type = #tpu.core_type<tc>} {
    %c0 = arith.constant 0 : index
    %c0_0 = arith.constant 0 : index
    %0 = vector.load %arg0[%c0, %c0_0] : memref<64x128xf32, #tpu.memory_space<vmem>>, vector<64x128xf32>
    %c0_1 = arith.constant 0 : index
    %c0_2 = arith.constant 0 : index
    %c0_3 = arith.constant 0 : index
    %1 = vector.load %arg1[%c0_1, %c0_2, %c0_3] : memref<2x128x512xf32, #tpu.memory_space<vmem>>, vector<1x128x512xf32>
    %2 = vector.shape_cast %1 : vector<1x128x512xf32> to vector<128x512xf32>
    %cst = arith.constant dense<0.000000e+00> : vector<64x512xf32>
    %3 = tpu.matmul %0, %2, %cst {dimension_numbers = #tpu.dot_dimension_numbers<[1], [0], [0], [1], [0, 0, 1, 1], [], []>} : vector<64x128xf32>, vector<128x512xf32>, vector<64x512xf32> -> vector<64x512xf32>
    %c0_4 = arith.constant 0 : index
    %c0_5 = arith.constant 0 : index
    %c0_6 = arith.constant 0 : index
    %4 = vector.load %arg3[%c0_4, %c0_5, %c0_6] : memref<2x1x512xf32, #tpu.memory_space<vmem>>, vector<1x1x512xf32>
    %5 = vector.shape_cast %4 : vector<1x1x512xf32> to vector<1x512xf32>
    %6 = vector.broadcast %5 : vector<1x512xf32> to vector<64x512xf32>
    %7 = arith.addf %3, %6 : vector<64x512xf32>
    %c0_7 = arith.constant 0 : index
    %c0_8 = arith.constant 0 : index
    %8 = vector.load %arg16[%c0_7, %c0_8] : memref<64x512xf32, #tpu.memory_space<vmem>>, vector<64x512xf32>
    tpu.vector_store %arg16[%c0_7, %c0_8], %7 {strides = array<i32>} : memref<64x512xf32, #tpu.memory_space<vmem>>, vector<64x512xf32>,
    %c0_9 = arith.constant 0 : index
    %c0_10 = arith.constant 0 : index
    %c0_11 = arith.constant 0 : index
    %9 = vector.load %arg2[%c0_9, %c0_10, %c0_11] : memref<2x128x512xf32, #tpu.memory_space<vmem>>, vector<1x128x512xf32>
    %10 = vector.shape_cast %9 : vector<1x128x512xf32> to vector<128x512xf32>
    %c0_12 = arith.constant 0 : index
    %c0_13 = arith.constant 0 : index
    %c0_14 = arith.constant 0 : index
    %11 = vector.load %arg4[%c0_12, %c0_13, %c0_14] : memref<2x8x128xf32, #tpu.memory_space<vmem>>, vector<1x8x128xf32>
    %12 = vector.shape_cast %11 : vector<1x8x128xf32> to vector<8x128xf32>
    %c0_15 = arith.constant 0 : index
    %c0_16 = arith.constant 0 : index
    %c0_17 = arith.constant 0 : index
    %13 = vector.load %arg5[%c0_15, %c0_16, %c0_17] : memref<2x8x128xf32, #tpu.memory_space<vmem>>, vector<1x8x128xf32>
    %14 = vector.shape_cast %13 : vector<1x8x128xf32> to vector<8x128xf32>
    %c0_i32 = arith.constant 0 : i32
    %c8_i32 = arith.constant 8 : i32
    %15 = arith.muli %c0_i32, %c8_i32 : i32
    %16 = tpu.assume_multiple %15, 8 : i32
    %17 = arith.index_cast %16 : i32 to index
    %c0_18 = arith.constant 0 : index
    %18 = vector.load %arg16[%17, %c0_18] : memref<64x512xf32, #tpu.memory_space<vmem>>, vector<8x512xf32>
    %cst_19 = arith.constant dense<0.000000e+00> : vector<8x512xf32>
    %19 = tpu.matmul %12, %10, %cst_19 {dimension_numbers = #tpu.dot_dimension_numbers<[1], [0], [0], [1], [0, 0, 1, 1], [], []>} : vector<8x128xf32>, vector<128x512xf32>, vector<8x512xf32> -> vector<8x512xf32>
    %20 = arith.addf %18, %19 : vector<8x512xf32>
    %21 = vector.extract_strided_slice %20 {offsets = [0, 0], sizes = [8, 128], strides = [1, 1]} : vector<8x512xf32> to vector<8x128xf32>
    %22 = arith.negf %21 : vector<8x128xf32>
    %23 = math.exp %22 : vector<8x128xf32>
    %cst_20 = arith.constant 1.000000e+00 : f32
    %24 = vector.broadcast %cst_20 : f32 to vector<8x128xf32>
    %25 = arith.addf %24, %23 : vector<8x128xf32>
    %26 = arith.divf %24, %25 : vector<8x128xf32>
    %27 = vector.extract_strided_slice %20 {offsets = [0, 128], sizes = [8, 128], strides = [1, 1]} : vector<8x512xf32> to vector<8x128xf32>
    %28 = arith.negf %27 : vector<8x128xf32>
    %29 = math.exp %28 : vector<8x128xf32>
    %cst_21 = arith.constant 1.000000e+00 : f32
    %30 = vector.broadcast %cst_21 : f32 to vector<8x128xf32>
    %31 = arith.addf %30, %29 : vector<8x128xf32>
    %32 = arith.divf %30, %31 : vector<8x128xf32>
    %33 = vector.extract_strided_slice %20 {offsets = [0, 256], sizes = [8, 128], strides = [1, 1]} : vector<8x512xf32> to vector<8x128xf32>
    %34 = math.tanh %33 : vector<8x128xf32>
    %35 = vector.extract_strided_slice %20 {offsets = [0, 384], sizes = [8, 128], strides = [1, 1]} : vector<8x512xf32> to vector<8x128xf32>
    %36 = arith.negf %35 : vector<8x128xf32>
    %37 = math.exp %36 : vector<8x128xf32>
    %cst_22 = arith.constant 1.000000e+00 : f32
    %38 = vector.broadcast %cst_22 : f32 to vector<8x128xf32>
    %39 = arith.addf %38, %37 : vector<8x128xf32>
    %40 = arith.divf %38, %39 : vector<8x128xf32>
    %41 = arith.mulf %32, %14 : vector<8x128xf32>
    %42 = arith.mulf %26, %34 : vector<8x128xf32>
    %43 = arith.addf %41, %42 : vector<8x128xf32>
    %44 = math.tanh %43 : vector<8x128xf32>
    %45 = arith.mulf %40, %44 : vector<8x128xf32>
    %46 = arith.index_cast %16 : i32 to index
    %c0_23 = arith.constant 0 : index
    %47 = vector.load %arg15[%46, %c0_23] : memref<64x128xf32, #tpu.memory_space<vmem>>, vector<8x128xf32>
    tpu.vector_store %arg15[%46, %c0_23], %45 {strides = array<i32>} : memref<64x128xf32, #tpu.memory_space<vmem>>, vector<8x128xf32>,
    %c1_i32 = arith.constant 1 : i32
    %c8_i32_24 = arith.constant 8 : i32
    %48 = arith.muli %c1_i32, %c8_i32_24 : i32
    %49 = tpu.assume_multiple %48, 8 : i32
    %50 = arith.index_cast %49 : i32 to index
    %c0_25 = arith.constant 0 : index
    %51 = vector.load %arg16[%50, %c0_25] : memref<64x512xf32, #tpu.memory_space<vmem>>, vector<8x512xf32>
    %cst_26 = arith.constant dense<0.000000e+00> : vector<8x512xf32>
    %52 = tpu.matmul %45, %10, %cst_26 {dimension_numbers = #tpu.dot_dimension_numbers<[1], [0], [0], [1], [0, 0, 1, 1], [], []>} : vector<8x128xf32>, vector<128x512xf32>, vector<8x512xf32> -> vector<8x512xf32>
    %53 = arith.addf %51, %52 : vector<8x512xf32>
    %54 = vector.extract_strided_slice %53 {offsets = [0, 0], sizes = [8, 128], strides = [1, 1]} : vector<8x512xf32> to vector<8x128xf32>
    %55 = arith.negf %54 : vector<8x128xf32>
    %56 = math.exp %55 : vector<8x128xf32>
    %cst_27 = arith.constant 1.000000e+00 : f32
    %57 = vector.broadcast %cst_27 : f32 to vector<8x128xf32>
    %58 = arith.addf %57, %56 : vector<8x128xf32>
    %59 = arith.divf %57, %58 : vector<8x128xf32>
    %60 = vector.extract_strided_slice %53 {offsets = [0, 128], sizes = [8, 128], strides = [1, 1]} : vector<8x512xf32> to vector<8x128xf32>
    %61 = arith.negf %60 : vector<8x128xf32>
    %62 = math.exp %61 : vector<8x128xf32>
    %cst_28 = arith.constant 1.000000e+00 : f32
    %63 = vector.broadcast %cst_28 : f32 to vector<8x128xf32>
    %64 = arith.addf %63, %62 : vector<8x128xf32>
    %65 = arith.divf %63, %64 : vector<8x128xf32>
    %66 = vector.extract_strided_slice %53 {offsets = [0, 256], sizes = [8, 128], strides = [1, 1]} : vector<8x512xf32> to vector<8x128xf32>
    %67 = math.tanh %66 : vector<8x128xf32>
    %68 = vector.extract_strided_slice %53 {offsets = [0, 384], sizes = [8, 128], strides = [1, 1]} : vector<8x512xf32> to vector<8x128xf32>
    %69 = arith.negf %68 : vector<8x128xf32>
    %70 = math.exp %69 : vector<8x128xf32>
    %cst_29 = arith.constant 1.000000e+00 : f32
    %71 = vector.broadcast %cst_29 : f32 to vector<8x128xf32>
    %72 = arith.addf %71, %70 : vector<8x128xf32>
    %73 = arith.divf %71, %72 : vector<8x128xf32>
    %74 = arith.mulf %65, %43 : vector<8x128xf32>
    %75 = arith.mulf %59, %67 : vector<8x128xf32>
    %76 = arith.addf %74, %75 : vector<8x128xf32>
    %77 = math.tanh %76 : vector<8x128xf32>
    %78 = arith.mulf %73, %77 : vector<8x128xf32>
    %79 = arith.index_cast %49 : i32 to index
    %c0_30 = arith.constant 0 : index
    %80 = vector.load %arg15[%79, %c0_30] : memref<64x128xf32, #tpu.memory_space<vmem>>, vector<8x128xf32>
    tpu.vector_store %arg15[%79, %c0_30], %78 {strides = array<i32>} : memref<64x128xf32, #tpu.memory_space<vmem>>, vector<8x128xf32>,
    %c2_i32 = arith.constant 2 : i32
    %c8_i32_31 = arith.constant 8 : i32
    %81 = arith.muli %c2_i32, %c8_i32_31 : i32
    %82 = tpu.assume_multiple %81, 8 : i32
    %83 = arith.index_cast %82 : i32 to index
    %c0_32 = arith.constant 0 : index
    %84 = vector.load %arg16[%83, %c0_32] : memref<64x512xf32, #tpu.memory_space<vmem>>, vector<8x512xf32>
    %cst_33 = arith.constant dense<0.000000e+00> : vector<8x512xf32>
    %85 = tpu.matmul %78, %10, %cst_33 {dimension_numbers = #tpu.dot_dimension_numbers<[1], [0], [0], [1], [0, 0, 1, 1], [], []>} : vector<8x128xf32>, vector<128x512xf32>, vector<8x512xf32> -> vector<8x512xf32>
    %86 = arith.addf %84, %85 : vector<8x512xf32>
    %87 = vector.extract_strided_slice %86 {offsets = [0, 0], sizes = [8, 128], strides = [1, 1]} : vector<8x512xf32> to vector<8x128xf32>
    %88 = arith.negf %87 : vector<8x128xf32>
    %89 = math.exp %88 : vector<8x128xf32>
    %cst_34 = arith.constant 1.000000e+00 : f32
    %90 = vector.broadcast %cst_34 : f32 to vector<8x128xf32>
    %91 = arith.addf %90, %89 : vector<8x128xf32>
    %92 = arith.divf %90, %91 : vector<8x128xf32>
    %93 = vector.extract_strided_slice %86 {offsets = [0, 128], sizes = [8, 128], strides = [1, 1]} : vector<8x512xf32> to vector<8x128xf32>
    %94 = arith.negf %93 : vector<8x128xf32>
    %95 = math.exp %94 : vector<8x128xf32>
    %cst_35 = arith.constant 1.000000e+00 : f32
    %96 = vector.broadcast %cst_35 : f32 to vector<8x128xf32>
    %97 = arith.addf %96, %95 : vector<8x128xf32>
    %98 = arith.divf %96, %97 : vector<8x128xf32>
    %99 = vector.extract_strided_slice %86 {offsets = [0, 256], sizes = [8, 128], strides = [1, 1]} : vector<8x512xf32> to vector<8x128xf32>
    %100 = math.tanh %99 : vector<8x128xf32>
    %101 = vector.extract_strided_slice %86 {offsets = [0, 384], sizes = [8, 128], strides = [1, 1]} : vector<8x512xf32> to vector<8x128xf32>
    %102 = arith.negf %101 : vector<8x128xf32>
    %103 = math.exp %102 : vector<8x128xf32>
    %cst_36 = arith.constant 1.000000e+00 : f32
    %104 = vector.broadcast %cst_36 : f32 to vector<8x128xf32>
    %105 = arith.addf %104, %103 : vector<8x128xf32>
    %106 = arith.divf %104, %105 : vector<8x128xf32>
    %107 = arith.mulf %98, %76 : vector<8x128xf32>
    %108 = arith.mulf %92, %100 : vector<8x128xf32>
    %109 = arith.addf %107, %108 : vector<8x128xf32>
    %110 = math.tanh %109 : vector<8x128xf32>
    %111 = arith.mulf %106, %110 : vector<8x128xf32>
    %112 = arith.index_cast %82 : i32 to index
    %c0_37 = arith.constant 0 : index
    %113 = vector.load %arg15[%112, %c0_37] : memref<64x128xf32, #tpu.memory_space<vmem>>, vector<8x128xf32>
    tpu.vector_store %arg15[%112, %c0_37], %111 {strides = array<i32>} : memref<64x128xf32, #tpu.memory_space<vmem>>, vector<8x128xf32>,
    %c3_i32 = arith.constant 3 : i32
    %c8_i32_38 = arith.constant 8 : i32
    %114 = arith.muli %c3_i32, %c8_i32_38 : i32
    %115 = tpu.assume_multiple %114, 8 : i32
    %116 = arith.index_cast %115 : i32 to index
    %c0_39 = arith.constant 0 : index
    %117 = vector.load %arg16[%116, %c0_39] : memref<64x512xf32, #tpu.memory_space<vmem>>, vector<8x512xf32>
    %cst_40 = arith.constant dense<0.000000e+00> : vector<8x512xf32>
    %118 = tpu.matmul %111, %10, %cst_40 {dimension_numbers = #tpu.dot_dimension_numbers<[1], [0], [0], [1], [0, 0, 1, 1], [], []>} : vector<8x128xf32>, vector<128x512xf32>, vector<8x512xf32> -> vector<8x512xf32>
    %119 = arith.addf %117, %118 : vector<8x512xf32>
    %120 = vector.extract_strided_slice %119 {offsets = [0, 0], sizes = [8, 128], strides = [1, 1]} : vector<8x512xf32> to vector<8x128xf32>
    %121 = arith.negf %120 : vector<8x128xf32>
    %122 = math.exp %121 : vector<8x128xf32>
    %cst_41 = arith.constant 1.000000e+00 : f32
    %123 = vector.broadcast %cst_41 : f32 to vector<8x128xf32>
    %124 = arith.addf %123, %122 : vector<8x128xf32>
    %125 = arith.divf %123, %124 : vector<8x128xf32>
    %126 = vector.extract_strided_slice %119 {offsets = [0, 128], sizes = [8, 128], strides = [1, 1]} : vector<8x512xf32> to vector<8x128xf32>
    %127 = arith.negf %126 : vector<8x128xf32>
    %128 = math.exp %127 : vector<8x128xf32>
    %cst_42 = arith.constant 1.000000e+00 : f32
    %129 = vector.broadcast %cst_42 : f32 to vector<8x128xf32>
    %130 = arith.addf %129, %128 : vector<8x128xf32>
    %131 = arith.divf %129, %130 : vector<8x128xf32>
    %132 = vector.extract_strided_slice %119 {offsets = [0, 256], sizes = [8, 128], strides = [1, 1]} : vector<8x512xf32> to vector<8x128xf32>
    %133 = math.tanh %132 : vector<8x128xf32>
    %134 = vector.extract_strided_slice %119 {offsets = [0, 384], sizes = [8, 128], strides = [1, 1]} : vector<8x512xf32> to vector<8x128xf32>
    %135 = arith.negf %134 : vector<8x128xf32>
    %136 = math.exp %135 : vector<8x128xf32>
    %cst_43 = arith.constant 1.000000e+00 : f32
    %137 = vector.broadcast %cst_43 : f32 to vector<8x128xf32>
    %138 = arith.addf %137, %136 : vector<8x128xf32>
    %139 = arith.divf %137, %138 : vector<8x128xf32>
    %140 = arith.mulf %131, %109 : vector<8x128xf32>
    %141 = arith.mulf %125, %133 : vector<8x128xf32>
    %142 = arith.addf %140, %141 : vector<8x128xf32>
    %143 = math.tanh %142 : vector<8x128xf32>
    %144 = arith.mulf %139, %143 : vector<8x128xf32>
    %145 = arith.index_cast %115 : i32 to index
    %c0_44 = arith.constant 0 : index
    %146 = vector.load %arg15[%145, %c0_44] : memref<64x128xf32, #tpu.memory_space<vmem>>, vector<8x128xf32>
    tpu.vector_store %arg15[%145, %c0_44], %144 {strides = array<i32>} : memref<64x128xf32, #tpu.memory_space<vmem>>, vector<8x128xf32>,
    %c4_i32 = arith.constant 4 : i32
    %c8_i32_45 = arith.constant 8 : i32
    %147 = arith.muli %c4_i32, %c8_i32_45 : i32
    %148 = tpu.assume_multiple %147, 8 : i32
    %149 = arith.index_cast %148 : i32 to index
    %c0_46 = arith.constant 0 : index
    %150 = vector.load %arg16[%149, %c0_46] : memref<64x512xf32, #tpu.memory_space<vmem>>, vector<8x512xf32>
    %cst_47 = arith.constant dense<0.000000e+00> : vector<8x512xf32>
    %151 = tpu.matmul %144, %10, %cst_47 {dimension_numbers = #tpu.dot_dimension_numbers<[1], [0], [0], [1], [0, 0, 1, 1], [], []>} : vector<8x128xf32>, vector<128x512xf32>, vector<8x512xf32> -> vector<8x512xf32>
    %152 = arith.addf %150, %151 : vector<8x512xf32>
    %153 = vector.extract_strided_slice %152 {offsets = [0, 0], sizes = [8, 128], strides = [1, 1]} : vector<8x512xf32> to vector<8x128xf32>
    %154 = arith.negf %153 : vector<8x128xf32>
    %155 = math.exp %154 : vector<8x128xf32>
    %cst_48 = arith.constant 1.000000e+00 : f32
    %156 = vector.broadcast %cst_48 : f32 to vector<8x128xf32>
    %157 = arith.addf %156, %155 : vector<8x128xf32>
    %158 = arith.divf %156, %157 : vector<8x128xf32>
    %159 = vector.extract_strided_slice %152 {offsets = [0, 128], sizes = [8, 128], strides = [1, 1]} : vector<8x512xf32> to vector<8x128xf32>
    %160 = arith.negf %159 : vector<8x128xf32>
    %161 = math.exp %160 : vector<8x128xf32>
    %cst_49 = arith.constant 1.000000e+00 : f32
    %162 = vector.broadcast %cst_49 : f32 to vector<8x128xf32>
    %163 = arith.addf %162, %161 : vector<8x128xf32>
    %164 = arith.divf %162, %163 : vector<8x128xf32>
    %165 = vector.extract_strided_slice %152 {offsets = [0, 256], sizes = [8, 128], strides = [1, 1]} : vector<8x512xf32> to vector<8x128xf32>
    %166 = math.tanh %165 : vector<8x128xf32>
    %167 = vector.extract_strided_slice %152 {offsets = [0, 384], sizes = [8, 128], strides = [1, 1]} : vector<8x512xf32> to vector<8x128xf32>
    %168 = arith.negf %167 : vector<8x128xf32>
    %169 = math.exp %168 : vector<8x128xf32>
    %cst_50 = arith.constant 1.000000e+00 : f32
    %170 = vector.broadcast %cst_50 : f32 to vector<8x128xf32>
    %171 = arith.addf %170, %169 : vector<8x128xf32>
    %172 = arith.divf %170, %171 : vector<8x128xf32>
    %173 = arith.mulf %164, %142 : vector<8x128xf32>
    %174 = arith.mulf %158, %166 : vector<8x128xf32>
    %175 = arith.addf %173, %174 : vector<8x128xf32>
    %176 = math.tanh %175 : vector<8x128xf32>
    %177 = arith.mulf %172, %176 : vector<8x128xf32>
    %178 = arith.index_cast %148 : i32 to index
    %c0_51 = arith.constant 0 : index
    %179 = vector.load %arg15[%178, %c0_51] : memref<64x128xf32, #tpu.memory_space<vmem>>, vector<8x128xf32>
    tpu.vector_store %arg15[%178, %c0_51], %177 {strides = array<i32>} : memref<64x128xf32, #tpu.memory_space<vmem>>, vector<8x128xf32>,
    %c5_i32 = arith.constant 5 : i32
    %c8_i32_52 = arith.constant 8 : i32
    %180 = arith.muli %c5_i32, %c8_i32_52 : i32
    %181 = tpu.assume_multiple %180, 8 : i32
    %182 = arith.index_cast %181 : i32 to index
    %c0_53 = arith.constant 0 : index
    %183 = vector.load %arg16[%182, %c0_53] : memref<64x512xf32, #tpu.memory_space<vmem>>, vector<8x512xf32>
    %cst_54 = arith.constant dense<0.000000e+00> : vector<8x512xf32>
    %184 = tpu.matmul %177, %10, %cst_54 {dimension_numbers = #tpu.dot_dimension_numbers<[1], [0], [0], [1], [0, 0, 1, 1], [], []>} : vector<8x128xf32>, vector<128x512xf32>, vector<8x512xf32> -> vector<8x512xf32>
    %185 = arith.addf %183, %184 : vector<8x512xf32>
    %186 = vector.extract_strided_slice %185 {offsets = [0, 0], sizes = [8, 128], strides = [1, 1]} : vector<8x512xf32> to vector<8x128xf32>
    %187 = arith.negf %186 : vector<8x128xf32>
    %188 = math.exp %187 : vector<8x128xf32>
    %cst_55 = arith.constant 1.000000e+00 : f32
    %189 = vector.broadcast %cst_55 : f32 to vector<8x128xf32>
    %190 = arith.addf %189, %188 : vector<8x128xf32>
    %191 = arith.divf %189, %190 : vector<8x128xf32>
    %192 = vector.extract_strided_slice %185 {offsets = [0, 128], sizes = [8, 128], strides = [1, 1]} : vector<8x512xf32> to vector<8x128xf32>
    %193 = arith.negf %192 : vector<8x128xf32>
    %194 = math.exp %193 : vector<8x128xf32>
    %cst_56 = arith.constant 1.000000e+00 : f32
    %195 = vector.broadcast %cst_56 : f32 to vector<8x128xf32>
    %196 = arith.addf %195, %194 : vector<8x128xf32>
    %197 = arith.divf %195, %196 : vector<8x128xf32>
    %198 = vector.extract_strided_slice %185 {offsets = [0, 256], sizes = [8, 128], strides = [1, 1]} : vector<8x512xf32> to vector<8x128xf32>
    %199 = math.tanh %198 : vector<8x128xf32>
    %200 = vector.extract_strided_slice %185 {offsets = [0, 384], sizes = [8, 128], strides = [1, 1]} : vector<8x512xf32> to vector<8x128xf32>
    %201 = arith.negf %200 : vector<8x128xf32>
    %202 = math.exp %201 : vector<8x128xf32>
    %cst_57 = arith.constant 1.000000e+00 : f32
    %203 = vector.broadcast %cst_57 : f32 to vector<8x128xf32>
    %204 = arith.addf %203, %202 : vector<8x128xf32>
    %205 = arith.divf %203, %204 : vector<8x128xf32>
    %206 = arith.mulf %197, %175 : vector<8x128xf32>
    %207 = arith.mulf %191, %199 : vector<8x128xf32>
    %208 = arith.addf %206, %207 : vector<8x128xf32>
    %209 = math.tanh %208 : vector<8x128xf32>
    %210 = arith.mulf %205, %209 : vector<8x128xf32>
    %211 = arith.index_cast %181 : i32 to index
    %c0_58 = arith.constant 0 : index
    %212 = vector.load %arg15[%211, %c0_58] : memref<64x128xf32, #tpu.memory_space<vmem>>, vector<8x128xf32>
    tpu.vector_store %arg15[%211, %c0_58], %210 {strides = array<i32>} : memref<64x128xf32, #tpu.memory_space<vmem>>, vector<8x128xf32>,
    %c6_i32 = arith.constant 6 : i32
    %c8_i32_59 = arith.constant 8 : i32
    %213 = arith.muli %c6_i32, %c8_i32_59 : i32
    %214 = tpu.assume_multiple %213, 8 : i32
    %215 = arith.index_cast %214 : i32 to index
    %c0_60 = arith.constant 0 : index
    %216 = vector.load %arg16[%215, %c0_60] : memref<64x512xf32, #tpu.memory_space<vmem>>, vector<8x512xf32>
    %cst_61 = arith.constant dense<0.000000e+00> : vector<8x512xf32>
    %217 = tpu.matmul %210, %10, %cst_61 {dimension_numbers = #tpu.dot_dimension_numbers<[1], [0], [0], [1], [0, 0, 1, 1], [], []>} : vector<8x128xf32>, vector<128x512xf32>, vector<8x512xf32> -> vector<8x512xf32>
    %218 = arith.addf %216, %217 : vector<8x512xf32>
    %219 = vector.extract_strided_slice %218 {offsets = [0, 0], sizes = [8, 128], strides = [1, 1]} : vector<8x512xf32> to vector<8x128xf32>
    %220 = arith.negf %219 : vector<8x128xf32>
    %221 = math.exp %220 : vector<8x128xf32>
    %cst_62 = arith.constant 1.000000e+00 : f32
    %222 = vector.broadcast %cst_62 : f32 to vector<8x128xf32>
    %223 = arith.addf %222, %221 : vector<8x128xf32>
    %224 = arith.divf %222, %223 : vector<8x128xf32>
    %225 = vector.extract_strided_slice %218 {offsets = [0, 128], sizes = [8, 128], strides = [1, 1]} : vector<8x512xf32> to vector<8x128xf32>
    %226 = arith.negf %225 : vector<8x128xf32>
    %227 = math.exp %226 : vector<8x128xf32>
    %cst_63 = arith.constant 1.000000e+00 : f32
    %228 = vector.broadcast %cst_63 : f32 to vector<8x128xf32>
    %229 = arith.addf %228, %227 : vector<8x128xf32>
    %230 = arith.divf %228, %229 : vector<8x128xf32>
    %231 = vector.extract_strided_slice %218 {offsets = [0, 256], sizes = [8, 128], strides = [1, 1]} : vector<8x512xf32> to vector<8x128xf32>
    %232 = math.tanh %231 : vector<8x128xf32>
    %233 = vector.extract_strided_slice %218 {offsets = [0, 384], sizes = [8, 128], strides = [1, 1]} : vector<8x512xf32> to vector<8x128xf32>
    %234 = arith.negf %233 : vector<8x128xf32>
    %235 = math.exp %234 : vector<8x128xf32>
    %cst_64 = arith.constant 1.000000e+00 : f32
    %236 = vector.broadcast %cst_64 : f32 to vector<8x128xf32>
    %237 = arith.addf %236, %235 : vector<8x128xf32>
    %238 = arith.divf %236, %237 : vector<8x128xf32>
    %239 = arith.mulf %230, %208 : vector<8x128xf32>
    %240 = arith.mulf %224, %232 : vector<8x128xf32>
    %241 = arith.addf %239, %240 : vector<8x128xf32>
    %242 = math.tanh %241 : vector<8x128xf32>
    %243 = arith.mulf %238, %242 : vector<8x128xf32>
    %244 = arith.index_cast %214 : i32 to index
    %c0_65 = arith.constant 0 : index
    %245 = vector.load %arg15[%244, %c0_65] : memref<64x128xf32, #tpu.memory_space<vmem>>, vector<8x128xf32>
    tpu.vector_store %arg15[%244, %c0_65], %243 {strides = array<i32>} : memref<64x128xf32, #tpu.memory_space<vmem>>, vector<8x128xf32>,
    %c7_i32 = arith.constant 7 : i32
    %c8_i32_66 = arith.constant 8 : i32
    %246 = arith.muli %c7_i32, %c8_i32_66 : i32
    %247 = tpu.assume_multiple %246, 8 : i32
    %248 = arith.index_cast %247 : i32 to index
    %c0_67 = arith.constant 0 : index
    %249 = vector.load %arg16[%248, %c0_67] : memref<64x512xf32, #tpu.memory_space<vmem>>, vector<8x512xf32>
    %cst_68 = arith.constant dense<0.000000e+00> : vector<8x512xf32>
    %250 = tpu.matmul %243, %10, %cst_68 {dimension_numbers = #tpu.dot_dimension_numbers<[1], [0], [0], [1], [0, 0, 1, 1], [], []>} : vector<8x128xf32>, vector<128x512xf32>, vector<8x512xf32> -> vector<8x512xf32>
    %251 = arith.addf %249, %250 : vector<8x512xf32>
    %252 = vector.extract_strided_slice %251 {offsets = [0, 0], sizes = [8, 128], strides = [1, 1]} : vector<8x512xf32> to vector<8x128xf32>
    %253 = arith.negf %252 : vector<8x128xf32>
    %254 = math.exp %253 : vector<8x128xf32>
    %cst_69 = arith.constant 1.000000e+00 : f32
    %255 = vector.broadcast %cst_69 : f32 to vector<8x128xf32>
    %256 = arith.addf %255, %254 : vector<8x128xf32>
    %257 = arith.divf %255, %256 : vector<8x128xf32>
    %258 = vector.extract_strided_slice %251 {offsets = [0, 128], sizes = [8, 128], strides = [1, 1]} : vector<8x512xf32> to vector<8x128xf32>
    %259 = arith.negf %258 : vector<8x128xf32>
    %260 = math.exp %259 : vector<8x128xf32>
    %cst_70 = arith.constant 1.000000e+00 : f32
    %261 = vector.broadcast %cst_70 : f32 to vector<8x128xf32>
    %262 = arith.addf %261, %260 : vector<8x128xf32>
    %263 = arith.divf %261, %262 : vector<8x128xf32>
    %264 = vector.extract_strided_slice %251 {offsets = [0, 256], sizes = [8, 128], strides = [1, 1]} : vector<8x512xf32> to vector<8x128xf32>
    %265 = math.tanh %264 : vector<8x128xf32>
    %266 = vector.extract_strided_slice %251 {offsets = [0, 384], sizes = [8, 128], strides = [1, 1]} : vector<8x512xf32> to vector<8x128xf32>
    %267 = arith.negf %266 : vector<8x128xf32>
    %268 = math.exp %267 : vector<8x128xf32>
    %cst_71 = arith.constant 1.000000e+00 : f32
    %269 = vector.broadcast %cst_71 : f32 to vector<8x128xf32>
    %270 = arith.addf %269, %268 : vector<8x128xf32>
    %271 = arith.divf %269, %270 : vector<8x128xf32>
    %272 = arith.mulf %263, %241 : vector<8x128xf32>
    %273 = arith.mulf %257, %265 : vector<8x128xf32>
    %274 = arith.addf %272, %273 : vector<8x128xf32>
    %275 = math.tanh %274 : vector<8x128xf32>
    %276 = arith.mulf %271, %275 : vector<8x128xf32>
    %277 = arith.index_cast %247 : i32 to index
    %c0_72 = arith.constant 0 : index
    %278 = vector.load %arg15[%277, %c0_72] : memref<64x128xf32, #tpu.memory_space<vmem>>, vector<8x128xf32>
    tpu.vector_store %arg15[%277, %c0_72], %276 {strides = array<i32>} : memref<64x128xf32, #tpu.memory_space<vmem>>, vector<8x128xf32>,
    %c8_i32_73 = arith.constant 8 : i32
    %c0_74 = arith.constant 0 : index
    %c0_75 = arith.constant 0 : index
    %c0_76 = arith.constant 0 : index
    %279 = vector.load %arg13[%c0_74, %c0_75, %c0_76] : memref<2x8x128xf32, #tpu.memory_space<vmem>>, vector<1x8x128xf32>
    %280 = vector.shape_cast %279 : vector<1x8x128xf32> to vector<8x128xf32>
    %281 = vector.shape_cast %276 : vector<8x128xf32> to vector<1x8x128xf32>
    tpu.vector_store %arg13[%c0_74, %c0_75, %c0_76], %281 {strides = array<i32>} : memref<2x8x128xf32, #tpu.memory_space<vmem>>, vector<1x8x128xf32>,
    %c0_77 = arith.constant 0 : index
    %c0_78 = arith.constant 0 : index
    %c0_79 = arith.constant 0 : index
    %282 = vector.load %arg14[%c0_77, %c0_78, %c0_79] : memref<2x8x128xf32, #tpu.memory_space<vmem>>, vector<1x8x128xf32>
    %283 = vector.shape_cast %282 : vector<1x8x128xf32> to vector<8x128xf32>
    %284 = vector.shape_cast %274 : vector<8x128xf32> to vector<1x8x128xf32>
    tpu.vector_store %arg14[%c0_77, %c0_78, %c0_79], %284 {strides = array<i32>} : memref<2x8x128xf32, #tpu.memory_space<vmem>>, vector<1x8x128xf32>,
    %c0_80 = arith.constant 0 : index
    %c0_81 = arith.constant 0 : index
    %285 = vector.load %arg15[%c0_80, %c0_81] : memref<64x128xf32, #tpu.memory_space<vmem>>, vector<64x128xf32>
    %c1 = arith.constant 1 : index
    %c0_82 = arith.constant 0 : index
    %c0_83 = arith.constant 0 : index
    %286 = vector.load %arg1[%c1, %c0_82, %c0_83] : memref<2x128x512xf32, #tpu.memory_space<vmem>>, vector<1x128x512xf32>
    %287 = vector.shape_cast %286 : vector<1x128x512xf32> to vector<128x512xf32>
    %cst_84 = arith.constant dense<0.000000e+00> : vector<64x512xf32>
    %288 = tpu.matmul %285, %287, %cst_84 {dimension_numbers = #tpu.dot_dimension_numbers<[1], [0], [0], [1], [0, 0, 1, 1], [], []>} : vector<64x128xf32>, vector<128x512xf32>, vector<64x512xf32> -> vector<64x512xf32>
    %c1_85 = arith.constant 1 : index
    %c0_86 = arith.constant 0 : index
    %c0_87 = arith.constant 0 : index
    %289 = vector.load %arg3[%c1_85, %c0_86, %c0_87] : memref<2x1x512xf32, #tpu.memory_space<vmem>>, vector<1x1x512xf32>
    %290 = vector.shape_cast %289 : vector<1x1x512xf32> to vector<1x512xf32>
    %291 = vector.broadcast %290 : vector<1x512xf32> to vector<64x512xf32>
    %292 = arith.addf %288, %291 : vector<64x512xf32>
    %c0_88 = arith.constant 0 : index
    %c0_89 = arith.constant 0 : index
    %293 = vector.load %arg16[%c0_88, %c0_89] : memref<64x512xf32, #tpu.memory_space<vmem>>, vector<64x512xf32>
    tpu.vector_store %arg16[%c0_88, %c0_89], %292 {strides = array<i32>} : memref<64x512xf32, #tpu.memory_space<vmem>>, vector<64x512xf32>,
    %c1_90 = arith.constant 1 : index
    %c0_91 = arith.constant 0 : index
    %c0_92 = arith.constant 0 : index
    %294 = vector.load %arg2[%c1_90, %c0_91, %c0_92] : memref<2x128x512xf32, #tpu.memory_space<vmem>>, vector<1x128x512xf32>
    %295 = vector.shape_cast %294 : vector<1x128x512xf32> to vector<128x512xf32>
    %c1_93 = arith.constant 1 : index
    %c0_94 = arith.constant 0 : index
    %c0_95 = arith.constant 0 : index
    %296 = vector.load %arg4[%c1_93, %c0_94, %c0_95] : memref<2x8x128xf32, #tpu.memory_space<vmem>>, vector<1x8x128xf32>
    %297 = vector.shape_cast %296 : vector<1x8x128xf32> to vector<8x128xf32>
    %c1_96 = arith.constant 1 : index
    %c0_97 = arith.constant 0 : index
    %c0_98 = arith.constant 0 : index
    %298 = vector.load %arg5[%c1_96, %c0_97, %c0_98] : memref<2x8x128xf32, #tpu.memory_space<vmem>>, vector<1x8x128xf32>
    %299 = vector.shape_cast %298 : vector<1x8x128xf32> to vector<8x128xf32>
    %c0_i32_99 = arith.constant 0 : i32
    %c8_i32_100 = arith.constant 8 : i32
    %300 = arith.muli %c0_i32_99, %c8_i32_100 : i32
    %301 = tpu.assume_multiple %300, 8 : i32
    %302 = arith.index_cast %301 : i32 to index
    %c0_101 = arith.constant 0 : index
    %303 = vector.load %arg16[%302, %c0_101] : memref<64x512xf32, #tpu.memory_space<vmem>>, vector<8x512xf32>
    %cst_102 = arith.constant dense<0.000000e+00> : vector<8x512xf32>
    %304 = tpu.matmul %297, %295, %cst_102 {dimension_numbers = #tpu.dot_dimension_numbers<[1], [0], [0], [1], [0, 0, 1, 1], [], []>} : vector<8x128xf32>, vector<128x512xf32>, vector<8x512xf32> -> vector<8x512xf32>
    %305 = arith.addf %303, %304 : vector<8x512xf32>
    %306 = vector.extract_strided_slice %305 {offsets = [0, 0], sizes = [8, 128], strides = [1, 1]} : vector<8x512xf32> to vector<8x128xf32>
    %307 = arith.negf %306 : vector<8x128xf32>
    %308 = math.exp %307 : vector<8x128xf32>
    %cst_103 = arith.constant 1.000000e+00 : f32
    %309 = vector.broadcast %cst_103 : f32 to vector<8x128xf32>
    %310 = arith.addf %309, %308 : vector<8x128xf32>
    %311 = arith.divf %309, %310 : vector<8x128xf32>
    %312 = vector.extract_strided_slice %305 {offsets = [0, 128], sizes = [8, 128], strides = [1, 1]} : vector<8x512xf32> to vector<8x128xf32>
    %313 = arith.negf %312 : vector<8x128xf32>
    %314 = math.exp %313 : vector<8x128xf32>
    %cst_104 = arith.constant 1.000000e+00 : f32
    %315 = vector.broadcast %cst_104 : f32 to vector<8x128xf32>
    %316 = arith.addf %315, %314 : vector<8x128xf32>
    %317 = arith.divf %315, %316 : vector<8x128xf32>
    %318 = vector.extract_strided_slice %305 {offsets = [0, 256], sizes = [8, 128], strides = [1, 1]} : vector<8x512xf32> to vector<8x128xf32>
    %319 = math.tanh %318 : vector<8x128xf32>
    %320 = vector.extract_strided_slice %305 {offsets = [0, 384], sizes = [8, 128], strides = [1, 1]} : vector<8x512xf32> to vector<8x128xf32>
    %321 = arith.negf %320 : vector<8x128xf32>
    %322 = math.exp %321 : vector<8x128xf32>
    %cst_105 = arith.constant 1.000000e+00 : f32
    %323 = vector.broadcast %cst_105 : f32 to vector<8x128xf32>
    %324 = arith.addf %323, %322 : vector<8x128xf32>
    %325 = arith.divf %323, %324 : vector<8x128xf32>
    %326 = arith.mulf %317, %299 : vector<8x128xf32>
    %327 = arith.mulf %311, %319 : vector<8x128xf32>
    %328 = arith.addf %326, %327 : vector<8x128xf32>
    %329 = math.tanh %328 : vector<8x128xf32>
    %330 = arith.mulf %325, %329 : vector<8x128xf32>
    %331 = arith.index_cast %301 : i32 to index
    %c0_106 = arith.constant 0 : index
    %332 = vector.load %arg15[%331, %c0_106] : memref<64x128xf32, #tpu.memory_space<vmem>>, vector<8x128xf32>
    tpu.vector_store %arg15[%331, %c0_106], %330 {strides = array<i32>} : memref<64x128xf32, #tpu.memory_space<vmem>>, vector<8x128xf32>,
    %c1_i32_107 = arith.constant 1 : i32
    %c8_i32_108 = arith.constant 8 : i32
    %333 = arith.muli %c1_i32_107, %c8_i32_108 : i32
    %334 = tpu.assume_multiple %333, 8 : i32
    %335 = arith.index_cast %334 : i32 to index
    %c0_109 = arith.constant 0 : index
    %336 = vector.load %arg16[%335, %c0_109] : memref<64x512xf32, #tpu.memory_space<vmem>>, vector<8x512xf32>
    %cst_110 = arith.constant dense<0.000000e+00> : vector<8x512xf32>
    %337 = tpu.matmul %330, %295, %cst_110 {dimension_numbers = #tpu.dot_dimension_numbers<[1], [0], [0], [1], [0, 0, 1, 1], [], []>} : vector<8x128xf32>, vector<128x512xf32>, vector<8x512xf32> -> vector<8x512xf32>
    %338 = arith.addf %336, %337 : vector<8x512xf32>
    %339 = vector.extract_strided_slice %338 {offsets = [0, 0], sizes = [8, 128], strides = [1, 1]} : vector<8x512xf32> to vector<8x128xf32>
    %340 = arith.negf %339 : vector<8x128xf32>
    %341 = math.exp %340 : vector<8x128xf32>
    %cst_111 = arith.constant 1.000000e+00 : f32
    %342 = vector.broadcast %cst_111 : f32 to vector<8x128xf32>
    %343 = arith.addf %342, %341 : vector<8x128xf32>
    %344 = arith.divf %342, %343 : vector<8x128xf32>
    %345 = vector.extract_strided_slice %338 {offsets = [0, 128], sizes = [8, 128], strides = [1, 1]} : vector<8x512xf32> to vector<8x128xf32>
    %346 = arith.negf %345 : vector<8x128xf32>
    %347 = math.exp %346 : vector<8x128xf32>
    %cst_112 = arith.constant 1.000000e+00 : f32
    %348 = vector.broadcast %cst_112 : f32 to vector<8x128xf32>
    %349 = arith.addf %348, %347 : vector<8x128xf32>
    %350 = arith.divf %348, %349 : vector<8x128xf32>
    %351 = vector.extract_strided_slice %338 {offsets = [0, 256], sizes = [8, 128], strides = [1, 1]} : vector<8x512xf32> to vector<8x128xf32>
    %352 = math.tanh %351 : vector<8x128xf32>
    %353 = vector.extract_strided_slice %338 {offsets = [0, 384], sizes = [8, 128], strides = [1, 1]} : vector<8x512xf32> to vector<8x128xf32>
    %354 = arith.negf %353 : vector<8x128xf32>
    %355 = math.exp %354 : vector<8x128xf32>
    %cst_113 = arith.constant 1.000000e+00 : f32
    %356 = vector.broadcast %cst_113 : f32 to vector<8x128xf32>
    %357 = arith.addf %356, %355 : vector<8x128xf32>
    %358 = arith.divf %356, %357 : vector<8x128xf32>
    %359 = arith.mulf %350, %328 : vector<8x128xf32>
    %360 = arith.mulf %344, %352 : vector<8x128xf32>
    %361 = arith.addf %359, %360 : vector<8x128xf32>
    %362 = math.tanh %361 : vector<8x128xf32>
    %363 = arith.mulf %358, %362 : vector<8x128xf32>
    %364 = arith.index_cast %334 : i32 to index
    %c0_114 = arith.constant 0 : index
    %365 = vector.load %arg15[%364, %c0_114] : memref<64x128xf32, #tpu.memory_space<vmem>>, vector<8x128xf32>
    tpu.vector_store %arg15[%364, %c0_114], %363 {strides = array<i32>} : memref<64x128xf32, #tpu.memory_space<vmem>>, vector<8x128xf32>,
    %c2_i32_115 = arith.constant 2 : i32
    %c8_i32_116 = arith.constant 8 : i32
    %366 = arith.muli %c2_i32_115, %c8_i32_116 : i32
    %367 = tpu.assume_multiple %366, 8 : i32
    %368 = arith.index_cast %367 : i32 to index
    %c0_117 = arith.constant 0 : index
    %369 = vector.load %arg16[%368, %c0_117] : memref<64x512xf32, #tpu.memory_space<vmem>>, vector<8x512xf32>
    %cst_118 = arith.constant dense<0.000000e+00> : vector<8x512xf32>
    %370 = tpu.matmul %363, %295, %cst_118 {dimension_numbers = #tpu.dot_dimension_numbers<[1], [0], [0], [1], [0, 0, 1, 1], [], []>} : vector<8x128xf32>, vector<128x512xf32>, vector<8x512xf32> -> vector<8x512xf32>
    %371 = arith.addf %369, %370 : vector<8x512xf32>
    %372 = vector.extract_strided_slice %371 {offsets = [0, 0], sizes = [8, 128], strides = [1, 1]} : vector<8x512xf32> to vector<8x128xf32>
    %373 = arith.negf %372 : vector<8x128xf32>
    %374 = math.exp %373 : vector<8x128xf32>
    %cst_119 = arith.constant 1.000000e+00 : f32
    %375 = vector.broadcast %cst_119 : f32 to vector<8x128xf32>
    %376 = arith.addf %375, %374 : vector<8x128xf32>
    %377 = arith.divf %375, %376 : vector<8x128xf32>
    %378 = vector.extract_strided_slice %371 {offsets = [0, 128], sizes = [8, 128], strides = [1, 1]} : vector<8x512xf32> to vector<8x128xf32>
    %379 = arith.negf %378 : vector<8x128xf32>
    %380 = math.exp %379 : vector<8x128xf32>
    %cst_120 = arith.constant 1.000000e+00 : f32
    %381 = vector.broadcast %cst_120 : f32 to vector<8x128xf32>
    %382 = arith.addf %381, %380 : vector<8x128xf32>
    %383 = arith.divf %381, %382 : vector<8x128xf32>
    %384 = vector.extract_strided_slice %371 {offsets = [0, 256], sizes = [8, 128], strides = [1, 1]} : vector<8x512xf32> to vector<8x128xf32>
    %385 = math.tanh %384 : vector<8x128xf32>
    %386 = vector.extract_strided_slice %371 {offsets = [0, 384], sizes = [8, 128], strides = [1, 1]} : vector<8x512xf32> to vector<8x128xf32>
    %387 = arith.negf %386 : vector<8x128xf32>
    %388 = math.exp %387 : vector<8x128xf32>
    %cst_121 = arith.constant 1.000000e+00 : f32
    %389 = vector.broadcast %cst_121 : f32 to vector<8x128xf32>
    %390 = arith.addf %389, %388 : vector<8x128xf32>
    %391 = arith.divf %389, %390 : vector<8x128xf32>
    %392 = arith.mulf %383, %361 : vector<8x128xf32>
    %393 = arith.mulf %377, %385 : vector<8x128xf32>
    %394 = arith.addf %392, %393 : vector<8x128xf32>
    %395 = math.tanh %394 : vector<8x128xf32>
    %396 = arith.mulf %391, %395 : vector<8x128xf32>
    %397 = arith.index_cast %367 : i32 to index
    %c0_122 = arith.constant 0 : index
    %398 = vector.load %arg15[%397, %c0_122] : memref<64x128xf32, #tpu.memory_space<vmem>>, vector<8x128xf32>
    tpu.vector_store %arg15[%397, %c0_122], %396 {strides = array<i32>} : memref<64x128xf32, #tpu.memory_space<vmem>>, vector<8x128xf32>,
    %c3_i32_123 = arith.constant 3 : i32
    %c8_i32_124 = arith.constant 8 : i32
    %399 = arith.muli %c3_i32_123, %c8_i32_124 : i32
    %400 = tpu.assume_multiple %399, 8 : i32
    %401 = arith.index_cast %400 : i32 to index
    %c0_125 = arith.constant 0 : index
    %402 = vector.load %arg16[%401, %c0_125] : memref<64x512xf32, #tpu.memory_space<vmem>>, vector<8x512xf32>
    %cst_126 = arith.constant dense<0.000000e+00> : vector<8x512xf32>
    %403 = tpu.matmul %396, %295, %cst_126 {dimension_numbers = #tpu.dot_dimension_numbers<[1], [0], [0], [1], [0, 0, 1, 1], [], []>} : vector<8x128xf32>, vector<128x512xf32>, vector<8x512xf32> -> vector<8x512xf32>
    %404 = arith.addf %402, %403 : vector<8x512xf32>
    %405 = vector.extract_strided_slice %404 {offsets = [0, 0], sizes = [8, 128], strides = [1, 1]} : vector<8x512xf32> to vector<8x128xf32>
    %406 = arith.negf %405 : vector<8x128xf32>
    %407 = math.exp %406 : vector<8x128xf32>
    %cst_127 = arith.constant 1.000000e+00 : f32
    %408 = vector.broadcast %cst_127 : f32 to vector<8x128xf32>
    %409 = arith.addf %408, %407 : vector<8x128xf32>
    %410 = arith.divf %408, %409 : vector<8x128xf32>
    %411 = vector.extract_strided_slice %404 {offsets = [0, 128], sizes = [8, 128], strides = [1, 1]} : vector<8x512xf32> to vector<8x128xf32>
    %412 = arith.negf %411 : vector<8x128xf32>
    %413 = math.exp %412 : vector<8x128xf32>
    %cst_128 = arith.constant 1.000000e+00 : f32
    %414 = vector.broadcast %cst_128 : f32 to vector<8x128xf32>
    %415 = arith.addf %414, %413 : vector<8x128xf32>
    %416 = arith.divf %414, %415 : vector<8x128xf32>
    %417 = vector.extract_strided_slice %404 {offsets = [0, 256], sizes = [8, 128], strides = [1, 1]} : vector<8x512xf32> to vector<8x128xf32>
    %418 = math.tanh %417 : vector<8x128xf32>
    %419 = vector.extract_strided_slice %404 {offsets = [0, 384], sizes = [8, 128], strides = [1, 1]} : vector<8x512xf32> to vector<8x128xf32>
    %420 = arith.negf %419 : vector<8x128xf32>
    %421 = math.exp %420 : vector<8x128xf32>
    %cst_129 = arith.constant 1.000000e+00 : f32
    %422 = vector.broadcast %cst_129 : f32 to vector<8x128xf32>
    %423 = arith.addf %422, %421 : vector<8x128xf32>
    %424 = arith.divf %422, %423 : vector<8x128xf32>
    %425 = arith.mulf %416, %394 : vector<8x128xf32>
    %426 = arith.mulf %410, %418 : vector<8x128xf32>
    %427 = arith.addf %425, %426 : vector<8x128xf32>
    %428 = math.tanh %427 : vector<8x128xf32>
    %429 = arith.mulf %424, %428 : vector<8x128xf32>
    %430 = arith.index_cast %400 : i32 to index
    %c0_130 = arith.constant 0 : index
    %431 = vector.load %arg15[%430, %c0_130] : memref<64x128xf32, #tpu.memory_space<vmem>>, vector<8x128xf32>
    tpu.vector_store %arg15[%430, %c0_130], %429 {strides = array<i32>} : memref<64x128xf32, #tpu.memory_space<vmem>>, vector<8x128xf32>,
    %c4_i32_131 = arith.constant 4 : i32
    %c8_i32_132 = arith.constant 8 : i32
    %432 = arith.muli %c4_i32_131, %c8_i32_132 : i32
    %433 = tpu.assume_multiple %432, 8 : i32
    %434 = arith.index_cast %433 : i32 to index
    %c0_133 = arith.constant 0 : index
    %435 = vector.load %arg16[%434, %c0_133] : memref<64x512xf32, #tpu.memory_space<vmem>>, vector<8x512xf32>
    %cst_134 = arith.constant dense<0.000000e+00> : vector<8x512xf32>
    %436 = tpu.matmul %429, %295, %cst_134 {dimension_numbers = #tpu.dot_dimension_numbers<[1], [0], [0], [1], [0, 0, 1, 1], [], []>} : vector<8x128xf32>, vector<128x512xf32>, vector<8x512xf32> -> vector<8x512xf32>
    %437 = arith.addf %435, %436 : vector<8x512xf32>
    %438 = vector.extract_strided_slice %437 {offsets = [0, 0], sizes = [8, 128], strides = [1, 1]} : vector<8x512xf32> to vector<8x128xf32>
    %439 = arith.negf %438 : vector<8x128xf32>
    %440 = math.exp %439 : vector<8x128xf32>
    %cst_135 = arith.constant 1.000000e+00 : f32
    %441 = vector.broadcast %cst_135 : f32 to vector<8x128xf32>
    %442 = arith.addf %441, %440 : vector<8x128xf32>
    %443 = arith.divf %441, %442 : vector<8x128xf32>
    %444 = vector.extract_strided_slice %437 {offsets = [0, 128], sizes = [8, 128], strides = [1, 1]} : vector<8x512xf32> to vector<8x128xf32>
    %445 = arith.negf %444 : vector<8x128xf32>
    %446 = math.exp %445 : vector<8x128xf32>
    %cst_136 = arith.constant 1.000000e+00 : f32
    %447 = vector.broadcast %cst_136 : f32 to vector<8x128xf32>
    %448 = arith.addf %447, %446 : vector<8x128xf32>
    %449 = arith.divf %447, %448 : vector<8x128xf32>
    %450 = vector.extract_strided_slice %437 {offsets = [0, 256], sizes = [8, 128], strides = [1, 1]} : vector<8x512xf32> to vector<8x128xf32>
    %451 = math.tanh %450 : vector<8x128xf32>
    %452 = vector.extract_strided_slice %437 {offsets = [0, 384], sizes = [8, 128], strides = [1, 1]} : vector<8x512xf32> to vector<8x128xf32>
    %453 = arith.negf %452 : vector<8x128xf32>
    %454 = math.exp %453 : vector<8x128xf32>
    %cst_137 = arith.constant 1.000000e+00 : f32
    %455 = vector.broadcast %cst_137 : f32 to vector<8x128xf32>
    %456 = arith.addf %455, %454 : vector<8x128xf32>
    %457 = arith.divf %455, %456 : vector<8x128xf32>
    %458 = arith.mulf %449, %427 : vector<8x128xf32>
    %459 = arith.mulf %443, %451 : vector<8x128xf32>
    %460 = arith.addf %458, %459 : vector<8x128xf32>
    %461 = math.tanh %460 : vector<8x128xf32>
    %462 = arith.mulf %457, %461 : vector<8x128xf32>
    %463 = arith.index_cast %433 : i32 to index
    %c0_138 = arith.constant 0 : index
    %464 = vector.load %arg15[%463, %c0_138] : memref<64x128xf32, #tpu.memory_space<vmem>>, vector<8x128xf32>
    tpu.vector_store %arg15[%463, %c0_138], %462 {strides = array<i32>} : memref<64x128xf32, #tpu.memory_space<vmem>>, vector<8x128xf32>,
    %c5_i32_139 = arith.constant 5 : i32
    %c8_i32_140 = arith.constant 8 : i32
    %465 = arith.muli %c5_i32_139, %c8_i32_140 : i32
    %466 = tpu.assume_multiple %465, 8 : i32
    %467 = arith.index_cast %466 : i32 to index
    %c0_141 = arith.constant 0 : index
    %468 = vector.load %arg16[%467, %c0_141] : memref<64x512xf32, #tpu.memory_space<vmem>>, vector<8x512xf32>
    %cst_142 = arith.constant dense<0.000000e+00> : vector<8x512xf32>
    %469 = tpu.matmul %462, %295, %cst_142 {dimension_numbers = #tpu.dot_dimension_numbers<[1], [0], [0], [1], [0, 0, 1, 1], [], []>} : vector<8x128xf32>, vector<128x512xf32>, vector<8x512xf32> -> vector<8x512xf32>
    %470 = arith.addf %468, %469 : vector<8x512xf32>
    %471 = vector.extract_strided_slice %470 {offsets = [0, 0], sizes = [8, 128], strides = [1, 1]} : vector<8x512xf32> to vector<8x128xf32>
    %472 = arith.negf %471 : vector<8x128xf32>
    %473 = math.exp %472 : vector<8x128xf32>
    %cst_143 = arith.constant 1.000000e+00 : f32
    %474 = vector.broadcast %cst_143 : f32 to vector<8x128xf32>
    %475 = arith.addf %474, %473 : vector<8x128xf32>
    %476 = arith.divf %474, %475 : vector<8x128xf32>
    %477 = vector.extract_strided_slice %470 {offsets = [0, 128], sizes = [8, 128], strides = [1, 1]} : vector<8x512xf32> to vector<8x128xf32>
    %478 = arith.negf %477 : vector<8x128xf32>
    %479 = math.exp %478 : vector<8x128xf32>
    %cst_144 = arith.constant 1.000000e+00 : f32
    %480 = vector.broadcast %cst_144 : f32 to vector<8x128xf32>
    %481 = arith.addf %480, %479 : vector<8x128xf32>
    %482 = arith.divf %480, %481 : vector<8x128xf32>
    %483 = vector.extract_strided_slice %470 {offsets = [0, 256], sizes = [8, 128], strides = [1, 1]} : vector<8x512xf32> to vector<8x128xf32>
    %484 = math.tanh %483 : vector<8x128xf32>
    %485 = vector.extract_strided_slice %470 {offsets = [0, 384], sizes = [8, 128], strides = [1, 1]} : vector<8x512xf32> to vector<8x128xf32>
    %486 = arith.negf %485 : vector<8x128xf32>
    %487 = math.exp %486 : vector<8x128xf32>
    %cst_145 = arith.constant 1.000000e+00 : f32
    %488 = vector.broadcast %cst_145 : f32 to vector<8x128xf32>
    %489 = arith.addf %488, %487 : vector<8x128xf32>
    %490 = arith.divf %488, %489 : vector<8x128xf32>
    %491 = arith.mulf %482, %460 : vector<8x128xf32>
    %492 = arith.mulf %476, %484 : vector<8x128xf32>
    %493 = arith.addf %491, %492 : vector<8x128xf32>
    %494 = math.tanh %493 : vector<8x128xf32>
    %495 = arith.mulf %490, %494 : vector<8x128xf32>
    %496 = arith.index_cast %466 : i32 to index
    %c0_146 = arith.constant 0 : index
    %497 = vector.load %arg15[%496, %c0_146] : memref<64x128xf32, #tpu.memory_space<vmem>>, vector<8x128xf32>
    tpu.vector_store %arg15[%496, %c0_146], %495 {strides = array<i32>} : memref<64x128xf32, #tpu.memory_space<vmem>>, vector<8x128xf32>,
    %c6_i32_147 = arith.constant 6 : i32
    %c8_i32_148 = arith.constant 8 : i32
    %498 = arith.muli %c6_i32_147, %c8_i32_148 : i32
    %499 = tpu.assume_multiple %498, 8 : i32
    %500 = arith.index_cast %499 : i32 to index
    %c0_149 = arith.constant 0 : index
    %501 = vector.load %arg16[%500, %c0_149] : memref<64x512xf32, #tpu.memory_space<vmem>>, vector<8x512xf32>
    %cst_150 = arith.constant dense<0.000000e+00> : vector<8x512xf32>
    %502 = tpu.matmul %495, %295, %cst_150 {dimension_numbers = #tpu.dot_dimension_numbers<[1], [0], [0], [1], [0, 0, 1, 1], [], []>} : vector<8x128xf32>, vector<128x512xf32>, vector<8x512xf32> -> vector<8x512xf32>
    %503 = arith.addf %501, %502 : vector<8x512xf32>
    %504 = vector.extract_strided_slice %503 {offsets = [0, 0], sizes = [8, 128], strides = [1, 1]} : vector<8x512xf32> to vector<8x128xf32>
    %505 = arith.negf %504 : vector<8x128xf32>
    %506 = math.exp %505 : vector<8x128xf32>
    %cst_151 = arith.constant 1.000000e+00 : f32
    %507 = vector.broadcast %cst_151 : f32 to vector<8x128xf32>
    %508 = arith.addf %507, %506 : vector<8x128xf32>
    %509 = arith.divf %507, %508 : vector<8x128xf32>
    %510 = vector.extract_strided_slice %503 {offsets = [0, 128], sizes = [8, 128], strides = [1, 1]} : vector<8x512xf32> to vector<8x128xf32>
    %511 = arith.negf %510 : vector<8x128xf32>
    %512 = math.exp %511 : vector<8x128xf32>
    %cst_152 = arith.constant 1.000000e+00 : f32
    %513 = vector.broadcast %cst_152 : f32 to vector<8x128xf32>
    %514 = arith.addf %513, %512 : vector<8x128xf32>
    %515 = arith.divf %513, %514 : vector<8x128xf32>
    %516 = vector.extract_strided_slice %503 {offsets = [0, 256], sizes = [8, 128], strides = [1, 1]} : vector<8x512xf32> to vector<8x128xf32>
    %517 = math.tanh %516 : vector<8x128xf32>
    %518 = vector.extract_strided_slice %503 {offsets = [0, 384], sizes = [8, 128], strides = [1, 1]} : vector<8x512xf32> to vector<8x128xf32>
    %519 = arith.negf %518 : vector<8x128xf32>
    %520 = math.exp %519 : vector<8x128xf32>
    %cst_153 = arith.constant 1.000000e+00 : f32
    %521 = vector.broadcast %cst_153 : f32 to vector<8x128xf32>
    %522 = arith.addf %521, %520 : vector<8x128xf32>
    %523 = arith.divf %521, %522 : vector<8x128xf32>
    %524 = arith.mulf %515, %493 : vector<8x128xf32>
    %525 = arith.mulf %509, %517 : vector<8x128xf32>
    %526 = arith.addf %524, %525 : vector<8x128xf32>
    %527 = math.tanh %526 : vector<8x128xf32>
    %528 = arith.mulf %523, %527 : vector<8x128xf32>
    %529 = arith.index_cast %499 : i32 to index
    %c0_154 = arith.constant 0 : index
    %530 = vector.load %arg15[%529, %c0_154] : memref<64x128xf32, #tpu.memory_space<vmem>>, vector<8x128xf32>
    tpu.vector_store %arg15[%529, %c0_154], %528 {strides = array<i32>} : memref<64x128xf32, #tpu.memory_space<vmem>>, vector<8x128xf32>,
    %c7_i32_155 = arith.constant 7 : i32
    %c8_i32_156 = arith.constant 8 : i32
    %531 = arith.muli %c7_i32_155, %c8_i32_156 : i32
    %532 = tpu.assume_multiple %531, 8 : i32
    %533 = arith.index_cast %532 : i32 to index
    %c0_157 = arith.constant 0 : index
    %534 = vector.load %arg16[%533, %c0_157] : memref<64x512xf32, #tpu.memory_space<vmem>>, vector<8x512xf32>
    %cst_158 = arith.constant dense<0.000000e+00> : vector<8x512xf32>
    %535 = tpu.matmul %528, %295, %cst_158 {dimension_numbers = #tpu.dot_dimension_numbers<[1], [0], [0], [1], [0, 0, 1, 1], [], []>} : vector<8x128xf32>, vector<128x512xf32>, vector<8x512xf32> -> vector<8x512xf32>
    %536 = arith.addf %534, %535 : vector<8x512xf32>
    %537 = vector.extract_strided_slice %536 {offsets = [0, 0], sizes = [8, 128], strides = [1, 1]} : vector<8x512xf32> to vector<8x128xf32>
    %538 = arith.negf %537 : vector<8x128xf32>
    %539 = math.exp %538 : vector<8x128xf32>
    %cst_159 = arith.constant 1.000000e+00 : f32
    %540 = vector.broadcast %cst_159 : f32 to vector<8x128xf32>
    %541 = arith.addf %540, %539 : vector<8x128xf32>
    %542 = arith.divf %540, %541 : vector<8x128xf32>
    %543 = vector.extract_strided_slice %536 {offsets = [0, 128], sizes = [8, 128], strides = [1, 1]} : vector<8x512xf32> to vector<8x128xf32>
    %544 = arith.negf %543 : vector<8x128xf32>
    %545 = math.exp %544 : vector<8x128xf32>
    %cst_160 = arith.constant 1.000000e+00 : f32
    %546 = vector.broadcast %cst_160 : f32 to vector<8x128xf32>
    %547 = arith.addf %546, %545 : vector<8x128xf32>
    %548 = arith.divf %546, %547 : vector<8x128xf32>
    %549 = vector.extract_strided_slice %536 {offsets = [0, 256], sizes = [8, 128], strides = [1, 1]} : vector<8x512xf32> to vector<8x128xf32>
    %550 = math.tanh %549 : vector<8x128xf32>
    %551 = vector.extract_strided_slice %536 {offsets = [0, 384], sizes = [8, 128], strides = [1, 1]} : vector<8x512xf32> to vector<8x128xf32>
    %552 = arith.negf %551 : vector<8x128xf32>
    %553 = math.exp %552 : vector<8x128xf32>
    %cst_161 = arith.constant 1.000000e+00 : f32
    %554 = vector.broadcast %cst_161 : f32 to vector<8x128xf32>
    %555 = arith.addf %554, %553 : vector<8x128xf32>
    %556 = arith.divf %554, %555 : vector<8x128xf32>
    %557 = arith.mulf %548, %526 : vector<8x128xf32>
    %558 = arith.mulf %542, %550 : vector<8x128xf32>
    %559 = arith.addf %557, %558 : vector<8x128xf32>
    %560 = math.tanh %559 : vector<8x128xf32>
    %561 = arith.mulf %556, %560 : vector<8x128xf32>
    %562 = arith.index_cast %532 : i32 to index
    %c0_162 = arith.constant 0 : index
    %563 = vector.load %arg15[%562, %c0_162] : memref<64x128xf32, #tpu.memory_space<vmem>>, vector<8x128xf32>
    tpu.vector_store %arg15[%562, %c0_162], %561 {strides = array<i32>} : memref<64x128xf32, #tpu.memory_space<vmem>>, vector<8x128xf32>,
    %c8_i32_163 = arith.constant 8 : i32
    %c1_164 = arith.constant 1 : index
    %c0_165 = arith.constant 0 : index
    %c0_166 = arith.constant 0 : index
    %564 = vector.load %arg13[%c1_164, %c0_165, %c0_166] : memref<2x8x128xf32, #tpu.memory_space<vmem>>, vector<1x8x128xf32>
    %565 = vector.shape_cast %564 : vector<1x8x128xf32> to vector<8x128xf32>
    %566 = vector.shape_cast %561 : vector<8x128xf32> to vector<1x8x128xf32>
    tpu.vector_store %arg13[%c1_164, %c0_165, %c0_166], %566 {strides = array<i32>} : memref<2x8x128xf32, #tpu.memory_space<vmem>>, vector<1x8x128xf32>,
    %c1_167 = arith.constant 1 : index
    %c0_168 = arith.constant 0 : index
    %c0_169 = arith.constant 0 : index
    %567 = vector.load %arg14[%c1_167, %c0_168, %c0_169] : memref<2x8x128xf32, #tpu.memory_space<vmem>>, vector<1x8x128xf32>
    %568 = vector.shape_cast %567 : vector<1x8x128xf32> to vector<8x128xf32>
    %569 = vector.shape_cast %559 : vector<8x128xf32> to vector<1x8x128xf32>
    tpu.vector_store %arg14[%c1_167, %c0_168, %c0_169], %569 {strides = array<i32>} : memref<2x8x128xf32, #tpu.memory_space<vmem>>, vector<1x8x128xf32>,
    %c0_170 = arith.constant 0 : index
    %c0_171 = arith.constant 0 : index
    %570 = vector.load %arg6[%c0_170, %c0_171] : memref<128x128xf32, #tpu.memory_space<vmem>>, vector<128x128xf32>
    %c0_172 = arith.constant 0 : index
    %c0_173 = arith.constant 0 : index
    %571 = vector.load %arg8[%c0_172, %c0_173] : memref<128x128xf32, #tpu.memory_space<vmem>>, vector<128x128xf32>
    %c0_174 = arith.constant 0 : index
    %c0_175 = arith.constant 0 : index
    %572 = vector.load %arg10[%c0_174, %c0_175] : memref<128x128xf32, #tpu.memory_space<vmem>>, vector<128x128xf32>
    %c0_176 = arith.constant 0 : index
    %c0_177 = arith.constant 0 : index
    %573 = vector.load %arg7[%c0_176, %c0_177] : memref<1x128xf32, #tpu.memory_space<vmem>>, vector<1x128xf32>
    %c0_178 = arith.constant 0 : index
    %c0_179 = arith.constant 0 : index
    %574 = vector.load %arg9[%c0_178, %c0_179] : memref<1x128xf32, #tpu.memory_space<vmem>>, vector<1x128xf32>
    %c0_180 = arith.constant 0 : index
    %c0_181 = arith.constant 0 : index
    %575 = vector.load %arg11[%c0_180, %c0_181] : memref<1x128xf32, #tpu.memory_space<vmem>>, vector<1x128xf32>
    %c0_182 = arith.constant 0 : index
    %c0_183 = arith.constant 0 : index
    %576 = tpu.strided_load %arg15[%c0_182, %c0_183] {strides = array<i32: 8, 1>} : memref<64x128xf32, #tpu.memory_space<vmem>>, vector<8x128xf32>
    %cst_184 = arith.constant dense<0.000000e+00> : vector<8x128xf32>
    %577 = tpu.matmul %576, %570, %cst_184 {dimension_numbers = #tpu.dot_dimension_numbers<[1], [0], [0], [1], [0, 0, 1, 1], [], []>} : vector<8x128xf32>, vector<128x128xf32>, vector<8x128xf32> -> vector<8x128xf32>
    %578 = vector.broadcast %573 : vector<1x128xf32> to vector<8x128xf32>
    %579 = arith.addf %577, %578 : vector<8x128xf32>
    %cst_185 = arith.constant dense<0.000000e+00> : vector<8x128xf32>
    %580 = tpu.matmul %576, %571, %cst_185 {dimension_numbers = #tpu.dot_dimension_numbers<[1], [0], [0], [1], [0, 0, 1, 1], [], []>} : vector<8x128xf32>, vector<128x128xf32>, vector<8x128xf32> -> vector<8x128xf32>
    %581 = vector.broadcast %574 : vector<1x128xf32> to vector<8x128xf32>
    %582 = arith.addf %580, %581 : vector<8x128xf32>
    %cst_186 = arith.constant dense<0.000000e+00> : vector<8x128xf32>
    %583 = tpu.matmul %576, %572, %cst_186 {dimension_numbers = #tpu.dot_dimension_numbers<[1], [0], [0], [1], [0, 0, 1, 1], [], []>} : vector<8x128xf32>, vector<128x128xf32>, vector<8x128xf32> -> vector<8x128xf32>
    %584 = vector.broadcast %575 : vector<1x128xf32> to vector<8x128xf32>
    %585 = arith.addf %583, %584 : vector<8x128xf32>
    %cst_187 = arith.constant dense<0.000000e+00> : vector<8x8xf32>
    %586 = tpu.matmul %579, %582, %cst_187 {dimension_numbers = #tpu.dot_dimension_numbers<[1], [1], [0], [0], [0, 0, 1, 0], [], []>} : vector<8x128xf32>, vector<8x128xf32>, vector<8x8xf32> -> vector<8x8xf32>
    %cst_188 = arith.constant 1.250000e-01 : f32
    %587 = vector.broadcast %cst_188 : f32 to vector<8x8xf32>
    %588 = arith.mulf %586, %587 : vector<8x8xf32>
    %cst_189 = arith.constant dense<0xFF800000> : vector<8xf32>
    %589 = vector.multi_reduction <maximumf>, %588, %cst_189 [1] : vector<8x8xf32> to vector<8xf32>
    %590 = vector.shape_cast %589 : vector<8xf32> to vector<8x1xf32>
    %591 = vector.broadcast %590 : vector<8x1xf32> to vector<8x8xf32>
    %592 = arith.subf %588, %591 : vector<8x8xf32>
    %593 = math.exp %592 : vector<8x8xf32>
    %cst_190 = arith.constant dense<0.000000e+00> : vector<8xf32>
    %594 = vector.multi_reduction <add>, %593, %cst_190 [1] : vector<8x8xf32> to vector<8xf32>
    %595 = vector.shape_cast %594 : vector<8xf32> to vector<8x1xf32>
    %596 = tpu.reciprocal %595 {approx = true} : vector<8x1xf32> -> vector<8x1xf32>
    %597 = vector.broadcast %596 : vector<8x1xf32> to vector<8x8xf32>
    %598 = arith.mulf %593, %597 : vector<8x8xf32>
    %cst_191 = arith.constant dense<0.000000e+00> : vector<8x128xf32>
    %599 = tpu.matmul %598, %585, %cst_191 {dimension_numbers = #tpu.dot_dimension_numbers<[1], [0], [0], [1], [0, 0, 1, 1], [], []>} : vector<8x8xf32>, vector<8x128xf32>, vector<8x128xf32> -> vector<8x128xf32>
    %600 = arith.addf %599, %576 : vector<8x128xf32>
    %c0_192 = arith.constant 0 : index
    %c0_193 = arith.constant 0 : index
    %c0_194 = arith.constant 0 : index
    %601 = vector.load %arg12[%c0_192, %c0_193, %c0_194] : memref<2x8x128xf32, #tpu.memory_space<vmem>>, vector<1x8x128xf32>
    %602 = vector.shape_cast %601 : vector<1x8x128xf32> to vector<8x128xf32>
    %603 = vector.shape_cast %600 : vector<8x128xf32> to vector<1x8x128xf32>
    tpu.vector_store %arg12[%c0_192, %c0_193, %c0_194], %603 {strides = array<i32>} : memref<2x8x128xf32, #tpu.memory_space<vmem>>, vector<1x8x128xf32>,
    %c1_195 = arith.constant 1 : index
    %c0_196 = arith.constant 0 : index
    %604 = tpu.strided_load %arg15[%c1_195, %c0_196] {strides = array<i32: 8, 1>} : memref<64x128xf32, #tpu.memory_space<vmem>>, vector<8x128xf32>
    %cst_197 = arith.constant dense<0.000000e+00> : vector<8x128xf32>
    %605 = tpu.matmul %604, %570, %cst_197 {dimension_numbers = #tpu.dot_dimension_numbers<[1], [0], [0], [1], [0, 0, 1, 1], [], []>} : vector<8x128xf32>, vector<128x128xf32>, vector<8x128xf32> -> vector<8x128xf32>
    %606 = vector.broadcast %573 : vector<1x128xf32> to vector<8x128xf32>
    %607 = arith.addf %605, %606 : vector<8x128xf32>
    %cst_198 = arith.constant dense<0.000000e+00> : vector<8x128xf32>
    %608 = tpu.matmul %604, %571, %cst_198 {dimension_numbers = #tpu.dot_dimension_numbers<[1], [0], [0], [1], [0, 0, 1, 1], [], []>} : vector<8x128xf32>, vector<128x128xf32>, vector<8x128xf32> -> vector<8x128xf32>
    %609 = vector.broadcast %574 : vector<1x128xf32> to vector<8x128xf32>
    %610 = arith.addf %608, %609 : vector<8x128xf32>
    %cst_199 = arith.constant dense<0.000000e+00> : vector<8x128xf32>
    %611 = tpu.matmul %604, %572, %cst_199 {dimension_numbers = #tpu.dot_dimension_numbers<[1], [0], [0], [1], [0, 0, 1, 1], [], []>} : vector<8x128xf32>, vector<128x128xf32>, vector<8x128xf32> -> vector<8x128xf32>
    %612 = vector.broadcast %575 : vector<1x128xf32> to vector<8x128xf32>
    %613 = arith.addf %611, %612 : vector<8x128xf32>
    %cst_200 = arith.constant dense<0.000000e+00> : vector<8x8xf32>
    %614 = tpu.matmul %607, %610, %cst_200 {dimension_numbers = #tpu.dot_dimension_numbers<[1], [1], [0], [0], [0, 0, 1, 0], [], []>} : vector<8x128xf32>, vector<8x128xf32>, vector<8x8xf32> -> vector<8x8xf32>
    %cst_201 = arith.constant 1.250000e-01 : f32
    %615 = vector.broadcast %cst_201 : f32 to vector<8x8xf32>
    %616 = arith.mulf %614, %615 : vector<8x8xf32>
    %cst_202 = arith.constant dense<0xFF800000> : vector<8xf32>
    %617 = vector.multi_reduction <maximumf>, %616, %cst_202 [1] : vector<8x8xf32> to vector<8xf32>
    %618 = vector.shape_cast %617 : vector<8xf32> to vector<8x1xf32>
    %619 = vector.broadcast %618 : vector<8x1xf32> to vector<8x8xf32>
    %620 = arith.subf %616, %619 : vector<8x8xf32>
    %621 = math.exp %620 : vector<8x8xf32>
    %cst_203 = arith.constant dense<0.000000e+00> : vector<8xf32>
    %622 = vector.multi_reduction <add>, %621, %cst_203 [1] : vector<8x8xf32> to vector<8xf32>
    %623 = vector.shape_cast %622 : vector<8xf32> to vector<8x1xf32>
    %624 = tpu.reciprocal %623 {approx = true} : vector<8x1xf32> -> vector<8x1xf32>
    %625 = vector.broadcast %624 : vector<8x1xf32> to vector<8x8xf32>
    %626 = arith.mulf %621, %625 : vector<8x8xf32>
    %cst_204 = arith.constant dense<0.000000e+00> : vector<8x128xf32>
    %627 = tpu.matmul %626, %613, %cst_204 {dimension_numbers = #tpu.dot_dimension_numbers<[1], [0], [0], [1], [0, 0, 1, 1], [], []>} : vector<8x8xf32>, vector<8x128xf32>, vector<8x128xf32> -> vector<8x128xf32>
    %628 = arith.addf %627, %604 : vector<8x128xf32>
    %c1_205 = arith.constant 1 : index
    %c0_206 = arith.constant 0 : index
    %c0_207 = arith.constant 0 : index
    %629 = vector.load %arg12[%c1_205, %c0_206, %c0_207] : memref<2x8x128xf32, #tpu.memory_space<vmem>>, vector<1x8x128xf32>
    %630 = vector.shape_cast %629 : vector<1x8x128xf32> to vector<8x128xf32>
    %631 = vector.shape_cast %628 : vector<8x128xf32> to vector<1x8x128xf32>
    tpu.vector_store %arg12[%c1_205, %c0_206, %c0_207], %631 {strides = array<i32>} : memref<2x8x128xf32, #tpu.memory_space<vmem>>, vector<1x8x128xf32>,
    return
  }
}

</mosaic_0001>

<llo_original>
// kernel: _forward_impl.1
$region0: #{_forward_impl.1}
  #allocation0 [shape = 'u32[]', space=smem, size = 0x4, offset = 0x4, fixed_abs, tag = 'smem constant byte address 0x4 - core index']
  #allocation1 [shape = 'u32[72,128]{1,0:T(1,128)}', space=vmem, size = 0x9000, scoped, tag = 'internal scratch']
  #allocation2 [shape = 'f32[64,128]{1,0:T(8,128)}', space=vmem, size = 0x8000, scoped, tag = 'scratch operand']
  #allocation3 [shape = 'f32[64,512]{1,0:T(8,128)}', space=vmem, size = 0x20000, scoped, tag = 'scratch operand']
  %s0 = inlined_call_operand.vmem [shape: f32[64,128], index: 0, kind: input, shape index: {}]
  %s1 = inlined_call_operand.hbm [shape: f32[2,128,512], index: 1, kind: input, shape index: {}]
  %s2 = inlined_call_operand.hbm [shape: f32[2,128,512], index: 2, kind: input, shape index: {}]
  %s3 = inlined_call_operand.vmem [shape: f32[2,1,512], index: 3, kind: input, shape index: {}]
  %s4 = inlined_call_operand.vmem [shape: f32[2,8,128], index: 4, kind: input, shape index: {}]
  %s5 = inlined_call_operand.vmem [shape: f32[2,8,128], index: 5, kind: input, shape index: {}]
  %s6 = inlined_call_operand.hbm [shape: f32[128,128], index: 6, kind: input, shape index: {}]
  %s7 = inlined_call_operand.vmem [shape: f32[1,128], index: 7, kind: input, shape index: {}]
  %s8 = inlined_call_operand.hbm [shape: f32[128,128], index: 8, kind: input, shape index: {}]
  %s9 = inlined_call_operand.vmem [shape: f32[1,128], index: 9, kind: input, shape index: {}]
  %s10 = inlined_call_operand.hbm [shape: f32[128,128], index: 10, kind: input, shape index: {}]
  %s11 = inlined_call_operand.vmem [shape: f32[1,128], index: 11, kind: input, shape index: {}]
  %s12 = inlined_call_operand.hbm [shape: f32[2,8,128], index: 12, kind: output, shape index: {0}]
  %s13 = inlined_call_operand.vmem [shape: f32[2,8,128], index: 13, kind: output, shape index: {1}]
  %s14 = inlined_call_operand.vmem [shape: f32[2,8,128], index: 14, kind: output, shape index: {2}]
  %15 = xla_tuple %s12, %s13, %s14
  %s16 = sld [smem:[#allocation0]]
  $region94: #{_forward_impl.1} parent=0
    _
  %s18 = ssub.s32 1, %s16
  %s19 = scalar_select 0, %s18, %s16
  $region1: #{_forward_impl.1} parent=0
    #allocation4 [shape = 'u8[524288]{0}', space=vmem, size = 0x80000, scoped, tag = 'input window, operand 1, single buffered']
    #allocation5 [shape = 's32[1]{0}', space=sflag, size = 0x4, scoped, tag = 'scoped memory for _forward_impl.1']
    #allocation6 [shape = 's32[1]{0}', space=sflag, size = 0x4, scoped, tag = 'scoped memory for _forward_impl.1']
    #allocation7 [shape = 'u8[524288]{0}', space=vmem, size = 0x80000, scoped, tag = 'input window, operand 2, single buffered']
    #allocation8 [shape = 's32[1]{0}', space=sflag, size = 0x4, scoped, tag = 'scoped memory for _forward_impl.1']
    #allocation9 [shape = 'u8[65536]{0}', space=vmem, size = 0x10000, scoped, tag = 'input window, operand 6, single buffered']
    #allocation10 [shape = 'u8[65536]{0}', space=vmem, size = 0x10000, scoped, tag = 'input window, operand 8, single buffered']
    #allocation11 [shape = 's32[1]{0}', space=sflag, size = 0x4, scoped, tag = 'scoped memory for _forward_impl.1']
    #allocation12 [shape = 'u8[65536]{0}', space=vmem, size = 0x10000, scoped, tag = 'input window, operand 10, single buffered']
    #allocation13 [shape = 'u8[8192]{0}', space=vmem, size = 0x2000, scoped, tag = 'output window, operand 0, single buffered']
    %20 = vsyncpa [#allocation5], 0
    %21 = vsyncpa [#allocation8], 0
    %22 = vsyncpa [#allocation11], 0
    %23 = vsyncpa [#allocation6], 0
    // Predicated region
    $region2: #{_forward_impl.1} parent=1 // pred_check
      _
    $region3: #{_forward_impl.1} parent=1 // pred_check_branch
      %25 = sbr.rel (0) target = $region5
    $region4: #{_forward_impl.1} parent=1 // pred_region
      _
    $region5: #{_forward_impl.1} parent=1 // pred_fallthru
      _
    // Predicated region
    $region6: #{_forward_impl.1} parent=1 // pred_check
      _
    $region7: #{_forward_impl.1} parent=1 // pred_check_branch
      %27 = sbr.rel (0) target = $region9
    $region8: #{_forward_impl.1} parent=1 // pred_region
      %29 = vsyncadd [#allocation5], 0
      %s30 = sshll.u32 %s1, 4
      %s31 = int_to_ptr.hbm [resolvable:$true] %s30
      %s32 = sshll.u32 [#allocation4], 4
      %s33 = int_to_ptr.vmem [resolvable:$true] %s32
      %38 = dma.hbm_to_vmem [thread:$0]  %s31, 16384, %s33, [#allocation5], 512, 512, 32
    $region9: #{_forward_impl.1} parent=1 // pred_fallthru
      _
    // Predicated region
    $region10: #{_forward_impl.1} parent=1 // pred_check
      _
    $region11: #{_forward_impl.1} parent=1 // pred_check_branch
      %40 = sbr.rel (0) target = $region13
    $region12: #{_forward_impl.1} parent=1 // pred_region
      %42 = vsyncadd [#allocation8], 0
      %s43 = sshll.u32 %s2, 4
      %s44 = int_to_ptr.hbm [resolvable:$true] %s43
      %s45 = sshll.u32 [#allocation7], 4
      %s46 = int_to_ptr.vmem [resolvable:$true] %s45
      %51 = dma.hbm_to_vmem [thread:$0]  %s44, 16384, %s46, [#allocation8], 512, 512, 32
    $region13: #{_forward_impl.1} parent=1 // pred_fallthru
      _
    // Predicated region
    $region14: #{_forward_impl.1} parent=1 // pred_check
      _
    $region15: #{_forward_impl.1} parent=1 // pred_check_branch
      %53 = sbr.rel (0) target = $region17
    $region16: #{_forward_impl.1} parent=1 // pred_region
      _
    $region17: #{_forward_impl.1} parent=1 // pred_fallthru
      _
    // Predicated region
    $region18: #{_forward_impl.1} parent=1 // pred_check
      _
    $region19: #{_forward_impl.1} parent=1 // pred_check_branch
      %55 = sbr.rel (0) target = $region21
    $region20: #{_forward_impl.1} parent=1 // pred_region
      _
    $region21: #{_forward_impl.1} parent=1 // pred_fallthru
      _
    // Predicated region
    $region22: #{_forward_impl.1} parent=1 // pred_check
      _
    $region23: #{_forward_impl.1} parent=1 // pred_check_branch
      %57 = sbr.rel (0) target = $region25
    $region24: #{_forward_impl.1} parent=1 // pred_region
      _
    $region25: #{_forward_impl.1} parent=1 // pred_fallthru
      _
    // Predicated region
    $region26: #{_forward_impl.1} parent=1 // pred_check
      _
    $region27: #{_forward_impl.1} parent=1 // pred_check_branch
      %59 = sbr.rel (0) target = $region29
    $region28: #{_forward_impl.1} parent=1 // pred_region
      %61 = vsyncadd [#allocation8], 0
      %s62 = sshll.u32 %s6, 4
      %s63 = int_to_ptr.hbm [resolvable:$true] %s62
      %s64 = sshll.u32 [#allocation9], 4
      %s65 = int_to_ptr.vmem [resolvable:$true] %s64
      %70 = dma.hbm_to_vmem [thread:$0]  %s63, 2048, %s65, [#allocation8], 128, 128, 8
    $region29: #{_forward_impl.1} parent=1 // pred_fallthru
      _
    // Predicated region
    $region30: #{_forward_impl.1} parent=1 // pred_check
      _
    $region31: #{_forward_impl.1} parent=1 // pred_check_branch
      %72 = sbr.rel (0) target = $region33
    $region32: #{_forward_impl.1} parent=1 // pred_region
      _
    $region33: #{_forward_impl.1} parent=1 // pred_fallthru
      _
    // Predicated region
    $region34: #{_forward_impl.1} parent=1 // pred_check
      _
    $region35: #{_forward_impl.1} parent=1 // pred_check_branch
      %74 = sbr.rel (0) target = $region37
    $region36: #{_forward_impl.1} parent=1 // pred_region
      %76 = vsyncadd [#allocation11], 0
      %s77 = sshll.u32 %s8, 4
      %s78 = int_to_ptr.hbm [resolvable:$true] %s77
      %s79 = sshll.u32 [#allocation10], 4
      %s80 = int_to_ptr.vmem [resolvable:$true] %s79
      %85 = dma.hbm_to_vmem [thread:$0]  %s78, 2048, %s80, [#allocation11], 128, 128, 8
    $region37: #{_forward_impl.1} parent=1 // pred_fallthru
      _
    // Predicated region
    $region38: #{_forward_impl.1} parent=1 // pred_check
      _
    $region39: #{_forward_impl.1} parent=1 // pred_check_branch
      %87 = sbr.rel (0) target = $region41
    $region40: #{_forward_impl.1} parent=1 // pred_region
      _
    $region41: #{_forward_impl.1} parent=1 // pred_fallthru
      _
    // Predicated region
    $region42: #{_forward_impl.1} parent=1 // pred_check
      _
    $region43: #{_forward_impl.1} parent=1 // pred_check_branch
      %89 = sbr.rel (0) target = $region45
    $region44: #{_forward_impl.1} parent=1 // pred_region
      %91 = vsyncadd [#allocation11], 0
      %s92 = sshll.u32 %s10, 4
      %s93 = int_to_ptr.hbm [resolvable:$true] %s92
      %s94 = sshll.u32 [#allocation12], 4
      %s95 = int_to_ptr.vmem [resolvable:$true] %s94
      %100 = dma.hbm_to_vmem [thread:$0]  %s93, 2048, %s95, [#allocation11], 128, 128, 8
    $region45: #{_forward_impl.1} parent=1 // pred_fallthru
      _
    // Predicated region
    $region46: #{_forward_impl.1} parent=1 // pred_check
      _
    $region47: #{_forward_impl.1} parent=1 // pred_check_branch
      %102 = sbr.rel (0) target = $region49
    $region48: #{_forward_impl.1} parent=1 // pred_region
      _
    $region49: #{_forward_impl.1} parent=1 // pred_fallthru
      _
    // Predicated region
    $region50: #{_forward_impl.1} parent=1 // pred_check
      _
    $region51: #{_forward_impl.1} parent=1 // pred_check_branch
      %104 = sbr.rel (0) target = $region53
    $region52: #{_forward_impl.1} parent=1 // pred_region
      %106 = dma.done [#allocation5], 16384
    $region53: #{_forward_impl.1} parent=1 // pred_fallthru
      _
    // Predicated region
    $region54: #{_forward_impl.1} parent=1 // pred_check
      _
    $region55: #{_forward_impl.1} parent=1 // pred_check_branch
      %108 = sbr.rel (0) target = $region57
    $region56: #{_forward_impl.1} parent=1 // pred_region
      %110 = dma.done [#allocation8], 16384
    $region57: #{_forward_impl.1} parent=1 // pred_fallthru
      _
    // Predicated region
    $region58: #{_forward_impl.1} parent=1 // pred_check
      _
    $region59: #{_forward_impl.1} parent=1 // pred_check_branch
      %112 = sbr.rel (0) target = $region61
    $region60: #{_forward_impl.1} parent=1 // pred_region
      %114 = dma.done [#allocation8], 2048
    $region61: #{_forward_impl.1} parent=1 // pred_fallthru
      _
    // Predicated region
    $region62: #{_forward_impl.1} parent=1 // pred_check
      _
    $region63: #{_forward_impl.1} parent=1 // pred_check_branch
      %116 = sbr.rel (0) target = $region65
    $region64: #{_forward_impl.1} parent=1 // pred_region
      %118 = dma.done [#allocation11], 2048
    $region65: #{_forward_impl.1} parent=1 // pred_fallthru
      _
    // Predicated region
    $region66: #{_forward_impl.1} parent=1 // pred_check
      _
    $region67: #{_forward_impl.1} parent=1 // pred_check_branch
      %120 = sbr.rel (0) target = $region69
    $region68: #{_forward_impl.1} parent=1 // pred_region
      %122 = dma.done [#allocation11], 2048
    $region69: #{_forward_impl.1} parent=1 // pred_fallthru
      _
    %v123 = vld [vmem:[%s0] sm:$0xff]
    %v124 = vld [vmem:[%s0 + $0x8] sm:$0xff]
    %v125 = vld [vmem:[%s0 + $0x10] sm:$0xff]
    %v126 = vld [vmem:[%s0 + $0x18] sm:$0xff]
    %v127 = vld [vmem:[%s0 + $0x20] sm:$0xff]
    %v128 = vld [vmem:[%s0 + $0x28] sm:$0xff]
    %v129 = vld [vmem:[%s0 + $0x30] sm:$0xff]
    %v130 = vld [vmem:[%s0 + $0x38] sm:$0xff]
    %v131 = vld [vmem:[#allocation4] sm:$0xff]
    %v132 = vld [vmem:[#allocation4 + $0x8] sm:$0xff]
    %v133 = vld [vmem:[#allocation4 + $0x10] sm:$0xff]
    %v134 = vld [vmem:[#allocation4 + $0x18] sm:$0xff]
    %v135 = vld [vmem:[#allocation4 + $0x20] sm:$0xff]
    %v136 = vld [vmem:[#allocation4 + $0x28] sm:$0xff]
    %v137 = vld [vmem:[#allocation4 + $0x30] sm:$0xff]
    %v138 = vld [vmem:[#allocation4 + $0x38] sm:$0xff]
    %v139 = vld [vmem:[#allocation4 + $0x40] sm:$0xff]
    %v140 = vld [vmem:[#allocation4 + $0x48] sm:$0xff]
    %v141 = vld [vmem:[#allocation4 + $0x50] sm:$0xff]
    %v142 = vld [vmem:[#allocation4 + $0x58] sm:$0xff]
    %v143 = vld [vmem:[#allocation4 + $0x60] sm:$0xff]
    %v144 = vld [vmem:[#allocation4 + $0x68] sm:$0xff]
    %v145 = vld [vmem:[#allocation4 + $0x70] sm:$0xff]
    %v146 = vld [vmem:[#allocation4 + $0x78] sm:$0xff]
    %v147 = vld [vmem:[#allocation4 + $0x80] sm:$0xff]
    %v148 = vld [vmem:[#allocation4 + $0x88] sm:$0xff]
    %v149 = vld [vmem:[#allocation4 + $0x90] sm:$0xff]
    %v150 = vld [vmem:[#allocation4 + $0x98] sm:$0xff]
    %v151 = vld [vmem:[#allocation4 + $0xa0] sm:$0xff]
    %v152 = vld [vmem:[#allocation4 + $0xa8] sm:$0xff]
    %v153 = vld [vmem:[#allocation4 + $0xb0] sm:$0xff]
    %v154 = vld [vmem:[#allocation4 + $0xb8] sm:$0xff]
    %v155 = vld [vmem:[#allocation4 + $0xc0] sm:$0xff]
    %v156 = vld [vmem:[#allocation4 + $0xc8] sm:$0xff]
    %v157 = vld [vmem:[#allocation4 + $0xd0] sm:$0xff]
    %v158 = vld [vmem:[#allocation4 + $0xd8] sm:$0xff]
    %v159 = vld [vmem:[#allocation4 + $0xe0] sm:$0xff]
    %v160 = vld [vmem:[#allocation4 + $0xe8] sm:$0xff]
    %v161 = vld [vmem:[#allocation4 + $0xf0] sm:$0xff]
    %v162 = vld [vmem:[#allocation4 + $0xf8] sm:$0xff]
    %v163 = vld [vmem:[#allocation4 + $0x100] sm:$0xff]
    %v164 = vld [vmem:[#allocation4 + $0x108] sm:$0xff]
    %v165 = vld [vmem:[#allocation4 + $0x110] sm:$0xff]
    %v166 = vld [vmem:[#allocation4 + $0x118] sm:$0xff]
    %v167 = vld [vmem:[#allocation4 + $0x120] sm:$0xff]
    %v168 = vld [vmem:[#allocation4 + $0x128] sm:$0xff]
    %v169 = vld [vmem:[#allocation4 + $0x130] sm:$0xff]
    %v170 = vld [vmem:[#allocation4 + $0x138] sm:$0xff]
    %v171 = vld [vmem:[#allocation4 + $0x140] sm:$0xff]
    %v172 = vld [vmem:[#allocation4 + $0x148] sm:$0xff]
    %v173 = vld [vmem:[#allocation4 + $0x150] sm:$0xff]
    %v174 = vld [vmem:[#allocation4 + $0x158] sm:$0xff]
    %v175 = vld [vmem:[#allocation4 + $0x160] sm:$0xff]
    %v176 = vld [vmem:[#allocation4 + $0x168] sm:$0xff]
    %v177 = vld [vmem:[#allocation4 + $0x170] sm:$0xff]
    %v178 = vld [vmem:[#allocation4 + $0x178] sm:$0xff]
    %v179 = vld [vmem:[#allocation4 + $0x180] sm:$0xff]
    %v180 = vld [vmem:[#allocation4 + $0x188] sm:$0xff]
    %v181 = vld [vmem:[#allocation4 + $0x190] sm:$0xff]
    %v182 = vld [vmem:[#allocation4 + $0x198] sm:$0xff]
    %v183 = vld [vmem:[#allocation4 + $0x1a0] sm:$0xff]
    %v184 = vld [vmem:[#allocation4 + $0x1a8] sm:$0xff]
    %v185 = vld [vmem:[#allocation4 + $0x1b0] sm:$0xff]
    %v186 = vld [vmem:[#allocation4 + $0x1b8] sm:$0xff]
    %v187 = vld [vmem:[#allocation4 + $0x1c0] sm:$0xff]
    %v188 = vld [vmem:[#allocation4 + $0x1c8] sm:$0xff]
    %v189 = vld [vmem:[#allocation4 + $0x1d0] sm:$0xff]
    %v190 = vld [vmem:[#allocation4 + $0x1d8] sm:$0xff]
    %v191 = vld [vmem:[#allocation4 + $0x1e0] sm:$0xff]
    %v192 = vld [vmem:[#allocation4 + $0x1e8] sm:$0xff]
    %v193 = vld [vmem:[#allocation4 + $0x1f0] sm:$0xff]
    %v194 = vld [vmem:[#allocation4 + $0x1f8] sm:$0xff]
    %v195 = vld [vmem:[%s3] sm:$0xf]
    %v197 = vperm.slane %v195, 0
    %v198 = vperm.slane %v195, 1
    %v199 = vperm.slane %v195, 2
    %v200 = vperm.slane %v195, 3
    %205 = vmatpush.msra.mxu0 %v191
    %206 = vmatpush.msra.mxu0 %v187
    %207 = vmatpush.msra.mxu0 %v183
    %208 = vmatpush.msra.mxu0 %v179
    %209 = vmatpush.msra.mxu0 %v175
    %210 = vmatpush.msra.mxu0 %v171
    %211 = vmatpush.msra.mxu0 %v167
    %212 = vmatpush.msra.mxu0 %v163
    %213 = vmatpush.msra.mxu0 %v159
    %214 = vmatpush.msra.mxu0 %v155
    %215 = vmatpush.msra.mxu0 %v151
    %216 = vmatpush.msra.mxu0 %v147
    %217 = vmatpush.msra.mxu0 %v143
    %218 = vmatpush.msra.mxu0 %v139
    %219 = vmatpush.msra.mxu0 %v135
    %220 = vmatpush.msra.mxu0 %v131
    %221 = vmatmul.f32.gmra.mxu0 %v123
    %v222 = vpop.f32.mrf.mxu0
    %v223 = vadd.f32 %v197, %v222
    %224 = vmatmul.f32.gmra.mxu0 %v124
    %v225 = vpop.f32.mrf.mxu0
    %v226 = vadd.f32 %v197, %v225
    %227 = vmatmul.f32.gmra.mxu0 %v125
    %v228 = vpop.f32.mrf.mxu0
    %v229 = vadd.f32 %v197, %v228
    %230 = vmatmul.f32.gmra.mxu0 %v126
    %v231 = vpop.f32.mrf.mxu0
    %v232 = vadd.f32 %v197, %v231
    %233 = vmatmul.f32.gmra.mxu0 %v127
    %v234 = vpop.f32.mrf.mxu0
    %v235 = vadd.f32 %v197, %v234
    %236 = vmatmul.f32.gmra.mxu0 %v128
    %v237 = vpop.f32.mrf.mxu0
    %v238 = vadd.f32 %v197, %v237
    %239 = vmatmul.f32.gmra.mxu0 %v129
    %v240 = vpop.f32.mrf.mxu0
    %v241 = vadd.f32 %v197, %v240
    %242 = vmatmul.f32.gmra.mxu0 %v130
    %v243 = vpop.f32.mrf.mxu0
    %v244 = vadd.f32 %v197, %v243
    %245 = vdwg.mxu0
    %246 = vmatpush.msra.mxu0 %v192
    %247 = vmatpush.msra.mxu0 %v188
    %248 = vmatpush.msra.mxu0 %v184
    %249 = vmatpush.msra.mxu0 %v180
    %250 = vmatpush.msra.mxu0 %v176
    %251 = vmatpush.msra.mxu0 %v172
    %252 = vmatpush.msra.mxu0 %v168
    %253 = vmatpush.msra.mxu0 %v164
    %254 = vmatpush.msra.mxu0 %v160
    %255 = vmatpush.msra.mxu0 %v156
    %256 = vmatpush.msra.mxu0 %v152
    %257 = vmatpush.msra.mxu0 %v148
    %258 = vmatpush.msra.mxu0 %v144
    %259 = vmatpush.msra.mxu0 %v140
    %260 = vmatpush.msra.mxu0 %v136
    %261 = vmatpush.msra.mxu0 %v132
    %262 = vmatmul.f32.gmra.mxu0 %v123
    %v263 = vpop.f32.mrf.mxu0
    %v264 = vadd.f32 %v198, %v263
    %265 = vmatmul.f32.gmra.mxu0 %v124
    %v266 = vpop.f32.mrf.mxu0
    %v267 = vadd.f32 %v198, %v266
    %268 = vmatmul.f32.gmra.mxu0 %v125
    %v269 = vpop.f32.mrf.mxu0
    %v270 = vadd.f32 %v198, %v269
    %271 = vmatmul.f32.gmra.mxu0 %v126
    %v272 = vpop.f32.mrf.mxu0
    %v273 = vadd.f32 %v198, %v272
    %274 = vmatmul.f32.gmra.mxu0 %v127
    %v275 = vpop.f32.mrf.mxu0
    %v276 = vadd.f32 %v198, %v275
    %277 = vmatmul.f32.gmra.mxu0 %v128
    %v278 = vpop.f32.mrf.mxu0
    %v279 = vadd.f32 %v198, %v278
    %280 = vmatmul.f32.gmra.mxu0 %v129
    %v281 = vpop.f32.mrf.mxu0
    %v282 = vadd.f32 %v198, %v281
    %283 = vmatmul.f32.gmra.mxu0 %v130
    %v284 = vpop.f32.mrf.mxu0
    %v285 = vadd.f32 %v198, %v284
    %286 = vdwg.mxu0
    %287 = vmatpush.msra.mxu0 %v193
    %288 = vmatpush.msra.mxu0 %v189
    %289 = vmatpush.msra.mxu0 %v185
    %290 = vmatpush.msra.mxu0 %v181
    %291 = vmatpush.msra.mxu0 %v177
    %292 = vmatpush.msra.mxu0 %v173
    %293 = vmatpush.msra.mxu0 %v169
    %294 = vmatpush.msra.mxu0 %v165
    %295 = vmatpush.msra.mxu0 %v161
    %296 = vmatpush.msra.mxu0 %v157
    %297 = vmatpush.msra.mxu0 %v153
    %298 = vmatpush.msra.mxu0 %v149
    %299 = vmatpush.msra.mxu0 %v145
    %300 = vmatpush.msra.mxu0 %v141
    %301 = vmatpush.msra.mxu0 %v137
    %302 = vmatpush.msra.mxu0 %v133
    %303 = vmatmul.f32.gmra.mxu0 %v123
    %v304 = vpop.f32.mrf.mxu0
    %v305 = vadd.f32 %v199, %v304
    %306 = vmatmul.f32.gmra.mxu0 %v124
    %v307 = vpop.f32.mrf.mxu0
    %v308 = vadd.f32 %v199, %v307
    %309 = vmatmul.f32.gmra.mxu0 %v125
    %v310 = vpop.f32.mrf.mxu0
    %v311 = vadd.f32 %v199, %v310
    %312 = vmatmul.f32.gmra.mxu0 %v126
    %v313 = vpop.f32.mrf.mxu0
    %v314 = vadd.f32 %v199, %v313
    %315 = vmatmul.f32.gmra.mxu0 %v127
    %v316 = vpop.f32.mrf.mxu0
    %v317 = vadd.f32 %v199, %v316
    %318 = vmatmul.f32.gmra.mxu0 %v128
    %v319 = vpop.f32.mrf.mxu0
    %v320 = vadd.f32 %v199, %v319
    %321 = vmatmul.f32.gmra.mxu0 %v129
    %v322 = vpop.f32.mrf.mxu0
    %v323 = vadd.f32 %v199, %v322
    %324 = vmatmul.f32.gmra.mxu0 %v130
    %v325 = vpop.f32.mrf.mxu0
    %v326 = vadd.f32 %v199, %v325
    %327 = vdwg.mxu0
    %328 = vmatpush.msra.mxu0 %v194
    %329 = vmatpush.msra.mxu0 %v190
    %330 = vmatpush.msra.mxu0 %v186
    %331 = vmatpush.msra.mxu0 %v182
    %332 = vmatpush.msra.mxu0 %v178
    %333 = vmatpush.msra.mxu0 %v174
    %334 = vmatpush.msra.mxu0 %v170
    %335 = vmatpush.msra.mxu0 %v166
    %336 = vmatpush.msra.mxu0 %v162
    %337 = vmatpush.msra.mxu0 %v158
    %338 = vmatpush.msra.mxu0 %v154
    %339 = vmatpush.msra.mxu0 %v150
    %340 = vmatpush.msra.mxu0 %v146
    %341 = vmatpush.msra.mxu0 %v142
    %342 = vmatpush.msra.mxu0 %v138
    %343 = vmatpush.msra.mxu0 %v134
    %344 = vmatmul.f32.gmra.mxu0 %v123
    %v345 = vpop.f32.mrf.mxu0
    %v346 = vadd.f32 %v200, %v345
    %347 = vmatmul.f32.gmra.mxu0 %v124
    %v348 = vpop.f32.mrf.mxu0
    %v349 = vadd.f32 %v200, %v348
    %350 = vmatmul.f32.gmra.mxu0 %v125
    %v351 = vpop.f32.mrf.mxu0
    %v352 = vadd.f32 %v200, %v351
    %353 = vmatmul.f32.gmra.mxu0 %v126
    %v354 = vpop.f32.mrf.mxu0
    %v355 = vadd.f32 %v200, %v354
    %356 = vmatmul.f32.gmra.mxu0 %v127
    %v357 = vpop.f32.mrf.mxu0
    %v358 = vadd.f32 %v200, %v357
    %359 = vmatmul.f32.gmra.mxu0 %v128
    %v360 = vpop.f32.mrf.mxu0
    %v361 = vadd.f32 %v200, %v360
    %362 = vmatmul.f32.gmra.mxu0 %v129
    %v363 = vpop.f32.mrf.mxu0
    %v364 = vadd.f32 %v200, %v363
    %365 = vmatmul.f32.gmra.mxu0 %v130
    %v366 = vpop.f32.mrf.mxu0
    %v367 = vadd.f32 %v200, %v366
    %368 = vdwg.mxu0
    %369 = vst [vmem:[#allocation3] sm:$0xff] %v223
    %370 = vst [vmem:[#allocation3 + $0x8] sm:$0xff] %v264
    %371 = vst [vmem:[#allocation3 + $0x10] sm:$0xff] %v305
    %372 = vst [vmem:[#allocation3 + $0x18] sm:$0xff] %v346
    %373 = vst [vmem:[#allocation3 + $0x20] sm:$0xff] %v226
    %374 = vst [vmem:[#allocation3 + $0x28] sm:$0xff] %v267
    %375 = vst [vmem:[#allocation3 + $0x30] sm:$0xff] %v308
    %376 = vst [vmem:[#allocation3 + $0x38] sm:$0xff] %v349
    %377 = vst [vmem:[#allocation3 + $0x40] sm:$0xff] %v229
    %378 = vst [vmem:[#allocation3 + $0x48] sm:$0xff] %v270
    %379 = vst [vmem:[#allocation3 + $0x50] sm:$0xff] %v311
    %380 = vst [vmem:[#allocation3 + $0x58] sm:$0xff] %v352
    %381 = vst [vmem:[#allocation3 + $0x60] sm:$0xff] %v232
    %382 = vst [vmem:[#allocation3 + $0x68] sm:$0xff] %v273
    %383 = vst [vmem:[#allocation3 + $0x70] sm:$0xff] %v314
    %384 = vst [vmem:[#allocation3 + $0x78] sm:$0xff] %v355
    %385 = vst [vmem:[#allocation3 + $0x80] sm:$0xff] %v235
    %386 = vst [vmem:[#allocation3 + $0x88] sm:$0xff] %v276
    %387 = vst [vmem:[#allocation3 + $0x90] sm:$0xff] %v317
    %388 = vst [vmem:[#allocation3 + $0x98] sm:$0xff] %v358
    %389 = vst [vmem:[#allocation3 + $0xa0] sm:$0xff] %v238
    %390 = vst [vmem:[#allocation3 + $0xa8] sm:$0xff] %v279
    %391 = vst [vmem:[#allocation3 + $0xb0] sm:$0xff] %v320
    %392 = vst [vmem:[#allocation3 + $0xb8] sm:$0xff] %v361
    %393 = vst [vmem:[#allocation3 + $0xc0] sm:$0xff] %v241
    %394 = vst [vmem:[#allocation3 + $0xc8] sm:$0xff] %v282
    %395 = vst [vmem:[#allocation3 + $0xd0] sm:$0xff] %v323
    %396 = vst [vmem:[#allocation3 + $0xd8] sm:$0xff] %v364
    %397 = vst [vmem:[#allocation3 + $0xe0] sm:$0xff] %v244
    %398 = vst [vmem:[#allocation3 + $0xe8] sm:$0xff] %v285
    %399 = vst [vmem:[#allocation3 + $0xf0] sm:$0xff] %v326
    %400 = vst [vmem:[#allocation3 + $0xf8] sm:$0xff] %v367
    %v401 = vld [vmem:[#allocation7] sm:$0xff]
    %v402 = vld [vmem:[#allocation7 + $0x8] sm:$0xff]
    %v403 = vld [vmem:[#allocation7 + $0x10] sm:$0xff]
    %v404 = vld [vmem:[#allocation7 + $0x18] sm:$0xff]
    %v405 = vld [vmem:[#allocation7 + $0x20] sm:$0xff]
    %v406 = vld [vmem:[#allocation7 + $0x28] sm:$0xff]
    %v407 = vld [vmem:[#allocation7 + $0x30] sm:$0xff]
    %v408 = vld [vmem:[#allocation7 + $0x38] sm:$0xff]
    %v409 = vld [vmem:[#allocation7 + $0x40] sm:$0xff]
    %v410 = vld [vmem:[#allocation7 + $0x48] sm:$0xff]
    %v411 = vld [vmem:[#allocation7 + $0x50] sm:$0xff]
    %v412 = vld [vmem:[#allocation7 + $0x58] sm:$0xff]
    %v413 = vld [vmem:[#allocation7 + $0x60] sm:$0xff]
    %v414 = vld [vmem:[#allocation7 + $0x68] sm:$0xff]
    %v415 = vld [vmem:[#allocation7 + $0x70] sm:$0xff]
    %v416 = vld [vmem:[#allocation7 + $0x78] sm:$0xff]
    %v417 = vld [vmem:[#allocation7 + $0x80] sm:$0xff]
    %v418 = vld [vmem:[#allocation7 + $0x88] sm:$0xff]
    %v419 = vld [vmem:[#allocation7 + $0x90] sm:$0xff]
    %v420 = vld [vmem:[#allocation7 + $0x98] sm:$0xff]
    %v421 = vld [vmem:[#allocation7 + $0xa0] sm:$0xff]
    %v422 = vld [vmem:[#allocation7 + $0xa8] sm:$0xff]
    %v423 = vld [vmem:[#allocation7 + $0xb0] sm:$0xff]
    %v424 = vld [vmem:[#allocation7 + $0xb8] sm:$0xff]
    %v425 = vld [vmem:[#allocation7 + $0xc0] sm:$0xff]
    %v426 = vld [vmem:[#allocation7 + $0xc8] sm:$0xff]
    %v427 = vld [vmem:[#allocation7 + $0xd0] sm:$0xff]
    %v428 = vld [vmem:[#allocation7 + $0xd8] sm:$0xff]
    %v429 = vld [vmem:[#allocation7 + $0xe0] sm:$0xff]
    %v430 = vld [vmem:[#allocation7 + $0xe8] sm:$0xff]
    %v431 = vld [vmem:[#allocation7 + $0xf0] sm:$0xff]
    %v432 = vld [vmem:[#allocation7 + $0xf8] sm:$0xff]
    %v433 = vld [vmem:[#allocation7 + $0x100] sm:$0xff]
    %v434 = vld [vmem:[#allocation7 + $0x108] sm:$0xff]
    %v435 = vld [vmem:[#allocation7 + $0x110] sm:$0xff]
    %v436 = vld [vmem:[#allocation7 + $0x118] sm:$0xff]
    %v437 = vld [vmem:[#allocation7 + $0x120] sm:$0xff]
    %v438 = vld [vmem:[#allocation7 + $0x128] sm:$0xff]
    %v439 = vld [vmem:[#allocation7 + $0x130] sm:$0xff]
    %v440 = vld [vmem:[#allocation7 + $0x138] sm:$0xff]
    %v441 = vld [vmem:[#allocation7 + $0x140] sm:$0xff]
    %v442 = vld [vmem:[#allocation7 + $0x148] sm:$0xff]
    %v443 = vld [vmem:[#allocation7 + $0x150] sm:$0xff]
    %v444 = vld [vmem:[#allocation7 + $0x158] sm:$0xff]
    %v445 = vld [vmem:[#allocation7 + $0x160] sm:$0xff]
    %v446 = vld [vmem:[#allocation7 + $0x168] sm:$0xff]
    %v447 = vld [vmem:[#allocation7 + $0x170] sm:$0xff]
    %v448 = vld [vmem:[#allocation7 + $0x178] sm:$0xff]
    %v449 = vld [vmem:[#allocation7 + $0x180] sm:$0xff]
    %v450 = vld [vmem:[#allocation7 + $0x188] sm:$0xff]
    %v451 = vld [vmem:[#allocation7 + $0x190] sm:$0xff]
    %v452 = vld [vmem:[#allocation7 + $0x198] sm:$0xff]
    %v453 = vld [vmem:[#allocation7 + $0x1a0] sm:$0xff]
    %v454 = vld [vmem:[#allocation7 + $0x1a8] sm:$0xff]
    %v455 = vld [vmem:[#allocation7 + $0x1b0] sm:$0xff]
    %v456 = vld [vmem:[#allocation7 + $0x1b8] sm:$0xff]
    %v457 = vld [vmem:[#allocation7 + $0x1c0] sm:$0xff]
    %v458 = vld [vmem:[#allocation7 + $0x1c8] sm:$0xff]
    %v459 = vld [vmem:[#allocation7 + $0x1d0] sm:$0xff]
    %v460 = vld [vmem:[#allocation7 + $0x1d8] sm:$0xff]
    %v461 = vld [vmem:[#allocation7 + $0x1e0] sm:$0xff]
    %v462 = vld [vmem:[#allocation7 + $0x1e8] sm:$0xff]
    %v463 = vld [vmem:[#allocation7 + $0x1f0] sm:$0xff]
    %v464 = vld [vmem:[#allocation7 + $0x1f8] sm:$0xff]
    %v465 = vld [vmem:[%s4] sm:$0xff]
    %v466 = vld [vmem:[%s5] sm:$0xff]
    %s467 = smul.u32 0, 4
    %s468 = smul.addr %s467, 8
    %s469 = scalar_lea.vmem [#allocation3], %s468
    %v470 = vld [vmem:[%s469] sm:$0xff]
    %v471 = vld [vmem:[%s469 + $0x8] sm:$0xff]
    %v472 = vld [vmem:[%s469 + $0x10] sm:$0xff]
    %v473 = vld [vmem:[%s469 + $0x18] sm:$0xff]
    %474 = vmatpush.msra.mxu0 %v461
    %475 = vmatpush.msra.mxu0 %v457
    %476 = vmatpush.msra.mxu0 %v453
    %477 = vmatpush.msra.mxu0 %v449
    %478 = vmatpush.msra.mxu0 %v445
    %479 = vmatpush.msra.mxu0 %v441
    %480 = vmatpush.msra.mxu0 %v437
    %481 = vmatpush.msra.mxu0 %v433
    %482 = vmatpush.msra.mxu0 %v429
    %483 = vmatpush.msra.mxu0 %v425
    %484 = vmatpush.msra.mxu0 %v421
    %485 = vmatpush.msra.mxu0 %v417
    %486 = vmatpush.msra.mxu0 %v413
    %487 = vmatpush.msra.mxu0 %v409
    %488 = vmatpush.msra.mxu0 %v405
    %489 = vmatpush.msra.mxu0 %v401
    %490 = vmatmul.f32.gmra.mxu0 %v465
    %v491 = vpop.f32.mrf.mxu0
    %v492 = vadd.f32 0.0, %v491
    %493 = vdwg.mxu0
    %494 = vmatpush.msra.mxu0 %v462
    %495 = vmatpush.msra.mxu0 %v458
    %496 = vmatpush.msra.mxu0 %v454
    %497 = vmatpush.msra.mxu0 %v450
    %498 = vmatpush.msra.mxu0 %v446
    %499 = vmatpush.msra.mxu0 %v442
    %500 = vmatpush.msra.mxu0 %v438
    %501 = vmatpush.msra.mxu0 %v434
    %502 = vmatpush.msra.mxu0 %v430
    %503 = vmatpush.msra.mxu0 %v426
    %504 = vmatpush.msra.mxu0 %v422
    %505 = vmatpush.msra.mxu0 %v418
    %506 = vmatpush.msra.mxu0 %v414
    %507 = vmatpush.msra.mxu0 %v410
    %508 = vmatpush.msra.mxu0 %v406
    %509 = vmatpush.msra.mxu0 %v402
    %510 = vmatmul.f32.gmra.mxu0 %v465
    %v511 = vpop.f32.mrf.mxu0
    %v512 = vadd.f32 0.0, %v511
    %513 = vdwg.mxu0
    %514 = vmatpush.msra.mxu0 %v463
    %515 = vmatpush.msra.mxu0 %v459
    %516 = vmatpush.msra.mxu0 %v455
    %517 = vmatpush.msra.mxu0 %v451
    %518 = vmatpush.msra.mxu0 %v447
    %519 = vmatpush.msra.mxu0 %v443
    %520 = vmatpush.msra.mxu0 %v439
    %521 = vmatpush.msra.mxu0 %v435
    %522 = vmatpush.msra.mxu0 %v431
    %523 = vmatpush.msra.mxu0 %v427
    %524 = vmatpush.msra.mxu0 %v423
    %525 = vmatpush.msra.mxu0 %v419
    %526 = vmatpush.msra.mxu0 %v415
    %527 = vmatpush.msra.mxu0 %v411
    %528 = vmatpush.msra.mxu0 %v407
    %529 = vmatpush.msra.mxu0 %v403
    %530 = vmatmul.f32.gmra.mxu0 %v465
    %v531 = vpop.f32.mrf.mxu0
    %v532 = vadd.f32 0.0, %v531
    %533 = vdwg.mxu0
    %534 = vmatpush.msra.mxu0 %v464
    %535 = vmatpush.msra.mxu0 %v460
    %536 = vmatpush.msra.mxu0 %v456
    %537 = vmatpush.msra.mxu0 %v452
    %538 = vmatpush.msra.mxu0 %v448
    %539 = vmatpush.msra.mxu0 %v444
    %540 = vmatpush.msra.mxu0 %v440
    %541 = vmatpush.msra.mxu0 %v436
    %542 = vmatpush.msra.mxu0 %v432
    %543 = vmatpush.msra.mxu0 %v428
    %544 = vmatpush.msra.mxu0 %v424
    %545 = vmatpush.msra.mxu0 %v420
    %546 = vmatpush.msra.mxu0 %v416
    %547 = vmatpush.msra.mxu0 %v412
    %548 = vmatpush.msra.mxu0 %v408
    %549 = vmatpush.msra.mxu0 %v404
    %550 = vmatmul.f32.gmra.mxu0 %v465
    %v551 = vpop.f32.mrf.mxu0
    %v552 = vadd.f32 0.0, %v551
    %553 = vdwg.mxu0
    %v554 = vadd.f32 %v470, %v492
    %v555 = vadd.f32 %v471, %v512
    %v556 = vadd.f32 %v472, %v532
    %v557 = vadd.f32 %v473, %v552
    %v558 = vxor.u32 %v554, 2147483648
    %v559 = vmul.f32 %v558, 1.442695
    %v560 = vpow.pop %v559
    %v561 = vadd.f32 %v560, 1.0
    %v562 = vrcp.pop %v561
    %v563 = vmul.f32 %v561, %v562
    %v564 = vsub.f32 1.0, %v563
    %v565 = vmul.f32 %v562, %v564
    %v566 = vadd.f32 %v562, %v565
    %vm567 = vweird.f32 %v561
    %vm568 = vweird.f32 %v562
    %vm569 = vmor %vm567, %vm568
    %v570 = vsel %vm569, %v562, %v566
    %v571 = vand.u32 2147483647, %v561
    %vm572 = vcmp.eq.f32.partialorder %v571, 8.507059e+37
    %v573 = vand.u32 %v561, 2147483648
    %v574 = vor.u32 1.1754944e-38, %v573
    %v575 = vsel %vm572, %v574, %v570
    %v576 = vmul.f32 1.0, %v575
    %v577 = vxor.u32 %v555, 2147483648
    %v578 = vmul.f32 %v577, 1.442695
    %v579 = vpow.pop %v578
    %v580 = vadd.f32 %v579, 1.0
    %v581 = vrcp.pop %v580
    %v582 = vmul.f32 %v580, %v581
    %v583 = vsub.f32 1.0, %v582
    %v584 = vmul.f32 %v581, %v583
    %v585 = vadd.f32 %v581, %v584
    %vm586 = vweird.f32 %v580
    %vm587 = vweird.f32 %v581
    %vm588 = vmor %vm586, %vm587
    %v589 = vsel %vm588, %v581, %v585
    %v590 = vand.u32 2147483647, %v580
    %vm591 = vcmp.eq.f32.partialorder %v590, 8.507059e+37
    %v592 = vand.u32 %v580, 2147483648
    %v593 = vor.u32 1.1754944e-38, %v592
    %v594 = vsel %vm591, %v593, %v589
    %v595 = vmul.f32 1.0, %v594
    %v596 = vtanh.pop %v556
    %v597 = vxor.u32 %v557, 2147483648
    %v598 = vmul.f32 %v597, 1.442695
    %v599 = vpow.pop %v598
    %v600 = vadd.f32 %v599, 1.0
    %v601 = vrcp.pop %v600
    %v602 = vmul.f32 %v600, %v601
    %v603 = vsub.f32 1.0, %v602
    %v604 = vmul.f32 %v601, %v603
    %v605 = vadd.f32 %v601, %v604
    %vm606 = vweird.f32 %v600
    %vm607 = vweird.f32 %v601
    %vm608 = vmor %vm606, %vm607
    %v609 = vsel %vm608, %v601, %v605
    %v610 = vand.u32 2147483647, %v600
    %vm611 = vcmp.eq.f32.partialorder %v610, 8.507059e+37
    %v612 = vand.u32 %v600, 2147483648
    %v613 = vor.u32 1.1754944e-38, %v612
    %v614 = vsel %vm611, %v613, %v609
    %v615 = vmul.f32 1.0, %v614
    %v616 = vmul.f32 %v595, %v466
    %v617 = vmul.f32 %v576, %v596
    %v618 = vadd.f32 %v616, %v617
    %v619 = vtanh.pop %v618
    %v620 = vmul.f32 %v615, %v619
    %621 = vst [vmem:[#allocation2] sm:$0xff] %v620
    %s622 = smul.u32 1, 4
    %s623 = smul.addr %s622, 8
    %s624 = scalar_lea.vmem [#allocation3], %s623
    %v625 = vld [vmem:[%s624] sm:$0xff]
    %v626 = vld [vmem:[%s624 + $0x8] sm:$0xff]
    %v627 = vld [vmem:[%s624 + $0x10] sm:$0xff]
    %v628 = vld [vmem:[%s624 + $0x18] sm:$0xff]
    %629 = vmatpush.msra.mxu0 %v461
    %630 = vmatpush.msra.mxu0 %v457
    %631 = vmatpush.msra.mxu0 %v453
    %632 = vmatpush.msra.mxu0 %v449
    %633 = vmatpush.msra.mxu0 %v445
    %634 = vmatpush.msra.mxu0 %v441
    %635 = vmatpush.msra.mxu0 %v437
    %636 = vmatpush.msra.mxu0 %v433
    %637 = vmatpush.msra.mxu0 %v429
    %638 = vmatpush.msra.mxu0 %v425
    %639 = vmatpush.msra.mxu0 %v421
    %640 = vmatpush.msra.mxu0 %v417
    %641 = vmatpush.msra.mxu0 %v413
    %642 = vmatpush.msra.mxu0 %v409
    %643 = vmatpush.msra.mxu0 %v405
    %644 = vmatpush.msra.mxu0 %v401
    %645 = vmatmul.f32.gmra.mxu0 %v620
    %v646 = vpop.f32.mrf.mxu0
    %v647 = vadd.f32 0.0, %v646
    %648 = vdwg.mxu0
    %649 = vmatpush.msra.mxu0 %v462
    %650 = vmatpush.msra.mxu0 %v458
    %651 = vmatpush.msra.mxu0 %v454
    %652 = vmatpush.msra.mxu0 %v450
    %653 = vmatpush.msra.mxu0 %v446
    %654 = vmatpush.msra.mxu0 %v442
    %655 = vmatpush.msra.mxu0 %v438
    %656 = vmatpush.msra.mxu0 %v434
    %657 = vmatpush.msra.mxu0 %v430
    %658 = vmatpush.msra.mxu0 %v426
    %659 = vmatpush.msra.mxu0 %v422
    %660 = vmatpush.msra.mxu0 %v418
    %661 = vmatpush.msra.mxu0 %v414
    %662 = vmatpush.msra.mxu0 %v410
    %663 = vmatpush.msra.mxu0 %v406
    %664 = vmatpush.msra.mxu0 %v402
    %665 = vmatmul.f32.gmra.mxu0 %v620
    %v666 = vpop.f32.mrf.mxu0
    %v667 = vadd.f32 0.0, %v666
    %668 = vdwg.mxu0
    %669 = vmatpush.msra.mxu0 %v463
    %670 = vmatpush.msra.mxu0 %v459
    %671 = vmatpush.msra.mxu0 %v455
    %672 = vmatpush.msra.mxu0 %v451
    %673 = vmatpush.msra.mxu0 %v447
    %674 = vmatpush.msra.mxu0 %v443
    %675 = vmatpush.msra.mxu0 %v439
    %676 = vmatpush.msra.mxu0 %v435
    %677 = vmatpush.msra.mxu0 %v431
    %678 = vmatpush.msra.mxu0 %v427
    %679 = vmatpush.msra.mxu0 %v423
    %680 = vmatpush.msra.mxu0 %v419
    %681 = vmatpush.msra.mxu0 %v415
    %682 = vmatpush.msra.mxu0 %v411
    %683 = vmatpush.msra.mxu0 %v407
    %684 = vmatpush.msra.mxu0 %v403
    %685 = vmatmul.f32.gmra.mxu0 %v620
    %v686 = vpop.f32.mrf.mxu0
    %v687 = vadd.f32 0.0, %v686
    %688 = vdwg.mxu0
    %689 = vmatpush.msra.mxu0 %v464
    %690 = vmatpush.msra.mxu0 %v460
    %691 = vmatpush.msra.mxu0 %v456
    %692 = vmatpush.msra.mxu0 %v452
    %693 = vmatpush.msra.mxu0 %v448
    %694 = vmatpush.msra.mxu0 %v444
    %695 = vmatpush.msra.mxu0 %v440
    %696 = vmatpush.msra.mxu0 %v436
    %697 = vmatpush.msra.mxu0 %v432
    %698 = vmatpush.msra.mxu0 %v428
    %699 = vmatpush.msra.mxu0 %v424
    %700 = vmatpush.msra.mxu0 %v420
    %701 = vmatpush.msra.mxu0 %v416
    %702 = vmatpush.msra.mxu0 %v412
    %703 = vmatpush.msra.mxu0 %v408
    %704 = vmatpush.msra.mxu0 %v404
    %705 = vmatmul.f32.gmra.mxu0 %v620
    %v706 = vpop.f32.mrf.mxu0
    %v707 = vadd.f32 0.0, %v706
    %708 = vdwg.mxu0
    %v709 = vadd.f32 %v625, %v647
    %v710 = vadd.f32 %v626, %v667
    %v711 = vadd.f32 %v627, %v687
    %v712 = vadd.f32 %v628, %v707
    %v713 = vxor.u32 %v709, 2147483648
    %v714 = vmul.f32 %v713, 1.442695
    %v715 = vpow.pop %v714
    %v716 = vadd.f32 %v715, 1.0
    %v717 = vrcp.pop %v716
    %v718 = vmul.f32 %v716, %v717
    %v719 = vsub.f32 1.0, %v718
    %v720 = vmul.f32 %v717, %v719
    %v721 = vadd.f32 %v717, %v720
    %vm722 = vweird.f32 %v716
    %vm723 = vweird.f32 %v717
    %vm724 = vmor %vm722, %vm723
    %v725 = vsel %vm724, %v717, %v721
    %v726 = vand.u32 2147483647, %v716
    %vm727 = vcmp.eq.f32.partialorder %v726, 8.507059e+37
    %v728 = vand.u32 %v716, 2147483648
    %v729 = vor.u32 1.1754944e-38, %v728
    %v730 = vsel %vm727, %v729, %v725
    %v731 = vmul.f32 1.0, %v730
    %v732 = vxor.u32 %v710, 2147483648
    %v733 = vmul.f32 %v732, 1.442695
    %v734 = vpow.pop %v733
    %v735 = vadd.f32 %v734, 1.0
    %v736 = vrcp.pop %v735
    %v737 = vmul.f32 %v735, %v736
    %v738 = vsub.f32 1.0, %v737
    %v739 = vmul.f32 %v736, %v738
    %v740 = vadd.f32 %v736, %v739
    %vm741 = vweird.f32 %v735
    %vm742 = vweird.f32 %v736
    %vm743 = vmor %vm741, %vm742
    %v744 = vsel %vm743, %v736, %v740
    %v745 = vand.u32 2147483647, %v735
    %vm746 = vcmp.eq.f32.partialorder %v745, 8.507059e+37
    %v747 = vand.u32 %v735, 2147483648
    %v748 = vor.u32 1.1754944e-38, %v747
    %v749 = vsel %vm746, %v748, %v744
    %v750 = vmul.f32 1.0, %v749
    %v751 = vtanh.pop %v711
    %v752 = vxor.u32 %v712, 2147483648
    %v753 = vmul.f32 %v752, 1.442695
    %v754 = vpow.pop %v753
    %v755 = vadd.f32 %v754, 1.0
    %v756 = vrcp.pop %v755
    %v757 = vmul.f32 %v755, %v756
    %v758 = vsub.f32 1.0, %v757
    %v759 = vmul.f32 %v756, %v758
    %v760 = vadd.f32 %v756, %v759
    %vm761 = vweird.f32 %v755
    %vm762 = vweird.f32 %v756
    %vm763 = vmor %vm761, %vm762
    %v764 = vsel %vm763, %v756, %v760
    %v765 = vand.u32 2147483647, %v755
    %vm766 = vcmp.eq.f32.partialorder %v765, 8.507059e+37
    %v767 = vand.u32 %v755, 2147483648
    %v768 = vor.u32 1.1754944e-38, %v767
    %v769 = vsel %vm766, %v768, %v764
    %v770 = vmul.f32 1.0, %v769
    %v771 = vmul.f32 %v750, %v618
    %v772 = vmul.f32 %v731, %v751
    %v773 = vadd.f32 %v771, %v772
    %v774 = vtanh.pop %v773
    %v775 = vmul.f32 %v770, %v774
    %s776 = scalar_lea.vmem [#allocation2], 8
    %777 = vst [vmem:[%s776] sm:$0xff] %v775
    %s778 = smul.u32 2, 4
    %s779 = smul.addr %s778, 8
    %s780 = scalar_lea.vmem [#allocation3], %s779
    %v781 = vld [vmem:[%s780] sm:$0xff]
    %v782 = vld [vmem:[%s780 + $0x8] sm:$0xff]
    %v783 = vld [vmem:[%s780 + $0x10] sm:$0xff]
    %v784 = vld [vmem:[%s780 + $0x18] sm:$0xff]
    %785 = vmatpush.msra.mxu0 %v461
    %786 = vmatpush.msra.mxu0 %v457
    %787 = vmatpush.msra.mxu0 %v453
    %788 = vmatpush.msra.mxu0 %v449
    %789 = vmatpush.msra.mxu0 %v445
    %790 = vmatpush.msra.mxu0 %v441
    %791 = vmatpush.msra.mxu0 %v437
    %792 = vmatpush.msra.mxu0 %v433
    %793 = vmatpush.msra.mxu0 %v429
    %794 = vmatpush.msra.mxu0 %v425
    %795 = vmatpush.msra.mxu0 %v421
    %796 = vmatpush.msra.mxu0 %v417
    %797 = vmatpush.msra.mxu0 %v413
    %798 = vmatpush.msra.mxu0 %v409
    %799 = vmatpush.msra.mxu0 %v405
    %800 = vmatpush.msra.mxu0 %v401
    %801 = vmatmul.f32.gmra.mxu0 %v775
    %v802 = vpop.f32.mrf.mxu0
    %v803 = vadd.f32 0.0, %v802
    %804 = vdwg.mxu0
    %805 = vmatpush.msra.mxu0 %v462
    %806 = vmatpush.msra.mxu0 %v458
    %807 = vmatpush.msra.mxu0 %v454
    %808 = vmatpush.msra.mxu0 %v450
    %809 = vmatpush.msra.mxu0 %v446
    %810 = vmatpush.msra.mxu0 %v442
    %811 = vmatpush.msra.mxu0 %v438
    %812 = vmatpush.msra.mxu0 %v434
    %813 = vmatpush.msra.mxu0 %v430
    %814 = vmatpush.msra.mxu0 %v426
    %815 = vmatpush.msra.mxu0 %v422
    %816 = vmatpush.msra.mxu0 %v418
    %817 = vmatpush.msra.mxu0 %v414
    %818 = vmatpush.msra.mxu0 %v410
    %819 = vmatpush.msra.mxu0 %v406
    %820 = vmatpush.msra.mxu0 %v402
    %821 = vmatmul.f32.gmra.mxu0 %v775
    %v822 = vpop.f32.mrf.mxu0
    %v823 = vadd.f32 0.0, %v822
    %824 = vdwg.mxu0
    %825 = vmatpush.msra.mxu0 %v463
    %826 = vmatpush.msra.mxu0 %v459
    %827 = vmatpush.msra.mxu0 %v455
    %828 = vmatpush.msra.mxu0 %v451
    %829 = vmatpush.msra.mxu0 %v447
    %830 = vmatpush.msra.mxu0 %v443
    %831 = vmatpush.msra.mxu0 %v439
    %832 = vmatpush.msra.mxu0 %v435
    %833 = vmatpush.msra.mxu0 %v431
    %834 = vmatpush.msra.mxu0 %v427
    %835 = vmatpush.msra.mxu0 %v423
    %836 = vmatpush.msra.mxu0 %v419
    %837 = vmatpush.msra.mxu0 %v415
    %838 = vmatpush.msra.mxu0 %v411
    %839 = vmatpush.msra.mxu0 %v407
    %840 = vmatpush.msra.mxu0 %v403
    %841 = vmatmul.f32.gmra.mxu0 %v775
    %v842 = vpop.f32.mrf.mxu0
    %v843 = vadd.f32 0.0, %v842
    %844 = vdwg.mxu0
    %845 = vmatpush.msra.mxu0 %v464
    %846 = vmatpush.msra.mxu0 %v460
    %847 = vmatpush.msra.mxu0 %v456
    %848 = vmatpush.msra.mxu0 %v452
    %849 = vmatpush.msra.mxu0 %v448
    %850 = vmatpush.msra.mxu0 %v444
    %851 = vmatpush.msra.mxu0 %v440
    %852 = vmatpush.msra.mxu0 %v436
    %853 = vmatpush.msra.mxu0 %v432
    %854 = vmatpush.msra.mxu0 %v428
    %855 = vmatpush.msra.mxu0 %v424
    %856 = vmatpush.msra.mxu0 %v420
    %857 = vmatpush.msra.mxu0 %v416
    %858 = vmatpush.msra.mxu0 %v412
    %859 = vmatpush.msra.mxu0 %v408
    %860 = vmatpush.msra.mxu0 %v404
    %861 = vmatmul.f32.gmra.mxu0 %v775
    %v862 = vpop.f32.mrf.mxu0
    %v863 = vadd.f32 0.0, %v862
    %864 = vdwg.mxu0
    %v865 = vadd.f32 %v781, %v803
    %v866 = vadd.f32 %v782, %v823
    %v867 = vadd.f32 %v783, %v843
    %v868 = vadd.f32 %v784, %v863
    %v869 = vxor.u32 %v865, 2147483648
    %v870 = vmul.f32 %v869, 1.442695
    %v871 = vpow.pop %v870
    %v872 = vadd.f32 %v871, 1.0
    %v873 = vrcp.pop %v872
    %v874 = vmul.f32 %v872, %v873
    %v875 = vsub.f32 1.0, %v874
    %v876 = vmul.f32 %v873, %v875
    %v877 = vadd.f32 %v873, %v876
    %vm878 = vweird.f32 %v872
    %vm879 = vweird.f32 %v873
    %vm880 = vmor %vm878, %vm879
    %v881 = vsel %vm880, %v873, %v877
    %v882 = vand.u32 2147483647, %v872
    %vm883 = vcmp.eq.f32.partialorder %v882, 8.507059e+37
    %v884 = vand.u32 %v872, 2147483648
    %v885 = vor.u32 1.1754944e-38, %v884
    %v886 = vsel %vm883, %v885, %v881
    %v887 = vmul.f32 1.0, %v886
    %v888 = vxor.u32 %v866, 2147483648
    %v889 = vmul.f32 %v888, 1.442695
    %v890 = vpow.pop %v889
    %v891 = vadd.f32 %v890, 1.0
    %v892 = vrcp.pop %v891
    %v893 = vmul.f32 %v891, %v892
    %v894 = vsub.f32 1.0, %v893
    %v895 = vmul.f32 %v892, %v894
    %v896 = vadd.f32 %v892, %v895
    %vm897 = vweird.f32 %v891
    %vm898 = vweird.f32 %v892
    %vm899 = vmor %vm897, %vm898
    %v900 = vsel %vm899, %v892, %v896
    %v901 = vand.u32 2147483647, %v891
    %vm902 = vcmp.eq.f32.partialorder %v901, 8.507059e+37
    %v903 = vand.u32 %v891, 2147483648
    %v904 = vor.u32 1.1754944e-38, %v903
    %v905 = vsel %vm902, %v904, %v900
    %v906 = vmul.f32 1.0, %v905
    %v907 = vtanh.pop %v867
    %v908 = vxor.u32 %v868, 2147483648
    %v909 = vmul.f32 %v908, 1.442695
    %v910 = vpow.pop %v909
    %v911 = vadd.f32 %v910, 1.0
    %v912 = vrcp.pop %v911
    %v913 = vmul.f32 %v911, %v912
    %v914 = vsub.f32 1.0, %v913
    %v915 = vmul.f32 %v912, %v914
    %v916 = vadd.f32 %v912, %v915
    %vm917 = vweird.f32 %v911
    %vm918 = vweird.f32 %v912
    %vm919 = vmor %vm917, %vm918
    %v920 = vsel %vm919, %v912, %v916
    %v921 = vand.u32 2147483647, %v911
    %vm922 = vcmp.eq.f32.partialorder %v921, 8.507059e+37
    %v923 = vand.u32 %v911, 2147483648
    %v924 = vor.u32 1.1754944e-38, %v923
    %v925 = vsel %vm922, %v924, %v920
    %v926 = vmul.f32 1.0, %v925
    %v927 = vmul.f32 %v906, %v773
    %v928 = vmul.f32 %v887, %v907
    %v929 = vadd.f32 %v927, %v928
    %v930 = vtanh.pop %v929
    %v931 = vmul.f32 %v926, %v930
    %s932 = scalar_lea.vmem [#allocation2], 16
    %933 = vst [vmem:[%s932] sm:$0xff] %v931
    %s934 = smul.u32 3, 4
    %s935 = smul.addr %s934, 8
    %s936 = scalar_lea.vmem [#allocation3], %s935
    %v937 = vld [vmem:[%s936] sm:$0xff]
    %v938 = vld [vmem:[%s936 + $0x8] sm:$0xff]
    %v939 = vld [vmem:[%s936 + $0x10] sm:$0xff]
    %v940 = vld [vmem:[%s936 + $0x18] sm:$0xff]
    %941 = vmatpush.msra.mxu0 %v461
    %942 = vmatpush.msra.mxu0 %v457
    %943 = vmatpush.msra.mxu0 %v453
    %944 = vmatpush.msra.mxu0 %v449
    %945 = vmatpush.msra.mxu0 %v445
    %946 = vmatpush.msra.mxu0 %v441
    %947 = vmatpush.msra.mxu0 %v437
    %948 = vmatpush.msra.mxu0 %v433
    %949 = vmatpush.msra.mxu0 %v429
    %950 = vmatpush.msra.mxu0 %v425
    %951 = vmatpush.msra.mxu0 %v421
    %952 = vmatpush.msra.mxu0 %v417
    %953 = vmatpush.msra.mxu0 %v413
    %954 = vmatpush.msra.mxu0 %v409
    %955 = vmatpush.msra.mxu0 %v405
    %956 = vmatpush.msra.mxu0 %v401
    %957 = vmatmul.f32.gmra.mxu0 %v931
    %v958 = vpop.f32.mrf.mxu0
    %v959 = vadd.f32 0.0, %v958
    %960 = vdwg.mxu0
    %961 = vmatpush.msra.mxu0 %v462
    %962 = vmatpush.msra.mxu0 %v458
    %963 = vmatpush.msra.mxu0 %v454
    %964 = vmatpush.msra.mxu0 %v450
    %965 = vmatpush.msra.mxu0 %v446
    %966 = vmatpush.msra.mxu0 %v442
    %967 = vmatpush.msra.mxu0 %v438
    %968 = vmatpush.msra.mxu0 %v434
    %969 = vmatpush.msra.mxu0 %v430
    %970 = vmatpush.msra.mxu0 %v426
    %971 = vmatpush.msra.mxu0 %v422
    %972 = vmatpush.msra.mxu0 %v418
    %973 = vmatpush.msra.mxu0 %v414
    %974 = vmatpush.msra.mxu0 %v410
    %975 = vmatpush.msra.mxu0 %v406
    %976 = vmatpush.msra.mxu0 %v402
    %977 = vmatmul.f32.gmra.mxu0 %v931
    %v978 = vpop.f32.mrf.mxu0
    %v979 = vadd.f32 0.0, %v978
    %980 = vdwg.mxu0
    %981 = vmatpush.msra.mxu0 %v463
    %982 = vmatpush.msra.mxu0 %v459
    %983 = vmatpush.msra.mxu0 %v455
    %984 = vmatpush.msra.mxu0 %v451
    %985 = vmatpush.msra.mxu0 %v447
    %986 = vmatpush.msra.mxu0 %v443
    %987 = vmatpush.msra.mxu0 %v439
    %988 = vmatpush.msra.mxu0 %v435
    %989 = vmatpush.msra.mxu0 %v431
    %990 = vmatpush.msra.mxu0 %v427
    %991 = vmatpush.msra.mxu0 %v423
    %992 = vmatpush.msra.mxu0 %v419
    %993 = vmatpush.msra.mxu0 %v415
    %994 = vmatpush.msra.mxu0 %v411
    %995 = vmatpush.msra.mxu0 %v407
    %996 = vmatpush.msra.mxu0 %v403
    %997 = vmatmul.f32.gmra.mxu0 %v931
    %v998 = vpop.f32.mrf.mxu0
    %v999 = vadd.f32 0.0, %v998
    %1000 = vdwg.mxu0
    %1001 = vmatpush.msra.mxu0 %v464
    %1002 = vmatpush.msra.mxu0 %v460
    %1003 = vmatpush.msra.mxu0 %v456
    %1004 = vmatpush.msra.mxu0 %v452
    %1005 = vmatpush.msra.mxu0 %v448
    %1006 = vmatpush.msra.mxu0 %v444
    %1007 = vmatpush.msra.mxu0 %v440
    %1008 = vmatpush.msra.mxu0 %v436
    %1009 = vmatpush.msra.mxu0 %v432
    %1010 = vmatpush.msra.mxu0 %v428
    %1011 = vmatpush.msra.mxu0 %v424
    %1012 = vmatpush.msra.mxu0 %v420
    %1013 = vmatpush.msra.mxu0 %v416
    %1014 = vmatpush.msra.mxu0 %v412
    %1015 = vmatpush.msra.mxu0 %v408
    %1016 = vmatpush.msra.mxu0 %v404
    %1017 = vmatmul.f32.gmra.mxu0 %v931
    %v1018 = vpop.f32.mrf.mxu0
    %v1019 = vadd.f32 0.0, %v1018
    %1020 = vdwg.mxu0
    %v1021 = vadd.f32 %v937, %v959
    %v1022 = vadd.f32 %v938, %v979
    %v1023 = vadd.f32 %v939, %v999
    %v1024 = vadd.f32 %v940, %v1019
    %v1025 = vxor.u32 %v1021, 2147483648
    %v1026 = vmul.f32 %v1025, 1.442695
    %v1027 = vpow.pop %v1026
    %v1028 = vadd.f32 %v1027, 1.0
    %v1029 = vrcp.pop %v1028
    %v1030 = vmul.f32 %v1028, %v1029
    %v1031 = vsub.f32 1.0, %v1030
    %v1032 = vmul.f32 %v1029, %v1031
    %v1033 = vadd.f32 %v1029, %v1032
    %vm1034 = vweird.f32 %v1028
    %vm1035 = vweird.f32 %v1029
    %vm1036 = vmor %vm1034, %vm1035
    %v1037 = vsel %vm1036, %v1029, %v1033
    %v1038 = vand.u32 2147483647, %v1028
    %vm1039 = vcmp.eq.f32.partialorder %v1038, 8.507059e+37
    %v1040 = vand.u32 %v1028, 2147483648
    %v1041 = vor.u32 1.1754944e-38, %v1040
    %v1042 = vsel %vm1039, %v1041, %v1037
    %v1043 = vmul.f32 1.0, %v1042
    %v1044 = vxor.u32 %v1022, 2147483648
    %v1045 = vmul.f32 %v1044, 1.442695
    %v1046 = vpow.pop %v1045
    %v1047 = vadd.f32 %v1046, 1.0
    %v1048 = vrcp.pop %v1047
    %v1049 = vmul.f32 %v1047, %v1048
    %v1050 = vsub.f32 1.0, %v1049
    %v1051 = vmul.f32 %v1048, %v1050
    %v1052 = vadd.f32 %v1048, %v1051
    %vm1053 = vweird.f32 %v1047
    %vm1054 = vweird.f32 %v1048
    %vm1055 = vmor %vm1053, %vm1054
    %v1056 = vsel %vm1055, %v1048, %v1052
    %v1057 = vand.u32 2147483647, %v1047
    %vm1058 = vcmp.eq.f32.partialorder %v1057, 8.507059e+37
    %v1059 = vand.u32 %v1047, 2147483648
    %v1060 = vor.u32 1.1754944e-38, %v1059
    %v1061 = vsel %vm1058, %v1060, %v1056
    %v1062 = vmul.f32 1.0, %v1061
    %v1063 = vtanh.pop %v1023
    %v1064 = vxor.u32 %v1024, 2147483648
    %v1065 = vmul.f32 %v1064, 1.442695
    %v1066 = vpow.pop %v1065
    %v1067 = vadd.f32 %v1066, 1.0
    %v1068 = vrcp.pop %v1067
    %v1069 = vmul.f32 %v1067, %v1068
    %v1070 = vsub.f32 1.0, %v1069
    %v1071 = vmul.f32 %v1068, %v1070
    %v1072 = vadd.f32 %v1068, %v1071
    %vm1073 = vweird.f32 %v1067
    %vm1074 = vweird.f32 %v1068
    %vm1075 = vmor %vm1073, %vm1074
    %v1076 = vsel %vm1075, %v1068, %v1072
    %v1077 = vand.u32 2147483647, %v1067
    %vm1078 = vcmp.eq.f32.partialorder %v1077, 8.507059e+37
    %v1079 = vand.u32 %v1067, 2147483648
    %v1080 = vor.u32 1.1754944e-38, %v1079
    %v1081 = vsel %vm1078, %v1080, %v1076
    %v1082 = vmul.f32 1.0, %v1081
    %v1083 = vmul.f32 %v1062, %v929
    %v1084 = vmul.f32 %v1043, %v1063
    %v1085 = vadd.f32 %v1083, %v1084
    %v1086 = vtanh.pop %v1085
    %v1087 = vmul.f32 %v1082, %v1086
    %s1088 = scalar_lea.vmem [#allocation2], 24
    %1089 = vst [vmem:[%s1088] sm:$0xff] %v1087
    %s1090 = smul.u32 4, 4
    %s1091 = smul.addr %s1090, 8
    %s1092 = scalar_lea.vmem [#allocation3], %s1091
    %v1093 = vld [vmem:[%s1092] sm:$0xff]
    %v1094 = vld [vmem:[%s1092 + $0x8] sm:$0xff]
    %v1095 = vld [vmem:[%s1092 + $0x10] sm:$0xff]
    %v1096 = vld [vmem:[%s1092 + $0x18] sm:$0xff]
    %1097 = vmatpush.msra.mxu0 %v461
    %1098 = vmatpush.msra.mxu0 %v457
    %1099 = vmatpush.msra.mxu0 %v453
    %1100 = vmatpush.msra.mxu0 %v449
    %1101 = vmatpush.msra.mxu0 %v445
    %1102 = vmatpush.msra.mxu0 %v441
    %1103 = vmatpush.msra.mxu0 %v437
    %1104 = vmatpush.msra.mxu0 %v433
    %1105 = vmatpush.msra.mxu0 %v429
    %1106 = vmatpush.msra.mxu0 %v425
    %1107 = vmatpush.msra.mxu0 %v421
    %1108 = vmatpush.msra.mxu0 %v417
    %1109 = vmatpush.msra.mxu0 %v413
    %1110 = vmatpush.msra.mxu0 %v409
    %1111 = vmatpush.msra.mxu0 %v405
    %1112 = vmatpush.msra.mxu0 %v401
    %1113 = vmatmul.f32.gmra.mxu0 %v1087
    %v1114 = vpop.f32.mrf.mxu0
    %v1115 = vadd.f32 0.0, %v1114
    %1116 = vdwg.mxu0
    %1117 = vmatpush.msra.mxu0 %v462
    %1118 = vmatpush.msra.mxu0 %v458
    %1119 = vmatpush.msra.mxu0 %v454
    %1120 = vmatpush.msra.mxu0 %v450
    %1121 = vmatpush.msra.mxu0 %v446
    %1122 = vmatpush.msra.mxu0 %v442
    %1123 = vmatpush.msra.mxu0 %v438
    %1124 = vmatpush.msra.mxu0 %v434
    %1125 = vmatpush.msra.mxu0 %v430
    %1126 = vmatpush.msra.mxu0 %v426
    %1127 = vmatpush.msra.mxu0 %v422
    %1128 = vmatpush.msra.mxu0 %v418
    %1129 = vmatpush.msra.mxu0 %v414
    %1130 = vmatpush.msra.mxu0 %v410
    %1131 = vmatpush.msra.mxu0 %v406
    %1132 = vmatpush.msra.mxu0 %v402
    %1133 = vmatmul.f32.gmra.mxu0 %v1087
    %v1134 = vpop.f32.mrf.mxu0
    %v1135 = vadd.f32 0.0, %v1134
    %1136 = vdwg.mxu0
    %1137 = vmatpush.msra.mxu0 %v463
    %1138 = vmatpush.msra.mxu0 %v459
    %1139 = vmatpush.msra.mxu0 %v455
    %1140 = vmatpush.msra.mxu0 %v451
    %1141 = vmatpush.msra.mxu0 %v447
    %1142 = vmatpush.msra.mxu0 %v443
    %1143 = vmatpush.msra.mxu0 %v439
    %1144 = vmatpush.msra.mxu0 %v435
    %1145 = vmatpush.msra.mxu0 %v431
    %1146 = vmatpush.msra.mxu0 %v427
    %1147 = vmatpush.msra.mxu0 %v423
    %1148 = vmatpush.msra.mxu0 %v419
    %1149 = vmatpush.msra.mxu0 %v415
    %1150 = vmatpush.msra.mxu0 %v411
    %1151 = vmatpush.msra.mxu0 %v407
    %1152 = vmatpush.msra.mxu0 %v403
    %1153 = vmatmul.f32.gmra.mxu0 %v1087
    %v1154 = vpop.f32.mrf.mxu0
    %v1155 = vadd.f32 0.0, %v1154
    %1156 = vdwg.mxu0
    %1157 = vmatpush.msra.mxu0 %v464
    %1158 = vmatpush.msra.mxu0 %v460
    %1159 = vmatpush.msra.mxu0 %v456
    %1160 = vmatpush.msra.mxu0 %v452
    %1161 = vmatpush.msra.mxu0 %v448
    %1162 = vmatpush.msra.mxu0 %v444
    %1163 = vmatpush.msra.mxu0 %v440
    %1164 = vmatpush.msra.mxu0 %v436
    %1165 = vmatpush.msra.mxu0 %v432
    %1166 = vmatpush.msra.mxu0 %v428
    %1167 = vmatpush.msra.mxu0 %v424
    %1168 = vmatpush.msra.mxu0 %v420
    %1169 = vmatpush.msra.mxu0 %v416
    %1170 = vmatpush.msra.mxu0 %v412
    %1171 = vmatpush.msra.mxu0 %v408
    %1172 = vmatpush.msra.mxu0 %v404
    %1173 = vmatmul.f32.gmra.mxu0 %v1087
    %v1174 = vpop.f32.mrf.mxu0
    %v1175 = vadd.f32 0.0, %v1174
    %1176 = vdwg.mxu0
    %v1177 = vadd.f32 %v1093, %v1115
    %v1178 = vadd.f32 %v1094, %v1135
    %v1179 = vadd.f32 %v1095, %v1155
    %v1180 = vadd.f32 %v1096, %v1175
    %v1181 = vxor.u32 %v1177, 2147483648
    %v1182 = vmul.f32 %v1181, 1.442695
    %v1183 = vpow.pop %v1182
    %v1184 = vadd.f32 %v1183, 1.0
    %v1185 = vrcp.pop %v1184
    %v1186 = vmul.f32 %v1184, %v1185
    %v1187 = vsub.f32 1.0, %v1186
    %v1188 = vmul.f32 %v1185, %v1187
    %v1189 = vadd.f32 %v1185, %v1188
    %vm1190 = vweird.f32 %v1184
    %vm1191 = vweird.f32 %v1185
    %vm1192 = vmor %vm1190, %vm1191
    %v1193 = vsel %vm1192, %v1185, %v1189
    %v1194 = vand.u32 2147483647, %v1184
    %vm1195 = vcmp.eq.f32.partialorder %v1194, 8.507059e+37
    %v1196 = vand.u32 %v1184, 2147483648
    %v1197 = vor.u32 1.1754944e-38, %v1196
    %v1198 = vsel %vm1195, %v1197, %v1193
    %v1199 = vmul.f32 1.0, %v1198
    %v1200 = vxor.u32 %v1178, 2147483648
    %v1201 = vmul.f32 %v1200, 1.442695
    %v1202 = vpow.pop %v1201
    %v1203 = vadd.f32 %v1202, 1.0
    %v1204 = vrcp.pop %v1203
    %v1205 = vmul.f32 %v1203, %v1204
    %v1206 = vsub.f32 1.0, %v1205
    %v1207 = vmul.f32 %v1204, %v1206
    %v1208 = vadd.f32 %v1204, %v1207
    %vm1209 = vweird.f32 %v1203
    %vm1210 = vweird.f32 %v1204
    %vm1211 = vmor %vm1209, %vm1210
    %v1212 = vsel %vm1211, %v1204, %v1208
    %v1213 = vand.u32 2147483647, %v1203
    %vm1214 = vcmp.eq.f32.partialorder %v1213, 8.507059e+37
    %v1215 = vand.u32 %v1203, 2147483648
    %v1216 = vor.u32 1.1754944e-38, %v1215
    %v1217 = vsel %vm1214, %v1216, %v1212
    %v1218 = vmul.f32 1.0, %v1217
    %v1219 = vtanh.pop %v1179
    %v1220 = vxor.u32 %v1180, 2147483648
    %v1221 = vmul.f32 %v1220, 1.442695
    %v1222 = vpow.pop %v1221
    %v1223 = vadd.f32 %v1222, 1.0
    %v1224 = vrcp.pop %v1223
    %v1225 = vmul.f32 %v1223, %v1224
    %v1226 = vsub.f32 1.0, %v1225
    %v1227 = vmul.f32 %v1224, %v1226
    %v1228 = vadd.f32 %v1224, %v1227
    %vm1229 = vweird.f32 %v1223
    %vm1230 = vweird.f32 %v1224
    %vm1231 = vmor %vm1229, %vm1230
    %v1232 = vsel %vm1231, %v1224, %v1228
    %v1233 = vand.u32 2147483647, %v1223
    %vm1234 = vcmp.eq.f32.partialorder %v1233, 8.507059e+37
    %v1235 = vand.u32 %v1223, 2147483648
    %v1236 = vor.u32 1.1754944e-38, %v1235
    %v1237 = vsel %vm1234, %v1236, %v1232
    %v1238 = vmul.f32 1.0, %v1237
    %v1239 = vmul.f32 %v1218, %v1085
    %v1240 = vmul.f32 %v1199, %v1219
    %v1241 = vadd.f32 %v1239, %v1240
    %v1242 = vtanh.pop %v1241
    %v1243 = vmul.f32 %v1238, %v1242
    %s1244 = scalar_lea.vmem [#allocation2], 32
    %1245 = vst [vmem:[%s1244] sm:$0xff] %v1243
    %s1246 = smul.u32 5, 4
    %s1247 = smul.addr %s1246, 8
    %s1248 = scalar_lea.vmem [#allocation3], %s1247
    %v1249 = vld [vmem:[%s1248] sm:$0xff]
    %v1250 = vld [vmem:[%s1248 + $0x8] sm:$0xff]
    %v1251 = vld [vmem:[%s1248 + $0x10] sm:$0xff]
    %v1252 = vld [vmem:[%s1248 + $0x18] sm:$0xff]
    %1253 = vmatpush.msra.mxu0 %v461
    %1254 = vmatpush.msra.mxu0 %v457
    %1255 = vmatpush.msra.mxu0 %v453
    %1256 = vmatpush.msra.mxu0 %v449
    %1257 = vmatpush.msra.mxu0 %v445
    %1258 = vmatpush.msra.mxu0 %v441
    %1259 = vmatpush.msra.mxu0 %v437
    %1260 = vmatpush.msra.mxu0 %v433
    %1261 = vmatpush.msra.mxu0 %v429
    %1262 = vmatpush.msra.mxu0 %v425
    %1263 = vmatpush.msra.mxu0 %v421
    %1264 = vmatpush.msra.mxu0 %v417
    %1265 = vmatpush.msra.mxu0 %v413
    %1266 = vmatpush.msra.mxu0 %v409
    %1267 = vmatpush.msra.mxu0 %v405
    %1268 = vmatpush.msra.mxu0 %v401
    %1269 = vmatmul.f32.gmra.mxu0 %v1243
    %v1270 = vpop.f32.mrf.mxu0
    %v1271 = vadd.f32 0.0, %v1270
    %1272 = vdwg.mxu0
    %1273 = vmatpush.msra.mxu0 %v462
    %1274 = vmatpush.msra.mxu0 %v458
    %1275 = vmatpush.msra.mxu0 %v454
    %1276 = vmatpush.msra.mxu0 %v450
    %1277 = vmatpush.msra.mxu0 %v446
    %1278 = vmatpush.msra.mxu0 %v442
    %1279 = vmatpush.msra.mxu0 %v438
    %1280 = vmatpush.msra.mxu0 %v434
    %1281 = vmatpush.msra.mxu0 %v430
    %1282 = vmatpush.msra.mxu0 %v426
    %1283 = vmatpush.msra.mxu0 %v422
    %1284 = vmatpush.msra.mxu0 %v418
    %1285 = vmatpush.msra.mxu0 %v414
    %1286 = vmatpush.msra.mxu0 %v410
    %1287 = vmatpush.msra.mxu0 %v406
    %1288 = vmatpush.msra.mxu0 %v402
    %1289 = vmatmul.f32.gmra.mxu0 %v1243
    %v1290 = vpop.f32.mrf.mxu0
    %v1291 = vadd.f32 0.0, %v1290
    %1292 = vdwg.mxu0
    %1293 = vmatpush.msra.mxu0 %v463
    %1294 = vmatpush.msra.mxu0 %v459
    %1295 = vmatpush.msra.mxu0 %v455
    %1296 = vmatpush.msra.mxu0 %v451
    %1297 = vmatpush.msra.mxu0 %v447
    %1298 = vmatpush.msra.mxu0 %v443
    %1299 = vmatpush.msra.mxu0 %v439
    %1300 = vmatpush.msra.mxu0 %v435
    %1301 = vmatpush.msra.mxu0 %v431
    %1302 = vmatpush.msra.mxu0 %v427
    %1303 = vmatpush.msra.mxu0 %v423
    %1304 = vmatpush.msra.mxu0 %v419
    %1305 = vmatpush.msra.mxu0 %v415
    %1306 = vmatpush.msra.mxu0 %v411
    %1307 = vmatpush.msra.mxu0 %v407
    %1308 = vmatpush.msra.mxu0 %v403
    %1309 = vmatmul.f32.gmra.mxu0 %v1243
    %v1310 = vpop.f32.mrf.mxu0
    %v1311 = vadd.f32 0.0, %v1310
    %1312 = vdwg.mxu0
    %1313 = vmatpush.msra.mxu0 %v464
    %1314 = vmatpush.msra.mxu0 %v460
    %1315 = vmatpush.msra.mxu0 %v456
    %1316 = vmatpush.msra.mxu0 %v452
    %1317 = vmatpush.msra.mxu0 %v448
    %1318 = vmatpush.msra.mxu0 %v444
    %1319 = vmatpush.msra.mxu0 %v440
    %1320 = vmatpush.msra.mxu0 %v436
    %1321 = vmatpush.msra.mxu0 %v432
    %1322 = vmatpush.msra.mxu0 %v428
    %1323 = vmatpush.msra.mxu0 %v424
    %1324 = vmatpush.msra.mxu0 %v420
    %1325 = vmatpush.msra.mxu0 %v416
    %1326 = vmatpush.msra.mxu0 %v412
    %1327 = vmatpush.msra.mxu0 %v408
    %1328 = vmatpush.msra.mxu0 %v404
    %1329 = vmatmul.f32.gmra.mxu0 %v1243
    %v1330 = vpop.f32.mrf.mxu0
    %v1331 = vadd.f32 0.0, %v1330
    %1332 = vdwg.mxu0
    %v1333 = vadd.f32 %v1249, %v1271
    %v1334 = vadd.f32 %v1250, %v1291
    %v1335 = vadd.f32 %v1251, %v1311
    %v1336 = vadd.f32 %v1252, %v1331
    %v1337 = vxor.u32 %v1333, 2147483648
    %v1338 = vmul.f32 %v1337, 1.442695
    %v1339 = vpow.pop %v1338
    %v1340 = vadd.f32 %v1339, 1.0
    %v1341 = vrcp.pop %v1340
    %v1342 = vmul.f32 %v1340, %v1341
    %v1343 = vsub.f32 1.0, %v1342
    %v1344 = vmul.f32 %v1341, %v1343
    %v1345 = vadd.f32 %v1341, %v1344
    %vm1346 = vweird.f32 %v1340
    %vm1347 = vweird.f32 %v1341
    %vm1348 = vmor %vm1346, %vm1347
    %v1349 = vsel %vm1348, %v1341, %v1345
    %v1350 = vand.u32 2147483647, %v1340
    %vm1351 = vcmp.eq.f32.partialorder %v1350, 8.507059e+37
    %v1352 = vand.u32 %v1340, 2147483648
    %v1353 = vor.u32 1.1754944e-38, %v1352
    %v1354 = vsel %vm1351, %v1353, %v1349
    %v1355 = vmul.f32 1.0, %v1354
    %v1356 = vxor.u32 %v1334, 2147483648
    %v1357 = vmul.f32 %v1356, 1.442695
    %v1358 = vpow.pop %v1357
    %v1359 = vadd.f32 %v1358, 1.0
    %v1360 = vrcp.pop %v1359
    %v1361 = vmul.f32 %v1359, %v1360
    %v1362 = vsub.f32 1.0, %v1361
    %v1363 = vmul.f32 %v1360, %v1362
    %v1364 = vadd.f32 %v1360, %v1363
    %vm1365 = vweird.f32 %v1359
    %vm1366 = vweird.f32 %v1360
    %vm1367 = vmor %vm1365, %vm1366
    %v1368 = vsel %vm1367, %v1360, %v1364
    %v1369 = vand.u32 2147483647, %v1359
    %vm1370 = vcmp.eq.f32.partialorder %v1369, 8.507059e+37
    %v1371 = vand.u32 %v1359, 2147483648
    %v1372 = vor.u32 1.1754944e-38, %v1371
    %v1373 = vsel %vm1370, %v1372, %v1368
    %v1374 = vmul.f32 1.0, %v1373
    %v1375 = vtanh.pop %v1335
    %v1376 = vxor.u32 %v1336, 2147483648
    %v1377 = vmul.f32 %v1376, 1.442695
    %v1378 = vpow.pop %v1377
    %v1379 = vadd.f32 %v1378, 1.0
    %v1380 = vrcp.pop %v1379
    %v1381 = vmul.f32 %v1379, %v1380
    %v1382 = vsub.f32 1.0, %v1381
    %v1383 = vmul.f32 %v1380, %v1382
    %v1384 = vadd.f32 %v1380, %v1383
    %vm1385 = vweird.f32 %v1379
    %vm1386 = vweird.f32 %v1380
    %vm1387 = vmor %vm1385, %vm1386
    %v1388 = vsel %vm1387, %v1380, %v1384
    %v1389 = vand.u32 2147483647, %v1379
    %vm1390 = vcmp.eq.f32.partialorder %v1389, 8.507059e+37
    %v1391 = vand.u32 %v1379, 2147483648
    %v1392 = vor.u32 1.1754944e-38, %v1391
    %v1393 = vsel %vm1390, %v1392, %v1388
    %v1394 = vmul.f32 1.0, %v1393
    %v1395 = vmul.f32 %v1374, %v1241
    %v1396 = vmul.f32 %v1355, %v1375
    %v1397 = vadd.f32 %v1395, %v1396
    %v1398 = vtanh.pop %v1397
    %v1399 = vmul.f32 %v1394, %v1398
    %s1400 = scalar_lea.vmem [#allocation2], 40
    %1401 = vst [vmem:[%s1400] sm:$0xff] %v1399
    %s1402 = smul.u32 6, 4
    %s1403 = smul.addr %s1402, 8
    %s1404 = scalar_lea.vmem [#allocation3], %s1403
    %v1405 = vld [vmem:[%s1404] sm:$0xff]
    %v1406 = vld [vmem:[%s1404 + $0x8] sm:$0xff]
    %v1407 = vld [vmem:[%s1404 + $0x10] sm:$0xff]
    %v1408 = vld [vmem:[%s1404 + $0x18] sm:$0xff]
    %1409 = vmatpush.msra.mxu0 %v461
    %1410 = vmatpush.msra.mxu0 %v457
    %1411 = vmatpush.msra.mxu0 %v453
    %1412 = vmatpush.msra.mxu0 %v449
    %1413 = vmatpush.msra.mxu0 %v445
    %1414 = vmatpush.msra.mxu0 %v441
    %1415 = vmatpush.msra.mxu0 %v437
    %1416 = vmatpush.msra.mxu0 %v433
    %1417 = vmatpush.msra.mxu0 %v429
    %1418 = vmatpush.msra.mxu0 %v425
    %1419 = vmatpush.msra.mxu0 %v421
    %1420 = vmatpush.msra.mxu0 %v417
    %1421 = vmatpush.msra.mxu0 %v413
    %1422 = vmatpush.msra.mxu0 %v409
    %1423 = vmatpush.msra.mxu0 %v405
    %1424 = vmatpush.msra.mxu0 %v401
    %1425 = vmatmul.f32.gmra.mxu0 %v1399
    %v1426 = vpop.f32.mrf.mxu0
    %v1427 = vadd.f32 0.0, %v1426
    %1428 = vdwg.mxu0
    %1429 = vmatpush.msra.mxu0 %v462
    %1430 = vmatpush.msra.mxu0 %v458
    %1431 = vmatpush.msra.mxu0 %v454
    %1432 = vmatpush.msra.mxu0 %v450
    %1433 = vmatpush.msra.mxu0 %v446
    %1434 = vmatpush.msra.mxu0 %v442
    %1435 = vmatpush.msra.mxu0 %v438
    %1436 = vmatpush.msra.mxu0 %v434
    %1437 = vmatpush.msra.mxu0 %v430
    %1438 = vmatpush.msra.mxu0 %v426
    %1439 = vmatpush.msra.mxu0 %v422
    %1440 = vmatpush.msra.mxu0 %v418
    %1441 = vmatpush.msra.mxu0 %v414
    %1442 = vmatpush.msra.mxu0 %v410
    %1443 = vmatpush.msra.mxu0 %v406
    %1444 = vmatpush.msra.mxu0 %v402
    %1445 = vmatmul.f32.gmra.mxu0 %v1399
    %v1446 = vpop.f32.mrf.mxu0
    %v1447 = vadd.f32 0.0, %v1446
    %1448 = vdwg.mxu0
    %1449 = vmatpush.msra.mxu0 %v463
    %1450 = vmatpush.msra.mxu0 %v459
    %1451 = vmatpush.msra.mxu0 %v455
    %1452 = vmatpush.msra.mxu0 %v451
    %1453 = vmatpush.msra.mxu0 %v447
    %1454 = vmatpush.msra.mxu0 %v443
    %1455 = vmatpush.msra.mxu0 %v439
    %1456 = vmatpush.msra.mxu0 %v435
    %1457 = vmatpush.msra.mxu0 %v431
    %1458 = vmatpush.msra.mxu0 %v427
    %1459 = vmatpush.msra.mxu0 %v423
    %1460 = vmatpush.msra.mxu0 %v419
    %1461 = vmatpush.msra.mxu0 %v415
    %1462 = vmatpush.msra.mxu0 %v411
    %1463 = vmatpush.msra.mxu0 %v407
    %1464 = vmatpush.msra.mxu0 %v403
    %1465 = vmatmul.f32.gmra.mxu0 %v1399
    %v1466 = vpop.f32.mrf.mxu0
    %v1467 = vadd.f32 0.0, %v1466
    %1468 = vdwg.mxu0
    %1469 = vmatpush.msra.mxu0 %v464
    %1470 = vmatpush.msra.mxu0 %v460
    %1471 = vmatpush.msra.mxu0 %v456
    %1472 = vmatpush.msra.mxu0 %v452
    %1473 = vmatpush.msra.mxu0 %v448
    %1474 = vmatpush.msra.mxu0 %v444
    %1475 = vmatpush.msra.mxu0 %v440
    %1476 = vmatpush.msra.mxu0 %v436
    %1477 = vmatpush.msra.mxu0 %v432
    %1478 = vmatpush.msra.mxu0 %v428
    %1479 = vmatpush.msra.mxu0 %v424
    %1480 = vmatpush.msra.mxu0 %v420
    %1481 = vmatpush.msra.mxu0 %v416
    %1482 = vmatpush.msra.mxu0 %v412
    %1483 = vmatpush.msra.mxu0 %v408
    %1484 = vmatpush.msra.mxu0 %v404
    %1485 = vmatmul.f32.gmra.mxu0 %v1399
    %v1486 = vpop.f32.mrf.mxu0
    %v1487 = vadd.f32 0.0, %v1486
    %1488 = vdwg.mxu0
    %v1489 = vadd.f32 %v1405, %v1427
    %v1490 = vadd.f32 %v1406, %v1447
    %v1491 = vadd.f32 %v1407, %v1467
    %v1492 = vadd.f32 %v1408, %v1487
    %v1493 = vxor.u32 %v1489, 2147483648
    %v1494 = vmul.f32 %v1493, 1.442695
    %v1495 = vpow.pop %v1494
    %v1496 = vadd.f32 %v1495, 1.0
    %v1497 = vrcp.pop %v1496
    %v1498 = vmul.f32 %v1496, %v1497
    %v1499 = vsub.f32 1.0, %v1498
    %v1500 = vmul.f32 %v1497, %v1499
    %v1501 = vadd.f32 %v1497, %v1500
    %vm1502 = vweird.f32 %v1496
    %vm1503 = vweird.f32 %v1497
    %vm1504 = vmor %vm1502, %vm1503
    %v1505 = vsel %vm1504, %v1497, %v1501
    %v1506 = vand.u32 2147483647, %v1496
    %vm1507 = vcmp.eq.f32.partialorder %v1506, 8.507059e+37
    %v1508 = vand.u32 %v1496, 2147483648
    %v1509 = vor.u32 1.1754944e-38, %v1508
    %v1510 = vsel %vm1507, %v1509, %v1505
    %v1511 = vmul.f32 1.0, %v1510
    %v1512 = vxor.u32 %v1490, 2147483648
    %v1513 = vmul.f32 %v1512, 1.442695
    %v1514 = vpow.pop %v1513
    %v1515 = vadd.f32 %v1514, 1.0
    %v1516 = vrcp.pop %v1515
    %v1517 = vmul.f32 %v1515, %v1516
    %v1518 = vsub.f32 1.0, %v1517
    %v1519 = vmul.f32 %v1516, %v1518
    %v1520 = vadd.f32 %v1516, %v1519
    %vm1521 = vweird.f32 %v1515
    %vm1522 = vweird.f32 %v1516
    %vm1523 = vmor %vm1521, %vm1522
    %v1524 = vsel %vm1523, %v1516, %v1520
    %v1525 = vand.u32 2147483647, %v1515
    %vm1526 = vcmp.eq.f32.partialorder %v1525, 8.507059e+37
    %v1527 = vand.u32 %v1515, 2147483648
    %v1528 = vor.u32 1.1754944e-38, %v1527
    %v1529 = vsel %vm1526, %v1528, %v1524
    %v1530 = vmul.f32 1.0, %v1529
    %v1531 = vtanh.pop %v1491
    %v1532 = vxor.u32 %v1492, 2147483648
    %v1533 = vmul.f32 %v1532, 1.442695
    %v1534 = vpow.pop %v1533
    %v1535 = vadd.f32 %v1534, 1.0
    %v1536 = vrcp.pop %v1535
    %v1537 = vmul.f32 %v1535, %v1536
    %v1538 = vsub.f32 1.0, %v1537
    %v1539 = vmul.f32 %v1536, %v1538
    %v1540 = vadd.f32 %v1536, %v1539
    %vm1541 = vweird.f32 %v1535
    %vm1542 = vweird.f32 %v1536
    %vm1543 = vmor %vm1541, %vm1542
    %v1544 = vsel %vm1543, %v1536, %v1540
    %v1545 = vand.u32 2147483647, %v1535
    %vm1546 = vcmp.eq.f32.partialorder %v1545, 8.507059e+37
    %v1547 = vand.u32 %v1535, 2147483648
    %v1548 = vor.u32 1.1754944e-38, %v1547
    %v1549 = vsel %vm1546, %v1548, %v1544
    %v1550 = vmul.f32 1.0, %v1549
    %v1551 = vmul.f32 %v1530, %v1397
    %v1552 = vmul.f32 %v1511, %v1531
    %v1553 = vadd.f32 %v1551, %v1552
    %v1554 = vtanh.pop %v1553
    %v1555 = vmul.f32 %v1550, %v1554
    %s1556 = scalar_lea.vmem [#allocation2], 48
    %1557 = vst [vmem:[%s1556] sm:$0xff] %v1555
    %s1558 = smul.u32 7, 4
    %s1559 = smul.addr %s1558, 8
    %s1560 = scalar_lea.vmem [#allocation3], %s1559
    %v1561 = vld [vmem:[%s1560] sm:$0xff]
    %v1562 = vld [vmem:[%s1560 + $0x8] sm:$0xff]
    %v1563 = vld [vmem:[%s1560 + $0x10] sm:$0xff]
    %v1564 = vld [vmem:[%s1560 + $0x18] sm:$0xff]
    %1565 = vmatpush.msra.mxu0 %v461
    %1566 = vmatpush.msra.mxu0 %v457
    %1567 = vmatpush.msra.mxu0 %v453
    %1568 = vmatpush.msra.mxu0 %v449
    %1569 = vmatpush.msra.mxu0 %v445
    %1570 = vmatpush.msra.mxu0 %v441
    %1571 = vmatpush.msra.mxu0 %v437
    %1572 = vmatpush.msra.mxu0 %v433
    %1573 = vmatpush.msra.mxu0 %v429
    %1574 = vmatpush.msra.mxu0 %v425
    %1575 = vmatpush.msra.mxu0 %v421
    %1576 = vmatpush.msra.mxu0 %v417
    %1577 = vmatpush.msra.mxu0 %v413
    %1578 = vmatpush.msra.mxu0 %v409
    %1579 = vmatpush.msra.mxu0 %v405
    %1580 = vmatpush.msra.mxu0 %v401
    %1581 = vmatmul.f32.gmra.mxu0 %v1555
    %v1582 = vpop.f32.mrf.mxu0
    %v1583 = vadd.f32 0.0, %v1582
    %1584 = vdwg.mxu0
    %1585 = vmatpush.msra.mxu0 %v462
    %1586 = vmatpush.msra.mxu0 %v458
    %1587 = vmatpush.msra.mxu0 %v454
    %1588 = vmatpush.msra.mxu0 %v450
    %1589 = vmatpush.msra.mxu0 %v446
    %1590 = vmatpush.msra.mxu0 %v442
    %1591 = vmatpush.msra.mxu0 %v438
    %1592 = vmatpush.msra.mxu0 %v434
    %1593 = vmatpush.msra.mxu0 %v430
    %1594 = vmatpush.msra.mxu0 %v426
    %1595 = vmatpush.msra.mxu0 %v422
    %1596 = vmatpush.msra.mxu0 %v418
    %1597 = vmatpush.msra.mxu0 %v414
    %1598 = vmatpush.msra.mxu0 %v410
    %1599 = vmatpush.msra.mxu0 %v406
    %1600 = vmatpush.msra.mxu0 %v402
    %1601 = vmatmul.f32.gmra.mxu0 %v1555
    %v1602 = vpop.f32.mrf.mxu0
    %v1603 = vadd.f32 0.0, %v1602
    %1604 = vdwg.mxu0
    %1605 = vmatpush.msra.mxu0 %v463
    %1606 = vmatpush.msra.mxu0 %v459
    %1607 = vmatpush.msra.mxu0 %v455
    %1608 = vmatpush.msra.mxu0 %v451
    %1609 = vmatpush.msra.mxu0 %v447
    %1610 = vmatpush.msra.mxu0 %v443
    %1611 = vmatpush.msra.mxu0 %v439
    %1612 = vmatpush.msra.mxu0 %v435
    %1613 = vmatpush.msra.mxu0 %v431
    %1614 = vmatpush.msra.mxu0 %v427
    %1615 = vmatpush.msra.mxu0 %v423
    %1616 = vmatpush.msra.mxu0 %v419
    %1617 = vmatpush.msra.mxu0 %v415
    %1618 = vmatpush.msra.mxu0 %v411
    %1619 = vmatpush.msra.mxu0 %v407
    %1620 = vmatpush.msra.mxu0 %v403
    %1621 = vmatmul.f32.gmra.mxu0 %v1555
    %v1622 = vpop.f32.mrf.mxu0
    %v1623 = vadd.f32 0.0, %v1622
    %1624 = vdwg.mxu0
    %1625 = vmatpush.msra.mxu0 %v464
    %1626 = vmatpush.msra.mxu0 %v460
    %1627 = vmatpush.msra.mxu0 %v456
    %1628 = vmatpush.msra.mxu0 %v452
    %1629 = vmatpush.msra.mxu0 %v448
    %1630 = vmatpush.msra.mxu0 %v444
    %1631 = vmatpush.msra.mxu0 %v440
    %1632 = vmatpush.msra.mxu0 %v436
    %1633 = vmatpush.msra.mxu0 %v432
    %1634 = vmatpush.msra.mxu0 %v428
    %1635 = vmatpush.msra.mxu0 %v424
    %1636 = vmatpush.msra.mxu0 %v420
    %1637 = vmatpush.msra.mxu0 %v416
    %1638 = vmatpush.msra.mxu0 %v412
    %1639 = vmatpush.msra.mxu0 %v408
    %1640 = vmatpush.msra.mxu0 %v404
    %1641 = vmatmul.f32.gmra.mxu0 %v1555
    %v1642 = vpop.f32.mrf.mxu0
    %v1643 = vadd.f32 0.0, %v1642
    %1644 = vdwg.mxu0
    %v1645 = vadd.f32 %v1561, %v1583
    %v1646 = vadd.f32 %v1562, %v1603
    %v1647 = vadd.f32 %v1563, %v1623
    %v1648 = vadd.f32 %v1564, %v1643
    %v1649 = vxor.u32 %v1645, 2147483648
    %v1650 = vmul.f32 %v1649, 1.442695
    %v1651 = vpow.pop %v1650
    %v1652 = vadd.f32 %v1651, 1.0
    %v1653 = vrcp.pop %v1652
    %v1654 = vmul.f32 %v1652, %v1653
    %v1655 = vsub.f32 1.0, %v1654
    %v1656 = vmul.f32 %v1653, %v1655
    %v1657 = vadd.f32 %v1653, %v1656
    %vm1658 = vweird.f32 %v1652
    %vm1659 = vweird.f32 %v1653
    %vm1660 = vmor %vm1658, %vm1659
    %v1661 = vsel %vm1660, %v1653, %v1657
    %v1662 = vand.u32 2147483647, %v1652
    %vm1663 = vcmp.eq.f32.partialorder %v1662, 8.507059e+37
    %v1664 = vand.u32 %v1652, 2147483648
    %v1665 = vor.u32 1.1754944e-38, %v1664
    %v1666 = vsel %vm1663, %v1665, %v1661
    %v1667 = vmul.f32 1.0, %v1666
    %v1668 = vxor.u32 %v1646, 2147483648
    %v1669 = vmul.f32 %v1668, 1.442695
    %v1670 = vpow.pop %v1669
    %v1671 = vadd.f32 %v1670, 1.0
    %v1672 = vrcp.pop %v1671
    %v1673 = vmul.f32 %v1671, %v1672
    %v1674 = vsub.f32 1.0, %v1673
    %v1675 = vmul.f32 %v1672, %v1674
    %v1676 = vadd.f32 %v1672, %v1675
    %vm1677 = vweird.f32 %v1671
    %vm1678 = vweird.f32 %v1672
    %vm1679 = vmor %vm1677, %vm1678
    %v1680 = vsel %vm1679, %v1672, %v1676
    %v1681 = vand.u32 2147483647, %v1671
    %vm1682 = vcmp.eq.f32.partialorder %v1681, 8.507059e+37
    %v1683 = vand.u32 %v1671, 2147483648
    %v1684 = vor.u32 1.1754944e-38, %v1683
    %v1685 = vsel %vm1682, %v1684, %v1680
    %v1686 = vmul.f32 1.0, %v1685
    %v1687 = vtanh.pop %v1647
    %v1688 = vxor.u32 %v1648, 2147483648
    %v1689 = vmul.f32 %v1688, 1.442695
    %v1690 = vpow.pop %v1689
    %v1691 = vadd.f32 %v1690, 1.0
    %v1692 = vrcp.pop %v1691
    %v1693 = vmul.f32 %v1691, %v1692
    %v1694 = vsub.f32 1.0, %v1693
    %v1695 = vmul.f32 %v1692, %v1694
    %v1696 = vadd.f32 %v1692, %v1695
    %vm1697 = vweird.f32 %v1691
    %vm1698 = vweird.f32 %v1692
    %vm1699 = vmor %vm1697, %vm1698
    %v1700 = vsel %vm1699, %v1692, %v1696
    %v1701 = vand.u32 2147483647, %v1691
    %vm1702 = vcmp.eq.f32.partialorder %v1701, 8.507059e+37
    %v1703 = vand.u32 %v1691, 2147483648
    %v1704 = vor.u32 1.1754944e-38, %v1703
    %v1705 = vsel %vm1702, %v1704, %v1700
    %v1706 = vmul.f32 1.0, %v1705
    %v1707 = vmul.f32 %v1686, %v1553
    %v1708 = vmul.f32 %v1667, %v1687
    %v1709 = vadd.f32 %v1707, %v1708
    %v1710 = vtanh.pop %v1709
    %v1711 = vmul.f32 %v1706, %v1710
    %s1712 = scalar_lea.vmem [#allocation2], 56
    %1713 = vst [vmem:[%s1712] sm:$0xff] %v1711
    %1714 = vst [vmem:[%s13] sm:$0xff] %v1711
    %1715 = vst [vmem:[%s14] sm:$0xff] %v1709
    %v1716 = vld [vmem:[#allocation2] sm:$0xff]
    %v1717 = vld [vmem:[#allocation2 + $0x8] sm:$0xff]
    %v1718 = vld [vmem:[#allocation2 + $0x10] sm:$0xff]
    %v1719 = vld [vmem:[#allocation2 + $0x18] sm:$0xff]
    %v1720 = vld [vmem:[#allocation2 + $0x20] sm:$0xff]
    %v1721 = vld [vmem:[#allocation2 + $0x28] sm:$0xff]
    %v1722 = vld [vmem:[#allocation2 + $0x30] sm:$0xff]
    %v1723 = vld [vmem:[#allocation2 + $0x38] sm:$0xff]
    %s1724 = scalar_lea.vmem [#allocation4], 512
    %v1725 = vld [vmem:[%s1724] sm:$0xff]
    %v1726 = vld [vmem:[%s1724 + $0x8] sm:$0xff]
    %v1727 = vld [vmem:[%s1724 + $0x10] sm:$0xff]
    %v1728 = vld [vmem:[%s1724 + $0x18] sm:$0xff]
    %v1729 = vld [vmem:[%s1724 + $0x20] sm:$0xff]
    %v1730 = vld [vmem:[%s1724 + $0x28] sm:$0xff]
    %v1731 = vld [vmem:[%s1724 + $0x30] sm:$0xff]
    %v1732 = vld [vmem:[%s1724 + $0x38] sm:$0xff]
    %v1733 = vld [vmem:[%s1724 + $0x40] sm:$0xff]
    %v1734 = vld [vmem:[%s1724 + $0x48] sm:$0xff]
    %v1735 = vld [vmem:[%s1724 + $0x50] sm:$0xff]
    %v1736 = vld [vmem:[%s1724 + $0x58] sm:$0xff]
    %v1737 = vld [vmem:[%s1724 + $0x60] sm:$0xff]
    %v1738 = vld [vmem:[%s1724 + $0x68] sm:$0xff]
    %v1739 = vld [vmem:[%s1724 + $0x70] sm:$0xff]
    %v1740 = vld [vmem:[%s1724 + $0x78] sm:$0xff]
    %v1741 = vld [vmem:[%s1724 + $0x80] sm:$0xff]
    %v1742 = vld [vmem:[%s1724 + $0x88] sm:$0xff]
    %v1743 = vld [vmem:[%s1724 + $0x90] sm:$0xff]
    %v1744 = vld [vmem:[%s1724 + $0x98] sm:$0xff]
    %v1745 = vld [vmem:[%s1724 + $0xa0] sm:$0xff]
    %v1746 = vld [vmem:[%s1724 + $0xa8] sm:$0xff]
    %v1747 = vld [vmem:[%s1724 + $0xb0] sm:$0xff]
    %v1748 = vld [vmem:[%s1724 + $0xb8] sm:$0xff]
    %v1749 = vld [vmem:[%s1724 + $0xc0] sm:$0xff]
    %v1750 = vld [vmem:[%s1724 + $0xc8] sm:$0xff]
    %v1751 = vld [vmem:[%s1724 + $0xd0] sm:$0xff]
    %v1752 = vld [vmem:[%s1724 + $0xd8] sm:$0xff]
    %v1753 = vld [vmem:[%s1724 + $0xe0] sm:$0xff]
    %v1754 = vld [vmem:[%s1724 + $0xe8] sm:$0xff]
    %v1755 = vld [vmem:[%s1724 + $0xf0] sm:$0xff]
    %v1756 = vld [vmem:[%s1724 + $0xf8] sm:$0xff]
    %v1757 = vld [vmem:[%s1724 + $0x100] sm:$0xff]
    %v1758 = vld [vmem:[%s1724 + $0x108] sm:$0xff]
    %v1759 = vld [vmem:[%s1724 + $0x110] sm:$0xff]
    %v1760 = vld [vmem:[%s1724 + $0x118] sm:$0xff]
    %v1761 = vld [vmem:[%s1724 + $0x120] sm:$0xff]
    %v1762 = vld [vmem:[%s1724 + $0x128] sm:$0xff]
    %v1763 = vld [vmem:[%s1724 + $0x130] sm:$0xff]
    %v1764 = vld [vmem:[%s1724 + $0x138] sm:$0xff]
    %v1765 = vld [vmem:[%s1724 + $0x140] sm:$0xff]
    %v1766 = vld [vmem:[%s1724 + $0x148] sm:$0xff]
    %v1767 = vld [vmem:[%s1724 + $0x150] sm:$0xff]
    %v1768 = vld [vmem:[%s1724 + $0x158] sm:$0xff]
    %v1769 = vld [vmem:[%s1724 + $0x160] sm:$0xff]
    %v1770 = vld [vmem:[%s1724 + $0x168] sm:$0xff]
    %v1771 = vld [vmem:[%s1724 + $0x170] sm:$0xff]
    %v1772 = vld [vmem:[%s1724 + $0x178] sm:$0xff]
    %v1773 = vld [vmem:[%s1724 + $0x180] sm:$0xff]
    %v1774 = vld [vmem:[%s1724 + $0x188] sm:$0xff]
    %v1775 = vld [vmem:[%s1724 + $0x190] sm:$0xff]
    %v1776 = vld [vmem:[%s1724 + $0x198] sm:$0xff]
    %v1777 = vld [vmem:[%s1724 + $0x1a0] sm:$0xff]
    %v1778 = vld [vmem:[%s1724 + $0x1a8] sm:$0xff]
    %v1779 = vld [vmem:[%s1724 + $0x1b0] sm:$0xff]
    %v1780 = vld [vmem:[%s1724 + $0x1b8] sm:$0xff]
    %v1781 = vld [vmem:[%s1724 + $0x1c0] sm:$0xff]
    %v1782 = vld [vmem:[%s1724 + $0x1c8] sm:$0xff]
    %v1783 = vld [vmem:[%s1724 + $0x1d0] sm:$0xff]
    %v1784 = vld [vmem:[%s1724 + $0x1d8] sm:$0xff]
    %v1785 = vld [vmem:[%s1724 + $0x1e0] sm:$0xff]
    %v1786 = vld [vmem:[%s1724 + $0x1e8] sm:$0xff]
    %v1787 = vld [vmem:[%s1724 + $0x1f0] sm:$0xff]
    %v1788 = vld [vmem:[%s1724 + $0x1f8] sm:$0xff]
    %s1789 = scalar_lea.vmem %s3, 4
    %v1790 = vld [vmem:[%s1789] sm:$0xf]
    %v1792 = vperm.slane %v1790, 0
    %v1793 = vperm.slane %v1790, 1
    %v1794 = vperm.slane %v1790, 2
    %v1795 = vperm.slane %v1790, 3
    %1800 = vmatpush.msra.mxu0 %v1785
    %1801 = vmatpush.msra.mxu0 %v1781
    %1802 = vmatpush.msra.mxu0 %v1777
    %1803 = vmatpush.msra.mxu0 %v1773
    %1804 = vmatpush.msra.mxu0 %v1769
    %1805 = vmatpush.msra.mxu0 %v1765
    %1806 = vmatpush.msra.mxu0 %v1761
    %1807 = vmatpush.msra.mxu0 %v1757
    %1808 = vmatpush.msra.mxu0 %v1753
    %1809 = vmatpush.msra.mxu0 %v1749
    %1810 = vmatpush.msra.mxu0 %v1745
    %1811 = vmatpush.msra.mxu0 %v1741
    %1812 = vmatpush.msra.mxu0 %v1737
    %1813 = vmatpush.msra.mxu0 %v1733
    %1814 = vmatpush.msra.mxu0 %v1729
    %1815 = vmatpush.msra.mxu0 %v1725
    %1816 = vmatmul.f32.gmra.mxu0 %v1716
    %v1817 = vpop.f32.mrf.mxu0
    %v1818 = vadd.f32 %v1792, %v1817
    %1819 = vmatmul.f32.gmra.mxu0 %v1717
    %v1820 = vpop.f32.mrf.mxu0
    %v1821 = vadd.f32 %v1792, %v1820
    %1822 = vmatmul.f32.gmra.mxu0 %v1718
    %v1823 = vpop.f32.mrf.mxu0
    %v1824 = vadd.f32 %v1792, %v1823
    %1825 = vmatmul.f32.gmra.mxu0 %v1719
    %v1826 = vpop.f32.mrf.mxu0
    %v1827 = vadd.f32 %v1792, %v1826
    %1828 = vmatmul.f32.gmra.mxu0 %v1720
    %v1829 = vpop.f32.mrf.mxu0
    %v1830 = vadd.f32 %v1792, %v1829
    %1831 = vmatmul.f32.gmra.mxu0 %v1721
    %v1832 = vpop.f32.mrf.mxu0
    %v1833 = vadd.f32 %v1792, %v1832
    %1834 = vmatmul.f32.gmra.mxu0 %v1722
    %v1835 = vpop.f32.mrf.mxu0
    %v1836 = vadd.f32 %v1792, %v1835
    %1837 = vmatmul.f32.gmra.mxu0 %v1723
    %v1838 = vpop.f32.mrf.mxu0
    %v1839 = vadd.f32 %v1792, %v1838
    %1840 = vdwg.mxu0
    %1841 = vmatpush.msra.mxu0 %v1786
    %1842 = vmatpush.msra.mxu0 %v1782
    %1843 = vmatpush.msra.mxu0 %v1778
    %1844 = vmatpush.msra.mxu0 %v1774
    %1845 = vmatpush.msra.mxu0 %v1770
    %1846 = vmatpush.msra.mxu0 %v1766
    %1847 = vmatpush.msra.mxu0 %v1762
    %1848 = vmatpush.msra.mxu0 %v1758
    %1849 = vmatpush.msra.mxu0 %v1754
    %1850 = vmatpush.msra.mxu0 %v1750
    %1851 = vmatpush.msra.mxu0 %v1746
    %1852 = vmatpush.msra.mxu0 %v1742
    %1853 = vmatpush.msra.mxu0 %v1738
    %1854 = vmatpush.msra.mxu0 %v1734
    %1855 = vmatpush.msra.mxu0 %v1730
    %1856 = vmatpush.msra.mxu0 %v1726
    %1857 = vmatmul.f32.gmra.mxu0 %v1716
    %v1858 = vpop.f32.mrf.mxu0
    %v1859 = vadd.f32 %v1793, %v1858
    %1860 = vmatmul.f32.gmra.mxu0 %v1717
    %v1861 = vpop.f32.mrf.mxu0
    %v1862 = vadd.f32 %v1793, %v1861
    %1863 = vmatmul.f32.gmra.mxu0 %v1718
    %v1864 = vpop.f32.mrf.mxu0
    %v1865 = vadd.f32 %v1793, %v1864
    %1866 = vmatmul.f32.gmra.mxu0 %v1719
    %v1867 = vpop.f32.mrf.mxu0
    %v1868 = vadd.f32 %v1793, %v1867
    %1869 = vmatmul.f32.gmra.mxu0 %v1720
    %v1870 = vpop.f32.mrf.mxu0
    %v1871 = vadd.f32 %v1793, %v1870
    %1872 = vmatmul.f32.gmra.mxu0 %v1721
    %v1873 = vpop.f32.mrf.mxu0
    %v1874 = vadd.f32 %v1793, %v1873
    %1875 = vmatmul.f32.gmra.mxu0 %v1722
    %v1876 = vpop.f32.mrf.mxu0
    %v1877 = vadd.f32 %v1793, %v1876
    %1878 = vmatmul.f32.gmra.mxu0 %v1723
    %v1879 = vpop.f32.mrf.mxu0
    %v1880 = vadd.f32 %v1793, %v1879
    %1881 = vdwg.mxu0
    %1882 = vmatpush.msra.mxu0 %v1787
    %1883 = vmatpush.msra.mxu0 %v1783
    %1884 = vmatpush.msra.mxu0 %v1779
    %1885 = vmatpush.msra.mxu0 %v1775
    %1886 = vmatpush.msra.mxu0 %v1771
    %1887 = vmatpush.msra.mxu0 %v1767
    %1888 = vmatpush.msra.mxu0 %v1763
    %1889 = vmatpush.msra.mxu0 %v1759
    %1890 = vmatpush.msra.mxu0 %v1755
    %1891 = vmatpush.msra.mxu0 %v1751
    %1892 = vmatpush.msra.mxu0 %v1747
    %1893 = vmatpush.msra.mxu0 %v1743
    %1894 = vmatpush.msra.mxu0 %v1739
    %1895 = vmatpush.msra.mxu0 %v1735
    %1896 = vmatpush.msra.mxu0 %v1731
    %1897 = vmatpush.msra.mxu0 %v1727
    %1898 = vmatmul.f32.gmra.mxu0 %v1716
    %v1899 = vpop.f32.mrf.mxu0
    %v1900 = vadd.f32 %v1794, %v1899
    %1901 = vmatmul.f32.gmra.mxu0 %v1717
    %v1902 = vpop.f32.mrf.mxu0
    %v1903 = vadd.f32 %v1794, %v1902
    %1904 = vmatmul.f32.gmra.mxu0 %v1718
    %v1905 = vpop.f32.mrf.mxu0
    %v1906 = vadd.f32 %v1794, %v1905
    %1907 = vmatmul.f32.gmra.mxu0 %v1719
    %v1908 = vpop.f32.mrf.mxu0
    %v1909 = vadd.f32 %v1794, %v1908
    %1910 = vmatmul.f32.gmra.mxu0 %v1720
    %v1911 = vpop.f32.mrf.mxu0
    %v1912 = vadd.f32 %v1794, %v1911
    %1913 = vmatmul.f32.gmra.mxu0 %v1721
    %v1914 = vpop.f32.mrf.mxu0
    %v1915 = vadd.f32 %v1794, %v1914
    %1916 = vmatmul.f32.gmra.mxu0 %v1722
    %v1917 = vpop.f32.mrf.mxu0
    %v1918 = vadd.f32 %v1794, %v1917
    %1919 = vmatmul.f32.gmra.mxu0 %v1723
    %v1920 = vpop.f32.mrf.mxu0
    %v1921 = vadd.f32 %v1794, %v1920
    %1922 = vdwg.mxu0
    %1923 = vmatpush.msra.mxu0 %v1788
    %1924 = vmatpush.msra.mxu0 %v1784
    %1925 = vmatpush.msra.mxu0 %v1780
    %1926 = vmatpush.msra.mxu0 %v1776
    %1927 = vmatpush.msra.mxu0 %v1772
    %1928 = vmatpush.msra.mxu0 %v1768
    %1929 = vmatpush.msra.mxu0 %v1764
    %1930 = vmatpush.msra.mxu0 %v1760
    %1931 = vmatpush.msra.mxu0 %v1756
    %1932 = vmatpush.msra.mxu0 %v1752
    %1933 = vmatpush.msra.mxu0 %v1748
    %1934 = vmatpush.msra.mxu0 %v1744
    %1935 = vmatpush.msra.mxu0 %v1740
    %1936 = vmatpush.msra.mxu0 %v1736
    %1937 = vmatpush.msra.mxu0 %v1732
    %1938 = vmatpush.msra.mxu0 %v1728
    %1939 = vmatmul.f32.gmra.mxu0 %v1716
    %v1940 = vpop.f32.mrf.mxu0
    %v1941 = vadd.f32 %v1795, %v1940
    %1942 = vmatmul.f32.gmra.mxu0 %v1717
    %v1943 = vpop.f32.mrf.mxu0
    %v1944 = vadd.f32 %v1795, %v1943
    %1945 = vmatmul.f32.gmra.mxu0 %v1718
    %v1946 = vpop.f32.mrf.mxu0
    %v1947 = vadd.f32 %v1795, %v1946
    %1948 = vmatmul.f32.gmra.mxu0 %v1719
    %v1949 = vpop.f32.mrf.mxu0
    %v1950 = vadd.f32 %v1795, %v1949
    %1951 = vmatmul.f32.gmra.mxu0 %v1720
    %v1952 = vpop.f32.mrf.mxu0
    %v1953 = vadd.f32 %v1795, %v1952
    %1954 = vmatmul.f32.gmra.mxu0 %v1721
    %v1955 = vpop.f32.mrf.mxu0
    %v1956 = vadd.f32 %v1795, %v1955
    %1957 = vmatmul.f32.gmra.mxu0 %v1722
    %v1958 = vpop.f32.mrf.mxu0
    %v1959 = vadd.f32 %v1795, %v1958
    %1960 = vmatmul.f32.gmra.mxu0 %v1723
    %v1961 = vpop.f32.mrf.mxu0
    %v1962 = vadd.f32 %v1795, %v1961
    %1963 = vdwg.mxu0
    %1964 = vst [vmem:[#allocation3] sm:$0xff] %v1818
    %1965 = vst [vmem:[#allocation3 + $0x8] sm:$0xff] %v1859
    %1966 = vst [vmem:[#allocation3 + $0x10] sm:$0xff] %v1900
    %1967 = vst [vmem:[#allocation3 + $0x18] sm:$0xff] %v1941
    %1968 = vst [vmem:[#allocation3 + $0x20] sm:$0xff] %v1821
    %1969 = vst [vmem:[#allocation3 + $0x28] sm:$0xff] %v1862
    %1970 = vst [vmem:[#allocation3 + $0x30] sm:$0xff] %v1903
    %1971 = vst [vmem:[#allocation3 + $0x38] sm:$0xff] %v1944
    %1972 = vst [vmem:[#allocation3 + $0x40] sm:$0xff] %v1824
    %1973 = vst [vmem:[#allocation3 + $0x48] sm:$0xff] %v1865
    %1974 = vst [vmem:[#allocation3 + $0x50] sm:$0xff] %v1906
    %1975 = vst [vmem:[#allocation3 + $0x58] sm:$0xff] %v1947
    %1976 = vst [vmem:[#allocation3 + $0x60] sm:$0xff] %v1827
    %1977 = vst [vmem:[#allocation3 + $0x68] sm:$0xff] %v1868
    %1978 = vst [vmem:[#allocation3 + $0x70] sm:$0xff] %v1909
    %1979 = vst [vmem:[#allocation3 + $0x78] sm:$0xff] %v1950
    %1980 = vst [vmem:[#allocation3 + $0x80] sm:$0xff] %v1830
    %1981 = vst [vmem:[#allocation3 + $0x88] sm:$0xff] %v1871
    %1982 = vst [vmem:[#allocation3 + $0x90] sm:$0xff] %v1912
    %1983 = vst [vmem:[#allocation3 + $0x98] sm:$0xff] %v1953
    %1984 = vst [vmem:[#allocation3 + $0xa0] sm:$0xff] %v1833
    %1985 = vst [vmem:[#allocation3 + $0xa8] sm:$0xff] %v1874
    %1986 = vst [vmem:[#allocation3 + $0xb0] sm:$0xff] %v1915
    %1987 = vst [vmem:[#allocation3 + $0xb8] sm:$0xff] %v1956
    %1988 = vst [vmem:[#allocation3 + $0xc0] sm:$0xff] %v1836
    %1989 = vst [vmem:[#allocation3 + $0xc8] sm:$0xff] %v1877
    %1990 = vst [vmem:[#allocation3 + $0xd0] sm:$0xff] %v1918
    %1991 = vst [vmem:[#allocation3 + $0xd8] sm:$0xff] %v1959
    %1992 = vst [vmem:[#allocation3 + $0xe0] sm:$0xff] %v1839
    %1993 = vst [vmem:[#allocation3 + $0xe8] sm:$0xff] %v1880
    %1994 = vst [vmem:[#allocation3 + $0xf0] sm:$0xff] %v1921
    %1995 = vst [vmem:[#allocation3 + $0xf8] sm:$0xff] %v1962
    %s1996 = scalar_lea.vmem [#allocation7], 512
    %v1997 = vld [vmem:[%s1996] sm:$0xff]
    %v1998 = vld [vmem:[%s1996 + $0x8] sm:$0xff]
    %v1999 = vld [vmem:[%s1996 + $0x10] sm:$0xff]
    %v2000 = vld [vmem:[%s1996 + $0x18] sm:$0xff]
    %v2001 = vld [vmem:[%s1996 + $0x20] sm:$0xff]
    %v2002 = vld [vmem:[%s1996 + $0x28] sm:$0xff]
    %v2003 = vld [vmem:[%s1996 + $0x30] sm:$0xff]
    %v2004 = vld [vmem:[%s1996 + $0x38] sm:$0xff]
    %v2005 = vld [vmem:[%s1996 + $0x40] sm:$0xff]
    %v2006 = vld [vmem:[%s1996 + $0x48] sm:$0xff]
    %v2007 = vld [vmem:[%s1996 + $0x50] sm:$0xff]
    %v2008 = vld [vmem:[%s1996 + $0x58] sm:$0xff]
    %v2009 = vld [vmem:[%s1996 + $0x60] sm:$0xff]
    %v2010 = vld [vmem:[%s1996 + $0x68] sm:$0xff]
    %v2011 = vld [vmem:[%s1996 + $0x70] sm:$0xff]
    %v2012 = vld [vmem:[%s1996 + $0x78] sm:$0xff]
    %v2013 = vld [vmem:[%s1996 + $0x80] sm:$0xff]
    %v2014 = vld [vmem:[%s1996 + $0x88] sm:$0xff]
    %v2015 = vld [vmem:[%s1996 + $0x90] sm:$0xff]
    %v2016 = vld [vmem:[%s1996 + $0x98] sm:$0xff]
    %v2017 = vld [vmem:[%s1996 + $0xa0] sm:$0xff]
    %v2018 = vld [vmem:[%s1996 + $0xa8] sm:$0xff]
    %v2019 = vld [vmem:[%s1996 + $0xb0] sm:$0xff]
    %v2020 = vld [vmem:[%s1996 + $0xb8] sm:$0xff]
    %v2021 = vld [vmem:[%s1996 + $0xc0] sm:$0xff]
    %v2022 = vld [vmem:[%s1996 + $0xc8] sm:$0xff]
    %v2023 = vld [vmem:[%s1996 + $0xd0] sm:$0xff]
    %v2024 = vld [vmem:[%s1996 + $0xd8] sm:$0xff]
    %v2025 = vld [vmem:[%s1996 + $0xe0] sm:$0xff]
    %v2026 = vld [vmem:[%s1996 + $0xe8] sm:$0xff]
    %v2027 = vld [vmem:[%s1996 + $0xf0] sm:$0xff]
    %v2028 = vld [vmem:[%s1996 + $0xf8] sm:$0xff]
    %v2029 = vld [vmem:[%s1996 + $0x100] sm:$0xff]
    %v2030 = vld [vmem:[%s1996 + $0x108] sm:$0xff]
    %v2031 = vld [vmem:[%s1996 + $0x110] sm:$0xff]
    %v2032 = vld [vmem:[%s1996 + $0x118] sm:$0xff]
    %v2033 = vld [vmem:[%s1996 + $0x120] sm:$0xff]
    %v2034 = vld [vmem:[%s1996 + $0x128] sm:$0xff]
    %v2035 = vld [vmem:[%s1996 + $0x130] sm:$0xff]
    %v2036 = vld [vmem:[%s1996 + $0x138] sm:$0xff]
    %v2037 = vld [vmem:[%s1996 + $0x140] sm:$0xff]
    %v2038 = vld [vmem:[%s1996 + $0x148] sm:$0xff]
    %v2039 = vld [vmem:[%s1996 + $0x150] sm:$0xff]
    %v2040 = vld [vmem:[%s1996 + $0x158] sm:$0xff]
    %v2041 = vld [vmem:[%s1996 + $0x160] sm:$0xff]
    %v2042 = vld [vmem:[%s1996 + $0x168] sm:$0xff]
    %v2043 = vld [vmem:[%s1996 + $0x170] sm:$0xff]
    %v2044 = vld [vmem:[%s1996 + $0x178] sm:$0xff]
    %v2045 = vld [vmem:[%s1996 + $0x180] sm:$0xff]
    %v2046 = vld [vmem:[%s1996 + $0x188] sm:$0xff]
    %v2047 = vld [vmem:[%s1996 + $0x190] sm:$0xff]
    %v2048 = vld [vmem:[%s1996 + $0x198] sm:$0xff]
    %v2049 = vld [vmem:[%s1996 + $0x1a0] sm:$0xff]
    %v2050 = vld [vmem:[%s1996 + $0x1a8] sm:$0xff]
    %v2051 = vld [vmem:[%s1996 + $0x1b0] sm:$0xff]
    %v2052 = vld [vmem:[%s1996 + $0x1b8] sm:$0xff]
    %v2053 = vld [vmem:[%s1996 + $0x1c0] sm:$0xff]
    %v2054 = vld [vmem:[%s1996 + $0x1c8] sm:$0xff]
    %v2055 = vld [vmem:[%s1996 + $0x1d0] sm:$0xff]
    %v2056 = vld [vmem:[%s1996 + $0x1d8] sm:$0xff]
    %v2057 = vld [vmem:[%s1996 + $0x1e0] sm:$0xff]
    %v2058 = vld [vmem:[%s1996 + $0x1e8] sm:$0xff]
    %v2059 = vld [vmem:[%s1996 + $0x1f0] sm:$0xff]
    %v2060 = vld [vmem:[%s1996 + $0x1f8] sm:$0xff]
    %s2061 = scalar_lea.vmem %s4, 8
    %v2062 = vld [vmem:[%s2061] sm:$0xff]
    %s2063 = scalar_lea.vmem %s5, 8
    %v2064 = vld [vmem:[%s2063] sm:$0xff]
    %v2065 = vld [vmem:[%s469] sm:$0xff]
    %v2066 = vld [vmem:[%s469 + $0x8] sm:$0xff]
    %v2067 = vld [vmem:[%s469 + $0x10] sm:$0xff]
    %v2068 = vld [vmem:[%s469 + $0x18] sm:$0xff]
    %2069 = vmatpush.msra.mxu0 %v2057
    %2070 = vmatpush.msra.mxu0 %v2053
    %2071 = vmatpush.msra.mxu0 %v2049
    %2072 = vmatpush.msra.mxu0 %v2045
    %2073 = vmatpush.msra.mxu0 %v2041
    %2074 = vmatpush.msra.mxu0 %v2037
    %2075 = vmatpush.msra.mxu0 %v2033
    %2076 = vmatpush.msra.mxu0 %v2029
    %2077 = vmatpush.msra.mxu0 %v2025
    %2078 = vmatpush.msra.mxu0 %v2021
    %2079 = vmatpush.msra.mxu0 %v2017
    %2080 = vmatpush.msra.mxu0 %v2013
    %2081 = vmatpush.msra.mxu0 %v2009
    %2082 = vmatpush.msra.mxu0 %v2005
    %2083 = vmatpush.msra.mxu0 %v2001
    %2084 = vmatpush.msra.mxu0 %v1997
    %2085 = vmatmul.f32.gmra.mxu0 %v2062
    %v2086 = vpop.f32.mrf.mxu0
    %v2087 = vadd.f32 0.0, %v2086
    %2088 = vdwg.mxu0
    %2089 = vmatpush.msra.mxu0 %v2058
    %2090 = vmatpush.msra.mxu0 %v2054
    %2091 = vmatpush.msra.mxu0 %v2050
    %2092 = vmatpush.msra.mxu0 %v2046
    %2093 = vmatpush.msra.mxu0 %v2042
    %2094 = vmatpush.msra.mxu0 %v2038
    %2095 = vmatpush.msra.mxu0 %v2034
    %2096 = vmatpush.msra.mxu0 %v2030
    %2097 = vmatpush.msra.mxu0 %v2026
    %2098 = vmatpush.msra.mxu0 %v2022
    %2099 = vmatpush.msra.mxu0 %v2018
    %2100 = vmatpush.msra.mxu0 %v2014
    %2101 = vmatpush.msra.mxu0 %v2010
    %2102 = vmatpush.msra.mxu0 %v2006
    %2103 = vmatpush.msra.mxu0 %v2002
    %2104 = vmatpush.msra.mxu0 %v1998
    %2105 = vmatmul.f32.gmra.mxu0 %v2062
    %v2106 = vpop.f32.mrf.mxu0
    %v2107 = vadd.f32 0.0, %v2106
    %2108 = vdwg.mxu0
    %2109 = vmatpush.msra.mxu0 %v2059
    %2110 = vmatpush.msra.mxu0 %v2055
    %2111 = vmatpush.msra.mxu0 %v2051
    %2112 = vmatpush.msra.mxu0 %v2047
    %2113 = vmatpush.msra.mxu0 %v2043
    %2114 = vmatpush.msra.mxu0 %v2039
    %2115 = vmatpush.msra.mxu0 %v2035
    %2116 = vmatpush.msra.mxu0 %v2031
    %2117 = vmatpush.msra.mxu0 %v2027
    %2118 = vmatpush.msra.mxu0 %v2023
    %2119 = vmatpush.msra.mxu0 %v2019
    %2120 = vmatpush.msra.mxu0 %v2015
    %2121 = vmatpush.msra.mxu0 %v2011
    %2122 = vmatpush.msra.mxu0 %v2007
    %2123 = vmatpush.msra.mxu0 %v2003
    %2124 = vmatpush.msra.mxu0 %v1999
    %2125 = vmatmul.f32.gmra.mxu0 %v2062
    %v2126 = vpop.f32.mrf.mxu0
    %v2127 = vadd.f32 0.0, %v2126
    %2128 = vdwg.mxu0
    %2129 = vmatpush.msra.mxu0 %v2060
    %2130 = vmatpush.msra.mxu0 %v2056
    %2131 = vmatpush.msra.mxu0 %v2052
    %2132 = vmatpush.msra.mxu0 %v2048
    %2133 = vmatpush.msra.mxu0 %v2044
    %2134 = vmatpush.msra.mxu0 %v2040
    %2135 = vmatpush.msra.mxu0 %v2036
    %2136 = vmatpush.msra.mxu0 %v2032
    %2137 = vmatpush.msra.mxu0 %v2028
    %2138 = vmatpush.msra.mxu0 %v2024
    %2139 = vmatpush.msra.mxu0 %v2020
    %2140 = vmatpush.msra.mxu0 %v2016
    %2141 = vmatpush.msra.mxu0 %v2012
    %2142 = vmatpush.msra.mxu0 %v2008
    %2143 = vmatpush.msra.mxu0 %v2004
    %2144 = vmatpush.msra.mxu0 %v2000
    %2145 = vmatmul.f32.gmra.mxu0 %v2062
    %v2146 = vpop.f32.mrf.mxu0
    %v2147 = vadd.f32 0.0, %v2146
    %2148 = vdwg.mxu0
    %v2149 = vadd.f32 %v2065, %v2087
    %v2150 = vadd.f32 %v2066, %v2107
    %v2151 = vadd.f32 %v2067, %v2127
    %v2152 = vadd.f32 %v2068, %v2147
    %v2153 = vxor.u32 %v2149, 2147483648
    %v2154 = vmul.f32 %v2153, 1.442695
    %v2155 = vpow.pop %v2154
    %v2156 = vadd.f32 %v2155, 1.0
    %v2157 = vrcp.pop %v2156
    %v2158 = vmul.f32 %v2156, %v2157
    %v2159 = vsub.f32 1.0, %v2158
    %v2160 = vmul.f32 %v2157, %v2159
    %v2161 = vadd.f32 %v2157, %v2160
    %vm2162 = vweird.f32 %v2156
    %vm2163 = vweird.f32 %v2157
    %vm2164 = vmor %vm2162, %vm2163
    %v2165 = vsel %vm2164, %v2157, %v2161
    %v2166 = vand.u32 2147483647, %v2156
    %vm2167 = vcmp.eq.f32.partialorder %v2166, 8.507059e+37
    %v2168 = vand.u32 %v2156, 2147483648
    %v2169 = vor.u32 1.1754944e-38, %v2168
    %v2170 = vsel %vm2167, %v2169, %v2165
    %v2171 = vmul.f32 1.0, %v2170
    %v2172 = vxor.u32 %v2150, 2147483648
    %v2173 = vmul.f32 %v2172, 1.442695
    %v2174 = vpow.pop %v2173
    %v2175 = vadd.f32 %v2174, 1.0
    %v2176 = vrcp.pop %v2175
    %v2177 = vmul.f32 %v2175, %v2176
    %v2178 = vsub.f32 1.0, %v2177
    %v2179 = vmul.f32 %v2176, %v2178
    %v2180 = vadd.f32 %v2176, %v2179
    %vm2181 = vweird.f32 %v2175
    %vm2182 = vweird.f32 %v2176
    %vm2183 = vmor %vm2181, %vm2182
    %v2184 = vsel %vm2183, %v2176, %v2180
    %v2185 = vand.u32 2147483647, %v2175
    %vm2186 = vcmp.eq.f32.partialorder %v2185, 8.507059e+37
    %v2187 = vand.u32 %v2175, 2147483648
    %v2188 = vor.u32 1.1754944e-38, %v2187
    %v2189 = vsel %vm2186, %v2188, %v2184
    %v2190 = vmul.f32 1.0, %v2189
    %v2191 = vtanh.pop %v2151
    %v2192 = vxor.u32 %v2152, 2147483648
    %v2193 = vmul.f32 %v2192, 1.442695
    %v2194 = vpow.pop %v2193
    %v2195 = vadd.f32 %v2194, 1.0
    %v2196 = vrcp.pop %v2195
    %v2197 = vmul.f32 %v2195, %v2196
    %v2198 = vsub.f32 1.0, %v2197
    %v2199 = vmul.f32 %v2196, %v2198
    %v2200 = vadd.f32 %v2196, %v2199
    %vm2201 = vweird.f32 %v2195
    %vm2202 = vweird.f32 %v2196
    %vm2203 = vmor %vm2201, %vm2202
    %v2204 = vsel %vm2203, %v2196, %v2200
    %v2205 = vand.u32 2147483647, %v2195
    %vm2206 = vcmp.eq.f32.partialorder %v2205, 8.507059e+37
    %v2207 = vand.u32 %v2195, 2147483648
    %v2208 = vor.u32 1.1754944e-38, %v2207
    %v2209 = vsel %vm2206, %v2208, %v2204
    %v2210 = vmul.f32 1.0, %v2209
    %v2211 = vmul.f32 %v2190, %v2064
    %v2212 = vmul.f32 %v2171, %v2191
    %v2213 = vadd.f32 %v2211, %v2212
    %v2214 = vtanh.pop %v2213
    %v2215 = vmul.f32 %v2210, %v2214
    %2216 = vst [vmem:[#allocation2] sm:$0xff] %v2215
    %v2217 = vld [vmem:[%s624] sm:$0xff]
    %v2218 = vld [vmem:[%s624 + $0x8] sm:$0xff]
    %v2219 = vld [vmem:[%s624 + $0x10] sm:$0xff]
    %v2220 = vld [vmem:[%s624 + $0x18] sm:$0xff]
    %2221 = vmatpush.msra.mxu0 %v2057
    %2222 = vmatpush.msra.mxu0 %v2053
    %2223 = vmatpush.msra.mxu0 %v2049
    %2224 = vmatpush.msra.mxu0 %v2045
    %2225 = vmatpush.msra.mxu0 %v2041
    %2226 = vmatpush.msra.mxu0 %v2037
    %2227 = vmatpush.msra.mxu0 %v2033
    %2228 = vmatpush.msra.mxu0 %v2029
    %2229 = vmatpush.msra.mxu0 %v2025
    %2230 = vmatpush.msra.mxu0 %v2021
    %2231 = vmatpush.msra.mxu0 %v2017
    %2232 = vmatpush.msra.mxu0 %v2013
    %2233 = vmatpush.msra.mxu0 %v2009
    %2234 = vmatpush.msra.mxu0 %v2005
    %2235 = vmatpush.msra.mxu0 %v2001
    %2236 = vmatpush.msra.mxu0 %v1997
    %2237 = vmatmul.f32.gmra.mxu0 %v2215
    %v2238 = vpop.f32.mrf.mxu0
    %v2239 = vadd.f32 0.0, %v2238
    %2240 = vdwg.mxu0
    %2241 = vmatpush.msra.mxu0 %v2058
    %2242 = vmatpush.msra.mxu0 %v2054
    %2243 = vmatpush.msra.mxu0 %v2050
    %2244 = vmatpush.msra.mxu0 %v2046
    %2245 = vmatpush.msra.mxu0 %v2042
    %2246 = vmatpush.msra.mxu0 %v2038
    %2247 = vmatpush.msra.mxu0 %v2034
    %2248 = vmatpush.msra.mxu0 %v2030
    %2249 = vmatpush.msra.mxu0 %v2026
    %2250 = vmatpush.msra.mxu0 %v2022
    %2251 = vmatpush.msra.mxu0 %v2018
    %2252 = vmatpush.msra.mxu0 %v2014
    %2253 = vmatpush.msra.mxu0 %v2010
    %2254 = vmatpush.msra.mxu0 %v2006
    %2255 = vmatpush.msra.mxu0 %v2002
    %2256 = vmatpush.msra.mxu0 %v1998
    %2257 = vmatmul.f32.gmra.mxu0 %v2215
    %v2258 = vpop.f32.mrf.mxu0
    %v2259 = vadd.f32 0.0, %v2258
    %2260 = vdwg.mxu0
    %2261 = vmatpush.msra.mxu0 %v2059
    %2262 = vmatpush.msra.mxu0 %v2055
    %2263 = vmatpush.msra.mxu0 %v2051
    %2264 = vmatpush.msra.mxu0 %v2047
    %2265 = vmatpush.msra.mxu0 %v2043
    %2266 = vmatpush.msra.mxu0 %v2039
    %2267 = vmatpush.msra.mxu0 %v2035
    %2268 = vmatpush.msra.mxu0 %v2031
    %2269 = vmatpush.msra.mxu0 %v2027
    %2270 = vmatpush.msra.mxu0 %v2023
    %2271 = vmatpush.msra.mxu0 %v2019
    %2272 = vmatpush.msra.mxu0 %v2015
    %2273 = vmatpush.msra.mxu0 %v2011
    %2274 = vmatpush.msra.mxu0 %v2007
    %2275 = vmatpush.msra.mxu0 %v2003
    %2276 = vmatpush.msra.mxu0 %v1999
    %2277 = vmatmul.f32.gmra.mxu0 %v2215
    %v2278 = vpop.f32.mrf.mxu0
    %v2279 = vadd.f32 0.0, %v2278
    %2280 = vdwg.mxu0
    %2281 = vmatpush.msra.mxu0 %v2060
    %2282 = vmatpush.msra.mxu0 %v2056
    %2283 = vmatpush.msra.mxu0 %v2052
    %2284 = vmatpush.msra.mxu0 %v2048
    %2285 = vmatpush.msra.mxu0 %v2044
    %2286 = vmatpush.msra.mxu0 %v2040
    %2287 = vmatpush.msra.mxu0 %v2036
    %2288 = vmatpush.msra.mxu0 %v2032
    %2289 = vmatpush.msra.mxu0 %v2028
    %2290 = vmatpush.msra.mxu0 %v2024
    %2291 = vmatpush.msra.mxu0 %v2020
    %2292 = vmatpush.msra.mxu0 %v2016
    %2293 = vmatpush.msra.mxu0 %v2012
    %2294 = vmatpush.msra.mxu0 %v2008
    %2295 = vmatpush.msra.mxu0 %v2004
    %2296 = vmatpush.msra.mxu0 %v2000
    %2297 = vmatmul.f32.gmra.mxu0 %v2215
    %v2298 = vpop.f32.mrf.mxu0
    %v2299 = vadd.f32 0.0, %v2298
    %2300 = vdwg.mxu0
    %v2301 = vadd.f32 %v2217, %v2239
    %v2302 = vadd.f32 %v2218, %v2259
    %v2303 = vadd.f32 %v2219, %v2279
    %v2304 = vadd.f32 %v2220, %v2299
    %v2305 = vxor.u32 %v2301, 2147483648
    %v2306 = vmul.f32 %v2305, 1.442695
    %v2307 = vpow.pop %v2306
    %v2308 = vadd.f32 %v2307, 1.0
    %v2309 = vrcp.pop %v2308
    %v2310 = vmul.f32 %v2308, %v2309
    %v2311 = vsub.f32 1.0, %v2310
    %v2312 = vmul.f32 %v2309, %v2311
    %v2313 = vadd.f32 %v2309, %v2312
    %vm2314 = vweird.f32 %v2308
    %vm2315 = vweird.f32 %v2309
    %vm2316 = vmor %vm2314, %vm2315
    %v2317 = vsel %vm2316, %v2309, %v2313
    %v2318 = vand.u32 2147483647, %v2308
    %vm2319 = vcmp.eq.f32.partialorder %v2318, 8.507059e+37
    %v2320 = vand.u32 %v2308, 2147483648
    %v2321 = vor.u32 1.1754944e-38, %v2320
    %v2322 = vsel %vm2319, %v2321, %v2317
    %v2323 = vmul.f32 1.0, %v2322
    %v2324 = vxor.u32 %v2302, 2147483648
    %v2325 = vmul.f32 %v2324, 1.442695
    %v2326 = vpow.pop %v2325
    %v2327 = vadd.f32 %v2326, 1.0
    %v2328 = vrcp.pop %v2327
    %v2329 = vmul.f32 %v2327, %v2328
    %v2330 = vsub.f32 1.0, %v2329
    %v2331 = vmul.f32 %v2328, %v2330
    %v2332 = vadd.f32 %v2328, %v2331
    %vm2333 = vweird.f32 %v2327
    %vm2334 = vweird.f32 %v2328
    %vm2335 = vmor %vm2333, %vm2334
    %v2336 = vsel %vm2335, %v2328, %v2332
    %v2337 = vand.u32 2147483647, %v2327
    %vm2338 = vcmp.eq.f32.partialorder %v2337, 8.507059e+37
    %v2339 = vand.u32 %v2327, 2147483648
    %v2340 = vor.u32 1.1754944e-38, %v2339
    %v2341 = vsel %vm2338, %v2340, %v2336
    %v2342 = vmul.f32 1.0, %v2341
    %v2343 = vtanh.pop %v2303
    %v2344 = vxor.u32 %v2304, 2147483648
    %v2345 = vmul.f32 %v2344, 1.442695
    %v2346 = vpow.pop %v2345
    %v2347 = vadd.f32 %v2346, 1.0
    %v2348 = vrcp.pop %v2347
    %v2349 = vmul.f32 %v2347, %v2348
    %v2350 = vsub.f32 1.0, %v2349
    %v2351 = vmul.f32 %v2348, %v2350
    %v2352 = vadd.f32 %v2348, %v2351
    %vm2353 = vweird.f32 %v2347
    %vm2354 = vweird.f32 %v2348
    %vm2355 = vmor %vm2353, %vm2354
    %v2356 = vsel %vm2355, %v2348, %v2352
    %v2357 = vand.u32 2147483647, %v2347
    %vm2358 = vcmp.eq.f32.partialorder %v2357, 8.507059e+37
    %v2359 = vand.u32 %v2347, 2147483648
    %v2360 = vor.u32 1.1754944e-38, %v2359
    %v2361 = vsel %vm2358, %v2360, %v2356
    %v2362 = vmul.f32 1.0, %v2361
    %v2363 = vmul.f32 %v2342, %v2213
    %v2364 = vmul.f32 %v2323, %v2343
    %v2365 = vadd.f32 %v2363, %v2364
    %v2366 = vtanh.pop %v2365
    %v2367 = vmul.f32 %v2362, %v2366
    %2368 = vst [vmem:[%s776] sm:$0xff] %v2367
    %v2369 = vld [vmem:[%s780] sm:$0xff]
    %v2370 = vld [vmem:[%s780 + $0x8] sm:$0xff]
    %v2371 = vld [vmem:[%s780 + $0x10] sm:$0xff]
    %v2372 = vld [vmem:[%s780 + $0x18] sm:$0xff]
    %2373 = vmatpush.msra.mxu0 %v2057
    %2374 = vmatpush.msra.mxu0 %v2053
    %2375 = vmatpush.msra.mxu0 %v2049
    %2376 = vmatpush.msra.mxu0 %v2045
    %2377 = vmatpush.msra.mxu0 %v2041
    %2378 = vmatpush.msra.mxu0 %v2037
    %2379 = vmatpush.msra.mxu0 %v2033
    %2380 = vmatpush.msra.mxu0 %v2029
    %2381 = vmatpush.msra.mxu0 %v2025
    %2382 = vmatpush.msra.mxu0 %v2021
    %2383 = vmatpush.msra.mxu0 %v2017
    %2384 = vmatpush.msra.mxu0 %v2013
    %2385 = vmatpush.msra.mxu0 %v2009
    %2386 = vmatpush.msra.mxu0 %v2005
    %2387 = vmatpush.msra.mxu0 %v2001
    %2388 = vmatpush.msra.mxu0 %v1997
    %2389 = vmatmul.f32.gmra.mxu0 %v2367
    %v2390 = vpop.f32.mrf.mxu0
    %v2391 = vadd.f32 0.0, %v2390
    %2392 = vdwg.mxu0
    %2393 = vmatpush.msra.mxu0 %v2058
    %2394 = vmatpush.msra.mxu0 %v2054
    %2395 = vmatpush.msra.mxu0 %v2050
    %2396 = vmatpush.msra.mxu0 %v2046
    %2397 = vmatpush.msra.mxu0 %v2042
    %2398 = vmatpush.msra.mxu0 %v2038
    %2399 = vmatpush.msra.mxu0 %v2034
    %2400 = vmatpush.msra.mxu0 %v2030
    %2401 = vmatpush.msra.mxu0 %v2026
    %2402 = vmatpush.msra.mxu0 %v2022
    %2403 = vmatpush.msra.mxu0 %v2018
    %2404 = vmatpush.msra.mxu0 %v2014
    %2405 = vmatpush.msra.mxu0 %v2010
    %2406 = vmatpush.msra.mxu0 %v2006
    %2407 = vmatpush.msra.mxu0 %v2002
    %2408 = vmatpush.msra.mxu0 %v1998
    %2409 = vmatmul.f32.gmra.mxu0 %v2367
    %v2410 = vpop.f32.mrf.mxu0
    %v2411 = vadd.f32 0.0, %v2410
    %2412 = vdwg.mxu0
    %2413 = vmatpush.msra.mxu0 %v2059
    %2414 = vmatpush.msra.mxu0 %v2055
    %2415 = vmatpush.msra.mxu0 %v2051
    %2416 = vmatpush.msra.mxu0 %v2047
    %2417 = vmatpush.msra.mxu0 %v2043
    %2418 = vmatpush.msra.mxu0 %v2039
    %2419 = vmatpush.msra.mxu0 %v2035
    %2420 = vmatpush.msra.mxu0 %v2031
    %2421 = vmatpush.msra.mxu0 %v2027
    %2422 = vmatpush.msra.mxu0 %v2023
    %2423 = vmatpush.msra.mxu0 %v2019
    %2424 = vmatpush.msra.mxu0 %v2015
    %2425 = vmatpush.msra.mxu0 %v2011
    %2426 = vmatpush.msra.mxu0 %v2007
    %2427 = vmatpush.msra.mxu0 %v2003
    %2428 = vmatpush.msra.mxu0 %v1999
    %2429 = vmatmul.f32.gmra.mxu0 %v2367
    %v2430 = vpop.f32.mrf.mxu0
    %v2431 = vadd.f32 0.0, %v2430
    %2432 = vdwg.mxu0
    %2433 = vmatpush.msra.mxu0 %v2060
    %2434 = vmatpush.msra.mxu0 %v2056
    %2435 = vmatpush.msra.mxu0 %v2052
    %2436 = vmatpush.msra.mxu0 %v2048
    %2437 = vmatpush.msra.mxu0 %v2044
    %2438 = vmatpush.msra.mxu0 %v2040
    %2439 = vmatpush.msra.mxu0 %v2036
    %2440 = vmatpush.msra.mxu0 %v2032
    %2441 = vmatpush.msra.mxu0 %v2028
    %2442 = vmatpush.msra.mxu0 %v2024
    %2443 = vmatpush.msra.mxu0 %v2020
    %2444 = vmatpush.msra.mxu0 %v2016
    %2445 = vmatpush.msra.mxu0 %v2012
    %2446 = vmatpush.msra.mxu0 %v2008
    %2447 = vmatpush.msra.mxu0 %v2004
    %2448 = vmatpush.msra.mxu0 %v2000
    %2449 = vmatmul.f32.gmra.mxu0 %v2367
    %v2450 = vpop.f32.mrf.mxu0
    %v2451 = vadd.f32 0.0, %v2450
    %2452 = vdwg.mxu0
    %v2453 = vadd.f32 %v2369, %v2391
    %v2454 = vadd.f32 %v2370, %v2411
    %v2455 = vadd.f32 %v2371, %v2431
    %v2456 = vadd.f32 %v2372, %v2451
    %v2457 = vxor.u32 %v2453, 2147483648
    %v2458 = vmul.f32 %v2457, 1.442695
    %v2459 = vpow.pop %v2458
    %v2460 = vadd.f32 %v2459, 1.0
    %v2461 = vrcp.pop %v2460
    %v2462 = vmul.f32 %v2460, %v2461
    %v2463 = vsub.f32 1.0, %v2462
    %v2464 = vmul.f32 %v2461, %v2463
    %v2465 = vadd.f32 %v2461, %v2464
    %vm2466 = vweird.f32 %v2460
    %vm2467 = vweird.f32 %v2461
    %vm2468 = vmor %vm2466, %vm2467
    %v2469 = vsel %vm2468, %v2461, %v2465
    %v2470 = vand.u32 2147483647, %v2460
    %vm2471 = vcmp.eq.f32.partialorder %v2470, 8.507059e+37
    %v2472 = vand.u32 %v2460, 2147483648
    %v2473 = vor.u32 1.1754944e-38, %v2472
    %v2474 = vsel %vm2471, %v2473, %v2469
    %v2475 = vmul.f32 1.0, %v2474
    %v2476 = vxor.u32 %v2454, 2147483648
    %v2477 = vmul.f32 %v2476, 1.442695
    %v2478 = vpow.pop %v2477
    %v2479 = vadd.f32 %v2478, 1.0
    %v2480 = vrcp.pop %v2479
    %v2481 = vmul.f32 %v2479, %v2480
    %v2482 = vsub.f32 1.0, %v2481
    %v2483 = vmul.f32 %v2480, %v2482
    %v2484 = vadd.f32 %v2480, %v2483
    %vm2485 = vweird.f32 %v2479
    %vm2486 = vweird.f32 %v2480
    %vm2487 = vmor %vm2485, %vm2486
    %v2488 = vsel %vm2487, %v2480, %v2484
    %v2489 = vand.u32 2147483647, %v2479
    %vm2490 = vcmp.eq.f32.partialorder %v2489, 8.507059e+37
    %v2491 = vand.u32 %v2479, 2147483648
    %v2492 = vor.u32 1.1754944e-38, %v2491
    %v2493 = vsel %vm2490, %v2492, %v2488
    %v2494 = vmul.f32 1.0, %v2493
    %v2495 = vtanh.pop %v2455
    %v2496 = vxor.u32 %v2456, 2147483648
    %v2497 = vmul.f32 %v2496, 1.442695
    %v2498 = vpow.pop %v2497
    %v2499 = vadd.f32 %v2498, 1.0
    %v2500 = vrcp.pop %v2499
    %v2501 = vmul.f32 %v2499, %v2500
    %v2502 = vsub.f32 1.0, %v2501
    %v2503 = vmul.f32 %v2500, %v2502
    %v2504 = vadd.f32 %v2500, %v2503
    %vm2505 = vweird.f32 %v2499
    %vm2506 = vweird.f32 %v2500
    %vm2507 = vmor %vm2505, %vm2506
    %v2508 = vsel %vm2507, %v2500, %v2504
    %v2509 = vand.u32 2147483647, %v2499
    %vm2510 = vcmp.eq.f32.partialorder %v2509, 8.507059e+37
    %v2511 = vand.u32 %v2499, 2147483648
    %v2512 = vor.u32 1.1754944e-38, %v2511
    %v2513 = vsel %vm2510, %v2512, %v2508
    %v2514 = vmul.f32 1.0, %v2513
    %v2515 = vmul.f32 %v2494, %v2365
    %v2516 = vmul.f32 %v2475, %v2495
    %v2517 = vadd.f32 %v2515, %v2516
    %v2518 = vtanh.pop %v2517
    %v2519 = vmul.f32 %v2514, %v2518
    %2520 = vst [vmem:[%s932] sm:$0xff] %v2519
    %v2521 = vld [vmem:[%s936] sm:$0xff]
    %v2522 = vld [vmem:[%s936 + $0x8] sm:$0xff]
    %v2523 = vld [vmem:[%s936 + $0x10] sm:$0xff]
    %v2524 = vld [vmem:[%s936 + $0x18] sm:$0xff]
    %2525 = vmatpush.msra.mxu0 %v2057
    %2526 = vmatpush.msra.mxu0 %v2053
    %2527 = vmatpush.msra.mxu0 %v2049
    %2528 = vmatpush.msra.mxu0 %v2045
    %2529 = vmatpush.msra.mxu0 %v2041
    %2530 = vmatpush.msra.mxu0 %v2037
    %2531 = vmatpush.msra.mxu0 %v2033
    %2532 = vmatpush.msra.mxu0 %v2029
    %2533 = vmatpush.msra.mxu0 %v2025
    %2534 = vmatpush.msra.mxu0 %v2021
    %2535 = vmatpush.msra.mxu0 %v2017
    %2536 = vmatpush.msra.mxu0 %v2013
    %2537 = vmatpush.msra.mxu0 %v2009
    %2538 = vmatpush.msra.mxu0 %v2005
    %2539 = vmatpush.msra.mxu0 %v2001
    %2540 = vmatpush.msra.mxu0 %v1997
    %2541 = vmatmul.f32.gmra.mxu0 %v2519
    %v2542 = vpop.f32.mrf.mxu0
    %v2543 = vadd.f32 0.0, %v2542
    %2544 = vdwg.mxu0
    %2545 = vmatpush.msra.mxu0 %v2058
    %2546 = vmatpush.msra.mxu0 %v2054
    %2547 = vmatpush.msra.mxu0 %v2050
    %2548 = vmatpush.msra.mxu0 %v2046
    %2549 = vmatpush.msra.mxu0 %v2042
    %2550 = vmatpush.msra.mxu0 %v2038
    %2551 = vmatpush.msra.mxu0 %v2034
    %2552 = vmatpush.msra.mxu0 %v2030
    %2553 = vmatpush.msra.mxu0 %v2026
    %2554 = vmatpush.msra.mxu0 %v2022
    %2555 = vmatpush.msra.mxu0 %v2018
    %2556 = vmatpush.msra.mxu0 %v2014
    %2557 = vmatpush.msra.mxu0 %v2010
    %2558 = vmatpush.msra.mxu0 %v2006
    %2559 = vmatpush.msra.mxu0 %v2002
    %2560 = vmatpush.msra.mxu0 %v1998
    %2561 = vmatmul.f32.gmra.mxu0 %v2519
    %v2562 = vpop.f32.mrf.mxu0
    %v2563 = vadd.f32 0.0, %v2562
    %2564 = vdwg.mxu0
    %2565 = vmatpush.msra.mxu0 %v2059
    %2566 = vmatpush.msra.mxu0 %v2055
    %2567 = vmatpush.msra.mxu0 %v2051
    %2568 = vmatpush.msra.mxu0 %v2047
    %2569 = vmatpush.msra.mxu0 %v2043
    %2570 = vmatpush.msra.mxu0 %v2039
    %2571 = vmatpush.msra.mxu0 %v2035
    %2572 = vmatpush.msra.mxu0 %v2031
    %2573 = vmatpush.msra.mxu0 %v2027
    %2574 = vmatpush.msra.mxu0 %v2023
    %2575 = vmatpush.msra.mxu0 %v2019
    %2576 = vmatpush.msra.mxu0 %v2015
    %2577 = vmatpush.msra.mxu0 %v2011
    %2578 = vmatpush.msra.mxu0 %v2007
    %2579 = vmatpush.msra.mxu0 %v2003
    %2580 = vmatpush.msra.mxu0 %v1999
    %2581 = vmatmul.f32.gmra.mxu0 %v2519
    %v2582 = vpop.f32.mrf.mxu0
    %v2583 = vadd.f32 0.0, %v2582
    %2584 = vdwg.mxu0
    %2585 = vmatpush.msra.mxu0 %v2060
    %2586 = vmatpush.msra.mxu0 %v2056
    %2587 = vmatpush.msra.mxu0 %v2052
    %2588 = vmatpush.msra.mxu0 %v2048
    %2589 = vmatpush.msra.mxu0 %v2044
    %2590 = vmatpush.msra.mxu0 %v2040
    %2591 = vmatpush.msra.mxu0 %v2036
    %2592 = vmatpush.msra.mxu0 %v2032
    %2593 = vmatpush.msra.mxu0 %v2028
    %2594 = vmatpush.msra.mxu0 %v2024
    %2595 = vmatpush.msra.mxu0 %v2020
    %2596 = vmatpush.msra.mxu0 %v2016
    %2597 = vmatpush.msra.mxu0 %v2012
    %2598 = vmatpush.msra.mxu0 %v2008
    %2599 = vmatpush.msra.mxu0 %v2004
    %2600 = vmatpush.msra.mxu0 %v2000
    %2601 = vmatmul.f32.gmra.mxu0 %v2519
    %v2602 = vpop.f32.mrf.mxu0
    %v2603 = vadd.f32 0.0, %v2602
    %2604 = vdwg.mxu0
    %v2605 = vadd.f32 %v2521, %v2543
    %v2606 = vadd.f32 %v2522, %v2563
    %v2607 = vadd.f32 %v2523, %v2583
    %v2608 = vadd.f32 %v2524, %v2603
    %v2609 = vxor.u32 %v2605, 2147483648
    %v2610 = vmul.f32 %v2609, 1.442695
    %v2611 = vpow.pop %v2610
    %v2612 = vadd.f32 %v2611, 1.0
    %v2613 = vrcp.pop %v2612
    %v2614 = vmul.f32 %v2612, %v2613
    %v2615 = vsub.f32 1.0, %v2614
    %v2616 = vmul.f32 %v2613, %v2615
    %v2617 = vadd.f32 %v2613, %v2616
    %vm2618 = vweird.f32 %v2612
    %vm2619 = vweird.f32 %v2613
    %vm2620 = vmor %vm2618, %vm2619
    %v2621 = vsel %vm2620, %v2613, %v2617
    %v2622 = vand.u32 2147483647, %v2612
    %vm2623 = vcmp.eq.f32.partialorder %v2622, 8.507059e+37
    %v2624 = vand.u32 %v2612, 2147483648
    %v2625 = vor.u32 1.1754944e-38, %v2624
    %v2626 = vsel %vm2623, %v2625, %v2621
    %v2627 = vmul.f32 1.0, %v2626
    %v2628 = vxor.u32 %v2606, 2147483648
    %v2629 = vmul.f32 %v2628, 1.442695
    %v2630 = vpow.pop %v2629
    %v2631 = vadd.f32 %v2630, 1.0
    %v2632 = vrcp.pop %v2631
    %v2633 = vmul.f32 %v2631, %v2632
    %v2634 = vsub.f32 1.0, %v2633
    %v2635 = vmul.f32 %v2632, %v2634
    %v2636 = vadd.f32 %v2632, %v2635
    %vm2637 = vweird.f32 %v2631
    %vm2638 = vweird.f32 %v2632
    %vm2639 = vmor %vm2637, %vm2638
    %v2640 = vsel %vm2639, %v2632, %v2636
    %v2641 = vand.u32 2147483647, %v2631
    %vm2642 = vcmp.eq.f32.partialorder %v2641, 8.507059e+37
    %v2643 = vand.u32 %v2631, 2147483648
    %v2644 = vor.u32 1.1754944e-38, %v2643
    %v2645 = vsel %vm2642, %v2644, %v2640
    %v2646 = vmul.f32 1.0, %v2645
    %v2647 = vtanh.pop %v2607
    %v2648 = vxor.u32 %v2608, 2147483648
    %v2649 = vmul.f32 %v2648, 1.442695
    %v2650 = vpow.pop %v2649
    %v2651 = vadd.f32 %v2650, 1.0
    %v2652 = vrcp.pop %v2651
    %v2653 = vmul.f32 %v2651, %v2652
    %v2654 = vsub.f32 1.0, %v2653
    %v2655 = vmul.f32 %v2652, %v2654
    %v2656 = vadd.f32 %v2652, %v2655
    %vm2657 = vweird.f32 %v2651
    %vm2658 = vweird.f32 %v2652
    %vm2659 = vmor %vm2657, %vm2658
    %v2660 = vsel %vm2659, %v2652, %v2656
    %v2661 = vand.u32 2147483647, %v2651
    %vm2662 = vcmp.eq.f32.partialorder %v2661, 8.507059e+37
    %v2663 = vand.u32 %v2651, 2147483648
    %v2664 = vor.u32 1.1754944e-38, %v2663
    %v2665 = vsel %vm2662, %v2664, %v2660
    %v2666 = vmul.f32 1.0, %v2665
    %v2667 = vmul.f32 %v2646, %v2517
    %v2668 = vmul.f32 %v2627, %v2647
    %v2669 = vadd.f32 %v2667, %v2668
    %v2670 = vtanh.pop %v2669
    %v2671 = vmul.f32 %v2666, %v2670
    %2672 = vst [vmem:[%s1088] sm:$0xff] %v2671
    %v2673 = vld [vmem:[%s1092] sm:$0xff]
    %v2674 = vld [vmem:[%s1092 + $0x8] sm:$0xff]
    %v2675 = vld [vmem:[%s1092 + $0x10] sm:$0xff]
    %v2676 = vld [vmem:[%s1092 + $0x18] sm:$0xff]
    %2677 = vmatpush.msra.mxu0 %v2057
    %2678 = vmatpush.msra.mxu0 %v2053
    %2679 = vmatpush.msra.mxu0 %v2049
    %2680 = vmatpush.msra.mxu0 %v2045
    %2681 = vmatpush.msra.mxu0 %v2041
    %2682 = vmatpush.msra.mxu0 %v2037
    %2683 = vmatpush.msra.mxu0 %v2033
    %2684 = vmatpush.msra.mxu0 %v2029
    %2685 = vmatpush.msra.mxu0 %v2025
    %2686 = vmatpush.msra.mxu0 %v2021
    %2687 = vmatpush.msra.mxu0 %v2017
    %2688 = vmatpush.msra.mxu0 %v2013
    %2689 = vmatpush.msra.mxu0 %v2009
    %2690 = vmatpush.msra.mxu0 %v2005
    %2691 = vmatpush.msra.mxu0 %v2001
    %2692 = vmatpush.msra.mxu0 %v1997
    %2693 = vmatmul.f32.gmra.mxu0 %v2671
    %v2694 = vpop.f32.mrf.mxu0
    %v2695 = vadd.f32 0.0, %v2694
    %2696 = vdwg.mxu0
    %2697 = vmatpush.msra.mxu0 %v2058
    %2698 = vmatpush.msra.mxu0 %v2054
    %2699 = vmatpush.msra.mxu0 %v2050
    %2700 = vmatpush.msra.mxu0 %v2046
    %2701 = vmatpush.msra.mxu0 %v2042
    %2702 = vmatpush.msra.mxu0 %v2038
    %2703 = vmatpush.msra.mxu0 %v2034
    %2704 = vmatpush.msra.mxu0 %v2030
    %2705 = vmatpush.msra.mxu0 %v2026
    %2706 = vmatpush.msra.mxu0 %v2022
    %2707 = vmatpush.msra.mxu0 %v2018
    %2708 = vmatpush.msra.mxu0 %v2014
    %2709 = vmatpush.msra.mxu0 %v2010
    %2710 = vmatpush.msra.mxu0 %v2006
    %2711 = vmatpush.msra.mxu0 %v2002
    %2712 = vmatpush.msra.mxu0 %v1998
    %2713 = vmatmul.f32.gmra.mxu0 %v2671
    %v2714 = vpop.f32.mrf.mxu0
    %v2715 = vadd.f32 0.0, %v2714
    %2716 = vdwg.mxu0
    %2717 = vmatpush.msra.mxu0 %v2059
    %2718 = vmatpush.msra.mxu0 %v2055
    %2719 = vmatpush.msra.mxu0 %v2051
    %2720 = vmatpush.msra.mxu0 %v2047
    %2721 = vmatpush.msra.mxu0 %v2043
    %2722 = vmatpush.msra.mxu0 %v2039
    %2723 = vmatpush.msra.mxu0 %v2035
    %2724 = vmatpush.msra.mxu0 %v2031
    %2725 = vmatpush.msra.mxu0 %v2027
    %2726 = vmatpush.msra.mxu0 %v2023
    %2727 = vmatpush.msra.mxu0 %v2019
    %2728 = vmatpush.msra.mxu0 %v2015
    %2729 = vmatpush.msra.mxu0 %v2011
    %2730 = vmatpush.msra.mxu0 %v2007
    %2731 = vmatpush.msra.mxu0 %v2003
    %2732 = vmatpush.msra.mxu0 %v1999
    %2733 = vmatmul.f32.gmra.mxu0 %v2671
    %v2734 = vpop.f32.mrf.mxu0
    %v2735 = vadd.f32 0.0, %v2734
    %2736 = vdwg.mxu0
    %2737 = vmatpush.msra.mxu0 %v2060
    %2738 = vmatpush.msra.mxu0 %v2056
    %2739 = vmatpush.msra.mxu0 %v2052
    %2740 = vmatpush.msra.mxu0 %v2048
    %2741 = vmatpush.msra.mxu0 %v2044
    %2742 = vmatpush.msra.mxu0 %v2040
    %2743 = vmatpush.msra.mxu0 %v2036
    %2744 = vmatpush.msra.mxu0 %v2032
    %2745 = vmatpush.msra.mxu0 %v2028
    %2746 = vmatpush.msra.mxu0 %v2024
    %2747 = vmatpush.msra.mxu0 %v2020
    %2748 = vmatpush.msra.mxu0 %v2016
    %2749 = vmatpush.msra.mxu0 %v2012
    %2750 = vmatpush.msra.mxu0 %v2008
    %2751 = vmatpush.msra.mxu0 %v2004
    %2752 = vmatpush.msra.mxu0 %v2000
    %2753 = vmatmul.f32.gmra.mxu0 %v2671
    %v2754 = vpop.f32.mrf.mxu0
    %v2755 = vadd.f32 0.0, %v2754
    %2756 = vdwg.mxu0
    %v2757 = vadd.f32 %v2673, %v2695
    %v2758 = vadd.f32 %v2674, %v2715
    %v2759 = vadd.f32 %v2675, %v2735
    %v2760 = vadd.f32 %v2676, %v2755
    %v2761 = vxor.u32 %v2757, 2147483648
    %v2762 = vmul.f32 %v2761, 1.442695
    %v2763 = vpow.pop %v2762
    %v2764 = vadd.f32 %v2763, 1.0
    %v2765 = vrcp.pop %v2764
    %v2766 = vmul.f32 %v2764, %v2765
    %v2767 = vsub.f32 1.0, %v2766
    %v2768 = vmul.f32 %v2765, %v2767
    %v2769 = vadd.f32 %v2765, %v2768
    %vm2770 = vweird.f32 %v2764
    %vm2771 = vweird.f32 %v2765
    %vm2772 = vmor %vm2770, %vm2771
    %v2773 = vsel %vm2772, %v2765, %v2769
    %v2774 = vand.u32 2147483647, %v2764
    %vm2775 = vcmp.eq.f32.partialorder %v2774, 8.507059e+37
    %v2776 = vand.u32 %v2764, 2147483648
    %v2777 = vor.u32 1.1754944e-38, %v2776
    %v2778 = vsel %vm2775, %v2777, %v2773
    %v2779 = vmul.f32 1.0, %v2778
    %v2780 = vxor.u32 %v2758, 2147483648
    %v2781 = vmul.f32 %v2780, 1.442695
    %v2782 = vpow.pop %v2781
    %v2783 = vadd.f32 %v2782, 1.0
    %v2784 = vrcp.pop %v2783
    %v2785 = vmul.f32 %v2783, %v2784
    %v2786 = vsub.f32 1.0, %v2785
    %v2787 = vmul.f32 %v2784, %v2786
    %v2788 = vadd.f32 %v2784, %v2787
    %vm2789 = vweird.f32 %v2783
    %vm2790 = vweird.f32 %v2784
    %vm2791 = vmor %vm2789, %vm2790
    %v2792 = vsel %vm2791, %v2784, %v2788
    %v2793 = vand.u32 2147483647, %v2783
    %vm2794 = vcmp.eq.f32.partialorder %v2793, 8.507059e+37
    %v2795 = vand.u32 %v2783, 2147483648
    %v2796 = vor.u32 1.1754944e-38, %v2795
    %v2797 = vsel %vm2794, %v2796, %v2792
    %v2798 = vmul.f32 1.0, %v2797
    %v2799 = vtanh.pop %v2759
    %v2800 = vxor.u32 %v2760, 2147483648
    %v2801 = vmul.f32 %v2800, 1.442695
    %v2802 = vpow.pop %v2801
    %v2803 = vadd.f32 %v2802, 1.0
    %v2804 = vrcp.pop %v2803
    %v2805 = vmul.f32 %v2803, %v2804
    %v2806 = vsub.f32 1.0, %v2805
    %v2807 = vmul.f32 %v2804, %v2806
    %v2808 = vadd.f32 %v2804, %v2807
    %vm2809 = vweird.f32 %v2803
    %vm2810 = vweird.f32 %v2804
    %vm2811 = vmor %vm2809, %vm2810
    %v2812 = vsel %vm2811, %v2804, %v2808
    %v2813 = vand.u32 2147483647, %v2803
    %vm2814 = vcmp.eq.f32.partialorder %v2813, 8.507059e+37
    %v2815 = vand.u32 %v2803, 2147483648
    %v2816 = vor.u32 1.1754944e-38, %v2815
    %v2817 = vsel %vm2814, %v2816, %v2812
    %v2818 = vmul.f32 1.0, %v2817
    %v2819 = vmul.f32 %v2798, %v2669
    %v2820 = vmul.f32 %v2779, %v2799
    %v2821 = vadd.f32 %v2819, %v2820
    %v2822 = vtanh.pop %v2821
    %v2823 = vmul.f32 %v2818, %v2822
    %2824 = vst [vmem:[%s1244] sm:$0xff] %v2823
    %v2825 = vld [vmem:[%s1248] sm:$0xff]
    %v2826 = vld [vmem:[%s1248 + $0x8] sm:$0xff]
    %v2827 = vld [vmem:[%s1248 + $0x10] sm:$0xff]
    %v2828 = vld [vmem:[%s1248 + $0x18] sm:$0xff]
    %2829 = vmatpush.msra.mxu0 %v2057
    %2830 = vmatpush.msra.mxu0 %v2053
    %2831 = vmatpush.msra.mxu0 %v2049
    %2832 = vmatpush.msra.mxu0 %v2045
    %2833 = vmatpush.msra.mxu0 %v2041
    %2834 = vmatpush.msra.mxu0 %v2037
    %2835 = vmatpush.msra.mxu0 %v2033
    %2836 = vmatpush.msra.mxu0 %v2029
    %2837 = vmatpush.msra.mxu0 %v2025
    %2838 = vmatpush.msra.mxu0 %v2021
    %2839 = vmatpush.msra.mxu0 %v2017
    %2840 = vmatpush.msra.mxu0 %v2013
    %2841 = vmatpush.msra.mxu0 %v2009
    %2842 = vmatpush.msra.mxu0 %v2005
    %2843 = vmatpush.msra.mxu0 %v2001
    %2844 = vmatpush.msra.mxu0 %v1997
    %2845 = vmatmul.f32.gmra.mxu0 %v2823
    %v2846 = vpop.f32.mrf.mxu0
    %v2847 = vadd.f32 0.0, %v2846
    %2848 = vdwg.mxu0
    %2849 = vmatpush.msra.mxu0 %v2058
    %2850 = vmatpush.msra.mxu0 %v2054
    %2851 = vmatpush.msra.mxu0 %v2050
    %2852 = vmatpush.msra.mxu0 %v2046
    %2853 = vmatpush.msra.mxu0 %v2042
    %2854 = vmatpush.msra.mxu0 %v2038
    %2855 = vmatpush.msra.mxu0 %v2034
    %2856 = vmatpush.msra.mxu0 %v2030
    %2857 = vmatpush.msra.mxu0 %v2026
    %2858 = vmatpush.msra.mxu0 %v2022
    %2859 = vmatpush.msra.mxu0 %v2018
    %2860 = vmatpush.msra.mxu0 %v2014
    %2861 = vmatpush.msra.mxu0 %v2010
    %2862 = vmatpush.msra.mxu0 %v2006
    %2863 = vmatpush.msra.mxu0 %v2002
    %2864 = vmatpush.msra.mxu0 %v1998
    %2865 = vmatmul.f32.gmra.mxu0 %v2823
    %v2866 = vpop.f32.mrf.mxu0
    %v2867 = vadd.f32 0.0, %v2866
    %2868 = vdwg.mxu0
    %2869 = vmatpush.msra.mxu0 %v2059
    %2870 = vmatpush.msra.mxu0 %v2055
    %2871 = vmatpush.msra.mxu0 %v2051
    %2872 = vmatpush.msra.mxu0 %v2047
    %2873 = vmatpush.msra.mxu0 %v2043
    %2874 = vmatpush.msra.mxu0 %v2039
    %2875 = vmatpush.msra.mxu0 %v2035
    %2876 = vmatpush.msra.mxu0 %v2031
    %2877 = vmatpush.msra.mxu0 %v2027
    %2878 = vmatpush.msra.mxu0 %v2023
    %2879 = vmatpush.msra.mxu0 %v2019
    %2880 = vmatpush.msra.mxu0 %v2015
    %2881 = vmatpush.msra.mxu0 %v2011
    %2882 = vmatpush.msra.mxu0 %v2007
    %2883 = vmatpush.msra.mxu0 %v2003
    %2884 = vmatpush.msra.mxu0 %v1999
    %2885 = vmatmul.f32.gmra.mxu0 %v2823
    %v2886 = vpop.f32.mrf.mxu0
    %v2887 = vadd.f32 0.0, %v2886
    %2888 = vdwg.mxu0
    %2889 = vmatpush.msra.mxu0 %v2060
    %2890 = vmatpush.msra.mxu0 %v2056
    %2891 = vmatpush.msra.mxu0 %v2052
    %2892 = vmatpush.msra.mxu0 %v2048
    %2893 = vmatpush.msra.mxu0 %v2044
    %2894 = vmatpush.msra.mxu0 %v2040
    %2895 = vmatpush.msra.mxu0 %v2036
    %2896 = vmatpush.msra.mxu0 %v2032
    %2897 = vmatpush.msra.mxu0 %v2028
    %2898 = vmatpush.msra.mxu0 %v2024
    %2899 = vmatpush.msra.mxu0 %v2020
    %2900 = vmatpush.msra.mxu0 %v2016
    %2901 = vmatpush.msra.mxu0 %v2012
    %2902 = vmatpush.msra.mxu0 %v2008
    %2903 = vmatpush.msra.mxu0 %v2004
    %2904 = vmatpush.msra.mxu0 %v2000
    %2905 = vmatmul.f32.gmra.mxu0 %v2823
    %v2906 = vpop.f32.mrf.mxu0
    %v2907 = vadd.f32 0.0, %v2906
    %2908 = vdwg.mxu0
    %v2909 = vadd.f32 %v2825, %v2847
    %v2910 = vadd.f32 %v2826, %v2867
    %v2911 = vadd.f32 %v2827, %v2887
    %v2912 = vadd.f32 %v2828, %v2907
    %v2913 = vxor.u32 %v2909, 2147483648
    %v2914 = vmul.f32 %v2913, 1.442695
    %v2915 = vpow.pop %v2914
    %v2916 = vadd.f32 %v2915, 1.0
    %v2917 = vrcp.pop %v2916
    %v2918 = vmul.f32 %v2916, %v2917
    %v2919 = vsub.f32 1.0, %v2918
    %v2920 = vmul.f32 %v2917, %v2919
    %v2921 = vadd.f32 %v2917, %v2920
    %vm2922 = vweird.f32 %v2916
    %vm2923 = vweird.f32 %v2917
    %vm2924 = vmor %vm2922, %vm2923
    %v2925 = vsel %vm2924, %v2917, %v2921
    %v2926 = vand.u32 2147483647, %v2916
    %vm2927 = vcmp.eq.f32.partialorder %v2926, 8.507059e+37
    %v2928 = vand.u32 %v2916, 2147483648
    %v2929 = vor.u32 1.1754944e-38, %v2928
    %v2930 = vsel %vm2927, %v2929, %v2925
    %v2931 = vmul.f32 1.0, %v2930
    %v2932 = vxor.u32 %v2910, 2147483648
    %v2933 = vmul.f32 %v2932, 1.442695
    %v2934 = vpow.pop %v2933
    %v2935 = vadd.f32 %v2934, 1.0
    %v2936 = vrcp.pop %v2935
    %v2937 = vmul.f32 %v2935, %v2936
    %v2938 = vsub.f32 1.0, %v2937
    %v2939 = vmul.f32 %v2936, %v2938
    %v2940 = vadd.f32 %v2936, %v2939
    %vm2941 = vweird.f32 %v2935
    %vm2942 = vweird.f32 %v2936
    %vm2943 = vmor %vm2941, %vm2942
    %v2944 = vsel %vm2943, %v2936, %v2940
    %v2945 = vand.u32 2147483647, %v2935
    %vm2946 = vcmp.eq.f32.partialorder %v2945, 8.507059e+37
    %v2947 = vand.u32 %v2935, 2147483648
    %v2948 = vor.u32 1.1754944e-38, %v2947
    %v2949 = vsel %vm2946, %v2948, %v2944
    %v2950 = vmul.f32 1.0, %v2949
    %v2951 = vtanh.pop %v2911
    %v2952 = vxor.u32 %v2912, 2147483648
    %v2953 = vmul.f32 %v2952, 1.442695
    %v2954 = vpow.pop %v2953
    %v2955 = vadd.f32 %v2954, 1.0
    %v2956 = vrcp.pop %v2955
    %v2957 = vmul.f32 %v2955, %v2956
    %v2958 = vsub.f32 1.0, %v2957
    %v2959 = vmul.f32 %v2956, %v2958
    %v2960 = vadd.f32 %v2956, %v2959
    %vm2961 = vweird.f32 %v2955
    %vm2962 = vweird.f32 %v2956
    %vm2963 = vmor %vm2961, %vm2962
    %v2964 = vsel %vm2963, %v2956, %v2960
    %v2965 = vand.u32 2147483647, %v2955
    %vm2966 = vcmp.eq.f32.partialorder %v2965, 8.507059e+37
    %v2967 = vand.u32 %v2955, 2147483648
    %v2968 = vor.u32 1.1754944e-38, %v2967
    %v2969 = vsel %vm2966, %v2968, %v2964
    %v2970 = vmul.f32 1.0, %v2969
    %v2971 = vmul.f32 %v2950, %v2821
    %v2972 = vmul.f32 %v2931, %v2951
    %v2973 = vadd.f32 %v2971, %v2972
    %v2974 = vtanh.pop %v2973
    %v2975 = vmul.f32 %v2970, %v2974
    %2976 = vst [vmem:[%s1400] sm:$0xff] %v2975
    %v2977 = vld [vmem:[%s1404] sm:$0xff]
    %v2978 = vld [vmem:[%s1404 + $0x8] sm:$0xff]
    %v2979 = vld [vmem:[%s1404 + $0x10] sm:$0xff]
    %v2980 = vld [vmem:[%s1404 + $0x18] sm:$0xff]
    %2981 = vmatpush.msra.mxu0 %v2057
    %2982 = vmatpush.msra.mxu0 %v2053
    %2983 = vmatpush.msra.mxu0 %v2049
    %2984 = vmatpush.msra.mxu0 %v2045
    %2985 = vmatpush.msra.mxu0 %v2041
    %2986 = vmatpush.msra.mxu0 %v2037
    %2987 = vmatpush.msra.mxu0 %v2033
    %2988 = vmatpush.msra.mxu0 %v2029
    %2989 = vmatpush.msra.mxu0 %v2025
    %2990 = vmatpush.msra.mxu0 %v2021
    %2991 = vmatpush.msra.mxu0 %v2017
    %2992 = vmatpush.msra.mxu0 %v2013
    %2993 = vmatpush.msra.mxu0 %v2009
    %2994 = vmatpush.msra.mxu0 %v2005
    %2995 = vmatpush.msra.mxu0 %v2001
    %2996 = vmatpush.msra.mxu0 %v1997
    %2997 = vmatmul.f32.gmra.mxu0 %v2975
    %v2998 = vpop.f32.mrf.mxu0
    %v2999 = vadd.f32 0.0, %v2998
    %3000 = vdwg.mxu0
    %3001 = vmatpush.msra.mxu0 %v2058
    %3002 = vmatpush.msra.mxu0 %v2054
    %3003 = vmatpush.msra.mxu0 %v2050
    %3004 = vmatpush.msra.mxu0 %v2046
    %3005 = vmatpush.msra.mxu0 %v2042
    %3006 = vmatpush.msra.mxu0 %v2038
    %3007 = vmatpush.msra.mxu0 %v2034
    %3008 = vmatpush.msra.mxu0 %v2030
    %3009 = vmatpush.msra.mxu0 %v2026
    %3010 = vmatpush.msra.mxu0 %v2022
    %3011 = vmatpush.msra.mxu0 %v2018
    %3012 = vmatpush.msra.mxu0 %v2014
    %3013 = vmatpush.msra.mxu0 %v2010
    %3014 = vmatpush.msra.mxu0 %v2006
    %3015 = vmatpush.msra.mxu0 %v2002
    %3016 = vmatpush.msra.mxu0 %v1998
    %3017 = vmatmul.f32.gmra.mxu0 %v2975
    %v3018 = vpop.f32.mrf.mxu0
    %v3019 = vadd.f32 0.0, %v3018
    %3020 = vdwg.mxu0
    %3021 = vmatpush.msra.mxu0 %v2059
    %3022 = vmatpush.msra.mxu0 %v2055
    %3023 = vmatpush.msra.mxu0 %v2051
    %3024 = vmatpush.msra.mxu0 %v2047
    %3025 = vmatpush.msra.mxu0 %v2043
    %3026 = vmatpush.msra.mxu0 %v2039
    %3027 = vmatpush.msra.mxu0 %v2035
    %3028 = vmatpush.msra.mxu0 %v2031
    %3029 = vmatpush.msra.mxu0 %v2027
    %3030 = vmatpush.msra.mxu0 %v2023
    %3031 = vmatpush.msra.mxu0 %v2019
    %3032 = vmatpush.msra.mxu0 %v2015
    %3033 = vmatpush.msra.mxu0 %v2011
    %3034 = vmatpush.msra.mxu0 %v2007
    %3035 = vmatpush.msra.mxu0 %v2003
    %3036 = vmatpush.msra.mxu0 %v1999
    %3037 = vmatmul.f32.gmra.mxu0 %v2975
    %v3038 = vpop.f32.mrf.mxu0
    %v3039 = vadd.f32 0.0, %v3038
    %3040 = vdwg.mxu0
    %3041 = vmatpush.msra.mxu0 %v2060
    %3042 = vmatpush.msra.mxu0 %v2056
    %3043 = vmatpush.msra.mxu0 %v2052
    %3044 = vmatpush.msra.mxu0 %v2048
    %3045 = vmatpush.msra.mxu0 %v2044
    %3046 = vmatpush.msra.mxu0 %v2040
    %3047 = vmatpush.msra.mxu0 %v2036
    %3048 = vmatpush.msra.mxu0 %v2032
    %3049 = vmatpush.msra.mxu0 %v2028
    %3050 = vmatpush.msra.mxu0 %v2024
    %3051 = vmatpush.msra.mxu0 %v2020
    %3052 = vmatpush.msra.mxu0 %v2016
    %3053 = vmatpush.msra.mxu0 %v2012
    %3054 = vmatpush.msra.mxu0 %v2008
    %3055 = vmatpush.msra.mxu0 %v2004
    %3056 = vmatpush.msra.mxu0 %v2000
    %3057 = vmatmul.f32.gmra.mxu0 %v2975
    %v3058 = vpop.f32.mrf.mxu0
    %v3059 = vadd.f32 0.0, %v3058
    %3060 = vdwg.mxu0
    %v3061 = vadd.f32 %v2977, %v2999
    %v3062 = vadd.f32 %v2978, %v3019
    %v3063 = vadd.f32 %v2979, %v3039
    %v3064 = vadd.f32 %v2980, %v3059
    %v3065 = vxor.u32 %v3061, 2147483648
    %v3066 = vmul.f32 %v3065, 1.442695
    %v3067 = vpow.pop %v3066
    %v3068 = vadd.f32 %v3067, 1.0
    %v3069 = vrcp.pop %v3068
    %v3070 = vmul.f32 %v3068, %v3069
    %v3071 = vsub.f32 1.0, %v3070
    %v3072 = vmul.f32 %v3069, %v3071
    %v3073 = vadd.f32 %v3069, %v3072
    %vm3074 = vweird.f32 %v3068
    %vm3075 = vweird.f32 %v3069
    %vm3076 = vmor %vm3074, %vm3075
    %v3077 = vsel %vm3076, %v3069, %v3073
    %v3078 = vand.u32 2147483647, %v3068
    %vm3079 = vcmp.eq.f32.partialorder %v3078, 8.507059e+37
    %v3080 = vand.u32 %v3068, 2147483648
    %v3081 = vor.u32 1.1754944e-38, %v3080
    %v3082 = vsel %vm3079, %v3081, %v3077
    %v3083 = vmul.f32 1.0, %v3082
    %v3084 = vxor.u32 %v3062, 2147483648
    %v3085 = vmul.f32 %v3084, 1.442695
    %v3086 = vpow.pop %v3085
    %v3087 = vadd.f32 %v3086, 1.0
    %v3088 = vrcp.pop %v3087
    %v3089 = vmul.f32 %v3087, %v3088
    %v3090 = vsub.f32 1.0, %v3089
    %v3091 = vmul.f32 %v3088, %v3090
    %v3092 = vadd.f32 %v3088, %v3091
    %vm3093 = vweird.f32 %v3087
    %vm3094 = vweird.f32 %v3088
    %vm3095 = vmor %vm3093, %vm3094
    %v3096 = vsel %vm3095, %v3088, %v3092
    %v3097 = vand.u32 2147483647, %v3087
    %vm3098 = vcmp.eq.f32.partialorder %v3097, 8.507059e+37
    %v3099 = vand.u32 %v3087, 2147483648
    %v3100 = vor.u32 1.1754944e-38, %v3099
    %v3101 = vsel %vm3098, %v3100, %v3096
    %v3102 = vmul.f32 1.0, %v3101
    %v3103 = vtanh.pop %v3063
    %v3104 = vxor.u32 %v3064, 2147483648
    %v3105 = vmul.f32 %v3104, 1.442695
    %v3106 = vpow.pop %v3105
    %v3107 = vadd.f32 %v3106, 1.0
    %v3108 = vrcp.pop %v3107
    %v3109 = vmul.f32 %v3107, %v3108
    %v3110 = vsub.f32 1.0, %v3109
    %v3111 = vmul.f32 %v3108, %v3110
    %v3112 = vadd.f32 %v3108, %v3111
    %vm3113 = vweird.f32 %v3107
    %vm3114 = vweird.f32 %v3108
    %vm3115 = vmor %vm3113, %vm3114
    %v3116 = vsel %vm3115, %v3108, %v3112
    %v3117 = vand.u32 2147483647, %v3107
    %vm3118 = vcmp.eq.f32.partialorder %v3117, 8.507059e+37
    %v3119 = vand.u32 %v3107, 2147483648
    %v3120 = vor.u32 1.1754944e-38, %v3119
    %v3121 = vsel %vm3118, %v3120, %v3116
    %v3122 = vmul.f32 1.0, %v3121
    %v3123 = vmul.f32 %v3102, %v2973
    %v3124 = vmul.f32 %v3083, %v3103
    %v3125 = vadd.f32 %v3123, %v3124
    %v3126 = vtanh.pop %v3125
    %v3127 = vmul.f32 %v3122, %v3126
    %3128 = vst [vmem:[%s1556] sm:$0xff] %v3127
    %v3129 = vld [vmem:[%s1560] sm:$0xff]
    %v3130 = vld [vmem:[%s1560 + $0x8] sm:$0xff]
    %v3131 = vld [vmem:[%s1560 + $0x10] sm:$0xff]
    %v3132 = vld [vmem:[%s1560 + $0x18] sm:$0xff]
    %3133 = vmatpush.msra.mxu0 %v2057
    %3134 = vmatpush.msra.mxu0 %v2053
    %3135 = vmatpush.msra.mxu0 %v2049
    %3136 = vmatpush.msra.mxu0 %v2045
    %3137 = vmatpush.msra.mxu0 %v2041
    %3138 = vmatpush.msra.mxu0 %v2037
    %3139 = vmatpush.msra.mxu0 %v2033
    %3140 = vmatpush.msra.mxu0 %v2029
    %3141 = vmatpush.msra.mxu0 %v2025
    %3142 = vmatpush.msra.mxu0 %v2021
    %3143 = vmatpush.msra.mxu0 %v2017
    %3144 = vmatpush.msra.mxu0 %v2013
    %3145 = vmatpush.msra.mxu0 %v2009
    %3146 = vmatpush.msra.mxu0 %v2005
    %3147 = vmatpush.msra.mxu0 %v2001
    %3148 = vmatpush.msra.mxu0 %v1997
    %3149 = vmatmul.f32.gmra.mxu0 %v3127
    %v3150 = vpop.f32.mrf.mxu0
    %v3151 = vadd.f32 0.0, %v3150
    %3152 = vdwg.mxu0
    %3153 = vmatpush.msra.mxu0 %v2058
    %3154 = vmatpush.msra.mxu0 %v2054
    %3155 = vmatpush.msra.mxu0 %v2050
    %3156 = vmatpush.msra.mxu0 %v2046
    %3157 = vmatpush.msra.mxu0 %v2042
    %3158 = vmatpush.msra.mxu0 %v2038
    %3159 = vmatpush.msra.mxu0 %v2034
    %3160 = vmatpush.msra.mxu0 %v2030
    %3161 = vmatpush.msra.mxu0 %v2026
    %3162 = vmatpush.msra.mxu0 %v2022
    %3163 = vmatpush.msra.mxu0 %v2018
    %3164 = vmatpush.msra.mxu0 %v2014
    %3165 = vmatpush.msra.mxu0 %v2010
    %3166 = vmatpush.msra.mxu0 %v2006
    %3167 = vmatpush.msra.mxu0 %v2002
    %3168 = vmatpush.msra.mxu0 %v1998
    %3169 = vmatmul.f32.gmra.mxu0 %v3127
    %v3170 = vpop.f32.mrf.mxu0
    %v3171 = vadd.f32 0.0, %v3170
    %3172 = vdwg.mxu0
    %3173 = vmatpush.msra.mxu0 %v2059
    %3174 = vmatpush.msra.mxu0 %v2055
    %3175 = vmatpush.msra.mxu0 %v2051
    %3176 = vmatpush.msra.mxu0 %v2047
    %3177 = vmatpush.msra.mxu0 %v2043
    %3178 = vmatpush.msra.mxu0 %v2039
    %3179 = vmatpush.msra.mxu0 %v2035
    %3180 = vmatpush.msra.mxu0 %v2031
    %3181 = vmatpush.msra.mxu0 %v2027
    %3182 = vmatpush.msra.mxu0 %v2023
    %3183 = vmatpush.msra.mxu0 %v2019
    %3184 = vmatpush.msra.mxu0 %v2015
    %3185 = vmatpush.msra.mxu0 %v2011
    %3186 = vmatpush.msra.mxu0 %v2007
    %3187 = vmatpush.msra.mxu0 %v2003
    %3188 = vmatpush.msra.mxu0 %v1999
    %3189 = vmatmul.f32.gmra.mxu0 %v3127
    %v3190 = vpop.f32.mrf.mxu0
    %v3191 = vadd.f32 0.0, %v3190
    %3192 = vdwg.mxu0
    %3193 = vmatpush.msra.mxu0 %v2060
    %3194 = vmatpush.msra.mxu0 %v2056
    %3195 = vmatpush.msra.mxu0 %v2052
    %3196 = vmatpush.msra.mxu0 %v2048
    %3197 = vmatpush.msra.mxu0 %v2044
    %3198 = vmatpush.msra.mxu0 %v2040
    %3199 = vmatpush.msra.mxu0 %v2036
    %3200 = vmatpush.msra.mxu0 %v2032
    %3201 = vmatpush.msra.mxu0 %v2028
    %3202 = vmatpush.msra.mxu0 %v2024
    %3203 = vmatpush.msra.mxu0 %v2020
    %3204 = vmatpush.msra.mxu0 %v2016
    %3205 = vmatpush.msra.mxu0 %v2012
    %3206 = vmatpush.msra.mxu0 %v2008
    %3207 = vmatpush.msra.mxu0 %v2004
    %3208 = vmatpush.msra.mxu0 %v2000
    %3209 = vmatmul.f32.gmra.mxu0 %v3127
    %v3210 = vpop.f32.mrf.mxu0
    %v3211 = vadd.f32 0.0, %v3210
    %3212 = vdwg.mxu0
    %v3213 = vadd.f32 %v3129, %v3151
    %v3214 = vadd.f32 %v3130, %v3171
    %v3215 = vadd.f32 %v3131, %v3191
    %v3216 = vadd.f32 %v3132, %v3211
    %v3217 = vxor.u32 %v3213, 2147483648
    %v3218 = vmul.f32 %v3217, 1.442695
    %v3219 = vpow.pop %v3218
    %v3220 = vadd.f32 %v3219, 1.0
    %v3221 = vrcp.pop %v3220
    %v3222 = vmul.f32 %v3220, %v3221
    %v3223 = vsub.f32 1.0, %v3222
    %v3224 = vmul.f32 %v3221, %v3223
    %v3225 = vadd.f32 %v3221, %v3224
    %vm3226 = vweird.f32 %v3220
    %vm3227 = vweird.f32 %v3221
    %vm3228 = vmor %vm3226, %vm3227
    %v3229 = vsel %vm3228, %v3221, %v3225
    %v3230 = vand.u32 2147483647, %v3220
    %vm3231 = vcmp.eq.f32.partialorder %v3230, 8.507059e+37
    %v3232 = vand.u32 %v3220, 2147483648
    %v3233 = vor.u32 1.1754944e-38, %v3232
    %v3234 = vsel %vm3231, %v3233, %v3229
    %v3235 = vmul.f32 1.0, %v3234
    %v3236 = vxor.u32 %v3214, 2147483648
    %v3237 = vmul.f32 %v3236, 1.442695
    %v3238 = vpow.pop %v3237
    %v3239 = vadd.f32 %v3238, 1.0
    %v3240 = vrcp.pop %v3239
    %v3241 = vmul.f32 %v3239, %v3240
    %v3242 = vsub.f32 1.0, %v3241
    %v3243 = vmul.f32 %v3240, %v3242
    %v3244 = vadd.f32 %v3240, %v3243
    %vm3245 = vweird.f32 %v3239
    %vm3246 = vweird.f32 %v3240
    %vm3247 = vmor %vm3245, %vm3246
    %v3248 = vsel %vm3247, %v3240, %v3244
    %v3249 = vand.u32 2147483647, %v3239
    %vm3250 = vcmp.eq.f32.partialorder %v3249, 8.507059e+37
    %v3251 = vand.u32 %v3239, 2147483648
    %v3252 = vor.u32 1.1754944e-38, %v3251
    %v3253 = vsel %vm3250, %v3252, %v3248
    %v3254 = vmul.f32 1.0, %v3253
    %v3255 = vtanh.pop %v3215
    %v3256 = vxor.u32 %v3216, 2147483648
    %v3257 = vmul.f32 %v3256, 1.442695
    %v3258 = vpow.pop %v3257
    %v3259 = vadd.f32 %v3258, 1.0
    %v3260 = vrcp.pop %v3259
    %v3261 = vmul.f32 %v3259, %v3260
    %v3262 = vsub.f32 1.0, %v3261
    %v3263 = vmul.f32 %v3260, %v3262
    %v3264 = vadd.f32 %v3260, %v3263
    %vm3265 = vweird.f32 %v3259
    %vm3266 = vweird.f32 %v3260
    %vm3267 = vmor %vm3265, %vm3266
    %v3268 = vsel %vm3267, %v3260, %v3264
    %v3269 = vand.u32 2147483647, %v3259
    %vm3270 = vcmp.eq.f32.partialorder %v3269, 8.507059e+37
    %v3271 = vand.u32 %v3259, 2147483648
    %v3272 = vor.u32 1.1754944e-38, %v3271
    %v3273 = vsel %vm3270, %v3272, %v3268
    %v3274 = vmul.f32 1.0, %v3273
    %v3275 = vmul.f32 %v3254, %v3125
    %v3276 = vmul.f32 %v3235, %v3255
    %v3277 = vadd.f32 %v3275, %v3276
    %v3278 = vtanh.pop %v3277
    %v3279 = vmul.f32 %v3274, %v3278
    %3280 = vst [vmem:[%s1712] sm:$0xff] %v3279
    %s3281 = scalar_lea.vmem %s13, 8
    %3282 = vst [vmem:[%s3281] sm:$0xff] %v3279
    %s3283 = scalar_lea.vmem %s14, 8
    %3284 = vst [vmem:[%s3283] sm:$0xff] %v3277
    %v3285 = vld [vmem:[#allocation9] sm:$0xff]
    %v3286 = vld [vmem:[#allocation9 + $0x8] sm:$0xff]
    %v3287 = vld [vmem:[#allocation9 + $0x10] sm:$0xff]
    %v3288 = vld [vmem:[#allocation9 + $0x18] sm:$0xff]
    %v3289 = vld [vmem:[#allocation9 + $0x20] sm:$0xff]
    %v3290 = vld [vmem:[#allocation9 + $0x28] sm:$0xff]
    %v3291 = vld [vmem:[#allocation9 + $0x30] sm:$0xff]
    %v3292 = vld [vmem:[#allocation9 + $0x38] sm:$0xff]
    %v3293 = vld [vmem:[#allocation9 + $0x40] sm:$0xff]
    %v3294 = vld [vmem:[#allocation9 + $0x48] sm:$0xff]
    %v3295 = vld [vmem:[#allocation9 + $0x50] sm:$0xff]
    %v3296 = vld [vmem:[#allocation9 + $0x58] sm:$0xff]
    %v3297 = vld [vmem:[#allocation9 + $0x60] sm:$0xff]
    %v3298 = vld [vmem:[#allocation9 + $0x68] sm:$0xff]
    %v3299 = vld [vmem:[#allocation9 + $0x70] sm:$0xff]
    %v3300 = vld [vmem:[#allocation9 + $0x78] sm:$0xff]
    %v3301 = vld [vmem:[#allocation10] sm:$0xff]
    %v3302 = vld [vmem:[#allocation10 + $0x8] sm:$0xff]
    %v3303 = vld [vmem:[#allocation10 + $0x10] sm:$0xff]
    %v3304 = vld [vmem:[#allocation10 + $0x18] sm:$0xff]
    %v3305 = vld [vmem:[#allocation10 + $0x20] sm:$0xff]
    %v3306 = vld [vmem:[#allocation10 + $0x28] sm:$0xff]
    %v3307 = vld [vmem:[#allocation10 + $0x30] sm:$0xff]
    %v3308 = vld [vmem:[#allocation10 + $0x38] sm:$0xff]
    %v3309 = vld [vmem:[#allocation10 + $0x40] sm:$0xff]
    %v3310 = vld [vmem:[#allocation10 + $0x48] sm:$0xff]
    %v3311 = vld [vmem:[#allocation10 + $0x50] sm:$0xff]
    %v3312 = vld [vmem:[#allocation10 + $0x58] sm:$0xff]
    %v3313 = vld [vmem:[#allocation10 + $0x60] sm:$0xff]
    %v3314 = vld [vmem:[#allocation10 + $0x68] sm:$0xff]
    %v3315 = vld [vmem:[#allocation10 + $0x70] sm:$0xff]
    %v3316 = vld [vmem:[#allocation10 + $0x78] sm:$0xff]
    %v3317 = vld [vmem:[#allocation12] sm:$0xff]
    %v3318 = vld [vmem:[#allocation12 + $0x8] sm:$0xff]
    %v3319 = vld [vmem:[#allocation12 + $0x10] sm:$0xff]
    %v3320 = vld [vmem:[#allocation12 + $0x18] sm:$0xff]
    %v3321 = vld [vmem:[#allocation12 + $0x20] sm:$0xff]
    %v3322 = vld [vmem:[#allocation12 + $0x28] sm:$0xff]
    %v3323 = vld [vmem:[#allocation12 + $0x30] sm:$0xff]
    %v3324 = vld [vmem:[#allocation12 + $0x38] sm:$0xff]
    %v3325 = vld [vmem:[#allocation12 + $0x40] sm:$0xff]
    %v3326 = vld [vmem:[#allocation12 + $0x48] sm:$0xff]
    %v3327 = vld [vmem:[#allocation12 + $0x50] sm:$0xff]
    %v3328 = vld [vmem:[#allocation12 + $0x58] sm:$0xff]
    %v3329 = vld [vmem:[#allocation12 + $0x60] sm:$0xff]
    %v3330 = vld [vmem:[#allocation12 + $0x68] sm:$0xff]
    %v3331 = vld [vmem:[#allocation12 + $0x70] sm:$0xff]
    %v3332 = vld [vmem:[#allocation12 + $0x78] sm:$0xff]
    %v3333 = vld [vmem:[%s7] sm:$0x1]
    %v3334 = vld [vmem:[%s9] sm:$0x1]
    %v3335 = vld [vmem:[%s11] sm:$0x1]
    %v3336 = vld [vmem:[#allocation2] ss:$8 sm:$0xf]
    %v3337 = vld [vmem:[#allocation2] ss:$8 sm:$0xf0]
    %v3338 = vor.u32 %v3336, %v3337
    %v3340 = vperm.slane %v3333, 0
    %3342 = vmatpush.msra.mxu0 %v3300
    %3343 = vmatpush.msra.mxu0 %v3299
    %3344 = vmatpush.msra.mxu0 %v3298
    %3345 = vmatpush.msra.mxu0 %v3297
    %3346 = vmatpush.msra.mxu0 %v3296
    %3347 = vmatpush.msra.mxu0 %v3295
    %3348 = vmatpush.msra.mxu0 %v3294
    %3349 = vmatpush.msra.mxu0 %v3293
    %3350 = vmatpush.msra.mxu0 %v3292
    %3351 = vmatpush.msra.mxu0 %v3291
    %3352 = vmatpush.msra.mxu0 %v3290
    %3353 = vmatpush.msra.mxu0 %v3289
    %3354 = vmatpush.msra.mxu0 %v3288
    %3355 = vmatpush.msra.mxu0 %v3287
    %3356 = vmatpush.msra.mxu0 %v3286
    %3357 = vmatpush.msra.mxu0 %v3285
    %3358 = vmatmul.f32.gmra.mxu0 %v3338
    %v3359 = vpop.f32.mrf.mxu0
    %v3360 = vadd.f32 %v3340, %v3359
    %3361 = vdwg.mxu0
    %v3363 = vperm.slane %v3334, 0
    %3365 = vmatpush.msra.mxu0 %v3316
    %3366 = vmatpush.msra.mxu0 %v3315
    %3367 = vmatpush.msra.mxu0 %v3314
    %3368 = vmatpush.msra.mxu0 %v3313
    %3369 = vmatpush.msra.mxu0 %v3312
    %3370 = vmatpush.msra.mxu0 %v3311
    %3371 = vmatpush.msra.mxu0 %v3310
    %3372 = vmatpush.msra.mxu0 %v3309
    %3373 = vmatpush.msra.mxu0 %v3308
    %3374 = vmatpush.msra.mxu0 %v3307
    %3375 = vmatpush.msra.mxu0 %v3306
    %3376 = vmatpush.msra.mxu0 %v3305
    %3377 = vmatpush.msra.mxu0 %v3304
    %3378 = vmatpush.msra.mxu0 %v3303
    %3379 = vmatpush.msra.mxu0 %v3302
    %3380 = vmatpush.msra.mxu0 %v3301
    %3381 = vmatmul.f32.gmra.mxu0 %v3338
    %v3382 = vpop.f32.mrf.mxu0
    %v3383 = vadd.f32 %v3363, %v3382
    %3384 = vdwg.mxu0
    %v3386 = vperm.slane %v3335, 0
    %3388 = vmatpush.msra.mxu0 %v3332
    %3389 = vmatpush.msra.mxu0 %v3331
    %3390 = vmatpush.msra.mxu0 %v3330
    %3391 = vmatpush.msra.mxu0 %v3329
    %3392 = vmatpush.msra.mxu0 %v3328
    %3393 = vmatpush.msra.mxu0 %v3327
    %3394 = vmatpush.msra.mxu0 %v3326
    %3395 = vmatpush.msra.mxu0 %v3325
    %3396 = vmatpush.msra.mxu0 %v3324
    %3397 = vmatpush.msra.mxu0 %v3323
    %3398 = vmatpush.msra.mxu0 %v3322
    %3399 = vmatpush.msra.mxu0 %v3321
    %3400 = vmatpush.msra.mxu0 %v3320
    %3401 = vmatpush.msra.mxu0 %v3319
    %3402 = vmatpush.msra.mxu0 %v3318
    %3403 = vmatpush.msra.mxu0 %v3317
    %3404 = vmatmul.f32.gmra.mxu0 %v3338
    %v3405 = vpop.f32.mrf.mxu0
    %v3406 = vadd.f32 %v3386, %v3405
    %3407 = vdwg.mxu0
    %3408 = vmatpush.xpose.msra.mxu0 0.0
    %3409 = vmatpush.xpose.msra.mxu0 0.0
    %3410 = vmatpush.xpose.msra.mxu0 0.0
    %3411 = vmatpush.xpose.msra.mxu0 0.0
    %3412 = vmatpush.xpose.msra.mxu0 0.0
    %3413 = vmatpush.xpose.msra.mxu0 0.0
    %3414 = vmatpush.xpose.msra.mxu0 0.0
    %3415 = vmatpush.xpose.msra.mxu0 0.0
    %3416 = vmatpush.xpose.msra.mxu0 0.0
    %3417 = vmatpush.xpose.msra.mxu0 0.0
    %3418 = vmatpush.xpose.msra.mxu0 0.0
    %3419 = vmatpush.xpose.msra.mxu0 0.0
    %3420 = vmatpush.xpose.msra.mxu0 0.0
    %3421 = vmatpush.xpose.msra.mxu0 0.0
    %3422 = vmatpush.xpose.msra.mxu0 0.0
    %3423 = vmatpush.xpose.msra.mxu0 %v3383
    %3424 = vmatmul.f32.gmra.mxu0 %v3360
    %v3425 = vpop.f32.mrf.mxu0
    %v3426 = vadd.f32 0.0, %v3425
    %3427 = vdwg.mxu0
    %v3428 = vmul.f32 %v3426, 0.125
    %vm3429 = vcmask 64512
    %v3430 = vsel %vm3429, %v3428, -inf
    %3431 = vmax.xlane.f32.xlu0 %v3430
    %v3432 = vpop.xlane.xlu0 %3431
    %v3433 = vsub.f32 %v3428, %v3432
    %v3434 = vmul.f32 %v3433, 1.442695
    %v3435 = vpow.pop %v3434
    %v3436 = vsel %vm3429, %v3435, 0.0
    %3437 = vadd.xlane.f32.xlu0 %v3436
    %v3438 = vpop.xlane.xlu0 %3437
    %v3439 = vrcp.pop %v3438
    %v3440 = vmul.f32 %v3435, %v3439
    %v3442 = vsel %vm3429, %v3440, 0
    %3444 = vmatpush.msra.mxu0 0.0
    %3445 = vmatpush.msra.mxu0 0.0
    %3446 = vmatpush.msra.mxu0 0.0
    %3447 = vmatpush.msra.mxu0 0.0
    %3448 = vmatpush.msra.mxu0 0.0
    %3449 = vmatpush.msra.mxu0 0.0
    %3450 = vmatpush.msra.mxu0 0.0
    %3451 = vmatpush.msra.mxu0 0.0
    %3452 = vmatpush.msra.mxu0 0.0
    %3453 = vmatpush.msra.mxu0 0.0
    %3454 = vmatpush.msra.mxu0 0.0
    %3455 = vmatpush.msra.mxu0 0.0
    %3456 = vmatpush.msra.mxu0 0.0
    %3457 = vmatpush.msra.mxu0 0.0
    %3458 = vmatpush.msra.mxu0 0.0
    %3459 = vmatpush.msra.mxu0 %v3406
    %3460 = vmatmul.f32.gmra.mxu0 %v3442
    %v3461 = vpop.f32.mrf.mxu0
    %v3462 = vadd.f32 %v3338, %v3461
    %3463 = vdwg.mxu0
    %3464 = vst [vmem:[#allocation13] sm:$0xff] %v3462
    %s3465 = scalar_lea.vmem [#allocation2], 1
    %v3466 = vld [vmem:[%s3465] ss:$8 sm:$0xf]
    %v3467 = vld [vmem:[%s3465] ss:$8 sm:$0xf0]
    %v3468 = vor.u32 %v3466, %v3467
    %3469 = vmatpush.msra.mxu0 %v3300
    %3470 = vmatpush.msra.mxu0 %v3299
    %3471 = vmatpush.msra.mxu0 %v3298
    %3472 = vmatpush.msra.mxu0 %v3297
    %3473 = vmatpush.msra.mxu0 %v3296
    %3474 = vmatpush.msra.mxu0 %v3295
    %3475 = vmatpush.msra.mxu0 %v3294
    %3476 = vmatpush.msra.mxu0 %v3293
    %3477 = vmatpush.msra.mxu0 %v3292
    %3478 = vmatpush.msra.mxu0 %v3291
    %3479 = vmatpush.msra.mxu0 %v3290
    %3480 = vmatpush.msra.mxu0 %v3289
    %3481 = vmatpush.msra.mxu0 %v3288
    %3482 = vmatpush.msra.mxu0 %v3287
    %3483 = vmatpush.msra.mxu0 %v3286
    %3484 = vmatpush.msra.mxu0 %v3285
    %3485 = vmatmul.f32.gmra.mxu0 %v3468
    %v3486 = vpop.f32.mrf.mxu0
    %v3487 = vadd.f32 %v3340, %v3486
    %3488 = vdwg.mxu0
    %3489 = vmatpush.msra.mxu0 %v3316
    %3490 = vmatpush.msra.mxu0 %v3315
    %3491 = vmatpush.msra.mxu0 %v3314
    %3492 = vmatpush.msra.mxu0 %v3313
    %3493 = vmatpush.msra.mxu0 %v3312
    %3494 = vmatpush.msra.mxu0 %v3311
    %3495 = vmatpush.msra.mxu0 %v3310
    %3496 = vmatpush.msra.mxu0 %v3309
    %3497 = vmatpush.msra.mxu0 %v3308
    %3498 = vmatpush.msra.mxu0 %v3307
    %3499 = vmatpush.msra.mxu0 %v3306
    %3500 = vmatpush.msra.mxu0 %v3305
    %3501 = vmatpush.msra.mxu0 %v3304
    %3502 = vmatpush.msra.mxu0 %v3303
    %3503 = vmatpush.msra.mxu0 %v3302
    %3504 = vmatpush.msra.mxu0 %v3301
    %3505 = vmatmul.f32.gmra.mxu0 %v3468
    %v3506 = vpop.f32.mrf.mxu0
    %v3507 = vadd.f32 %v3363, %v3506
    %3508 = vdwg.mxu0
    %3509 = vmatpush.msra.mxu0 %v3332
    %3510 = vmatpush.msra.mxu0 %v3331
    %3511 = vmatpush.msra.mxu0 %v3330
    %3512 = vmatpush.msra.mxu0 %v3329
    %3513 = vmatpush.msra.mxu0 %v3328
    %3514 = vmatpush.msra.mxu0 %v3327
    %3515 = vmatpush.msra.mxu0 %v3326
    %3516 = vmatpush.msra.mxu0 %v3325
    %3517 = vmatpush.msra.mxu0 %v3324
    %3518 = vmatpush.msra.mxu0 %v3323
    %3519 = vmatpush.msra.mxu0 %v3322
    %3520 = vmatpush.msra.mxu0 %v3321
    %3521 = vmatpush.msra.mxu0 %v3320
    %3522 = vmatpush.msra.mxu0 %v3319
    %3523 = vmatpush.msra.mxu0 %v3318
    %3524 = vmatpush.msra.mxu0 %v3317
    %3525 = vmatmul.f32.gmra.mxu0 %v3468
    %v3526 = vpop.f32.mrf.mxu0
    %v3527 = vadd.f32 %v3386, %v3526
    %3528 = vdwg.mxu0
    %3529 = vmatpush.xpose.msra.mxu0 0.0
    %3530 = vmatpush.xpose.msra.mxu0 0.0
    %3531 = vmatpush.xpose.msra.mxu0 0.0
    %3532 = vmatpush.xpose.msra.mxu0 0.0
    %3533 = vmatpush.xpose.msra.mxu0 0.0
    %3534 = vmatpush.xpose.msra.mxu0 0.0
    %3535 = vmatpush.xpose.msra.mxu0 0.0
    %3536 = vmatpush.xpose.msra.mxu0 0.0
    %3537 = vmatpush.xpose.msra.mxu0 0.0
    %3538 = vmatpush.xpose.msra.mxu0 0.0
    %3539 = vmatpush.xpose.msra.mxu0 0.0
    %3540 = vmatpush.xpose.msra.mxu0 0.0
    %3541 = vmatpush.xpose.msra.mxu0 0.0
    %3542 = vmatpush.xpose.msra.mxu0 0.0
    %3543 = vmatpush.xpose.msra.mxu0 0.0
    %3544 = vmatpush.xpose.msra.mxu0 %v3507
    %3545 = vmatmul.f32.gmra.mxu0 %v3487
    %v3546 = vpop.f32.mrf.mxu0
    %v3547 = vadd.f32 0.0, %v3546
    %3548 = vdwg.mxu0
    %v3549 = vmul.f32 %v3547, 0.125
    %v3550 = vsel %vm3429, %v3549, -inf
    %3551 = vmax.xlane.f32.xlu0 %v3550
    %v3552 = vpop.xlane.xlu0 %3551
    %v3553 = vsub.f32 %v3549, %v3552
    %v3554 = vmul.f32 %v3553, 1.442695
    %v3555 = vpow.pop %v3554
    %v3556 = vsel %vm3429, %v3555, 0.0
    %3557 = vadd.xlane.f32.xlu0 %v3556
    %v3558 = vpop.xlane.xlu0 %3557
    %v3559 = vrcp.pop %v3558
    %v3560 = vmul.f32 %v3555, %v3559
    %v3562 = vsel %vm3429, %v3560, 0
    %3564 = vmatpush.msra.mxu0 0.0
    %3565 = vmatpush.msra.mxu0 0.0
    %3566 = vmatpush.msra.mxu0 0.0
    %3567 = vmatpush.msra.mxu0 0.0
    %3568 = vmatpush.msra.mxu0 0.0
    %3569 = vmatpush.msra.mxu0 0.0
    %3570 = vmatpush.msra.mxu0 0.0
    %3571 = vmatpush.msra.mxu0 0.0
    %3572 = vmatpush.msra.mxu0 0.0
    %3573 = vmatpush.msra.mxu0 0.0
    %3574 = vmatpush.msra.mxu0 0.0
    %3575 = vmatpush.msra.mxu0 0.0
    %3576 = vmatpush.msra.mxu0 0.0
    %3577 = vmatpush.msra.mxu0 0.0
    %3578 = vmatpush.msra.mxu0 0.0
    %3579 = vmatpush.msra.mxu0 %v3527
    %3580 = vmatmul.f32.gmra.mxu0 %v3562
    %v3581 = vpop.f32.mrf.mxu0
    %v3582 = vadd.f32 %v3468, %v3581
    %3583 = vdwg.mxu0
    %s3584 = scalar_lea.vmem [#allocation13], 8
    %3585 = vst [vmem:[%s3584] sm:$0xff] %v3582
    // Predicated region
    $region70: #{_forward_impl.1} parent=1 // pred_check
      _
    $region71: #{_forward_impl.1} parent=1 // pred_check_branch
      %3587 = sbr.rel (0) target = $region73
    $region72: #{_forward_impl.1} parent=1 // pred_region
      %3589 = vsyncadd [#allocation6], 0
      %s3590 = sshll.u32 [#allocation13], 4
      %s3591 = int_to_ptr.vmem [resolvable:$true] %s3590
      %s3592 = sshll.u32 %s12, 4
      %s3593 = int_to_ptr.hbm [resolvable:$true] %s3592
      %3598 = dma.vmem_to_hbm [thread:$0]  %s3591, 256, %s3593, [#allocation6], 128, 128, 8
    $region73: #{_forward_impl.1} parent=1 // pred_fallthru
      _
    // Predicated region
    $region74: #{_forward_impl.1} parent=1 // pred_check
      _
    $region75: #{_forward_impl.1} parent=1 // pred_check_branch
      %3600 = sbr.rel (0) target = $region77
    $region76: #{_forward_impl.1} parent=1 // pred_region
      _
    $region77: #{_forward_impl.1} parent=1 // pred_fallthru
      _
    // Predicated region
    $region78: #{_forward_impl.1} parent=1 // pred_check
      _
    $region79: #{_forward_impl.1} parent=1 // pred_check_branch
      %3602 = sbr.rel (0) target = $region81
    $region80: #{_forward_impl.1} parent=1 // pred_region
      _
    $region81: #{_forward_impl.1} parent=1 // pred_fallthru
      _
    // Predicated region
    $region82: #{_forward_impl.1} parent=1 // pred_check
      _
    $region83: #{_forward_impl.1} parent=1 // pred_check_branch
      %3604 = sbr.rel (0) target = $region85
    $region84: #{_forward_impl.1} parent=1 // pred_region
      %3606 = dma.done [#allocation6], 256
    $region85: #{_forward_impl.1} parent=1 // pred_fallthru
      _
    // Predicated region
    $region86: #{_forward_impl.1} parent=1 // pred_check
      _
    $region87: #{_forward_impl.1} parent=1 // pred_check_branch
      %3608 = sbr.rel (0) target = $region89
    $region88: #{_forward_impl.1} parent=1 // pred_region
      _
    $region89: #{_forward_impl.1} parent=1 // pred_fallthru
      _
    // Predicated region
    $region90: #{_forward_impl.1} parent=1 // pred_check
      _
    $region91: #{_forward_impl.1} parent=1 // pred_check_branch
      %3610 = sbr.rel (0) target = $region93
    $region92: #{_forward_impl.1} parent=1 // pred_region
      _
    $region93: #{_forward_impl.1} parent=1 // pred_fallthru
      _
    %3611 = vsyncpa [#allocation5], 1
    %3612 = vsyncpa [#allocation8], 1
    %3613 = vsyncpa [#allocation11], 1
    %3614 = vsyncpa [#allocation6], 1

</llo_original>
